<compile_context>
chip_gen: v6e
topology: v6e:2x2x1
jax: 0.10.0
libtpu: 0.0.40
codegen_flags: <defaults>
</compile_context>

<pallas_src>
import functools

import jax
import jax.numpy as jnp
from jax import lax
from jax.experimental import pallas as pl
from jax.experimental.pallas import tpu as pltpu


def _round_up(x, m):
    return ((x + m - 1) // m) * m


def _lstm_cell(gates, c_prev, hsz):
    """LSTM gate nonlinearities; gate columns pre-ordered (i, f, o, g)."""
    ifo = jax.nn.sigmoid(gates[:, :3 * hsz])          # one EUP sigmoid call
    g = jnp.tanh(gates[:, 3 * hsz:])                  # one EUP tanh call
    i = ifo[:, 0:hsz]
    f = ifo[:, hsz:2 * hsz]
    o = ifo[:, 2 * hsz:3 * hsz]
    c_new = f * c_prev + i * g
    h_new = o * jnp.tanh(c_new)
    return h_new, c_new


# ----------------------------------------------------------------------------
# Fused forward kernel
# ----------------------------------------------------------------------------
def _s2vt_fused_kernel(video_ref, emb_ref,
                       enc_wih_ref, enc_b_ref, enc_whh_ref,
                       dec_wih_ref, dec_b_ref, dec_whh_ref,
                       cat_b_ref, lin_b_ref,
                       cat_wh_hbm, cat_we_hbm, lin_w_hbm,
                       out_ref,
                       encproj_ref, decproj_ref, hbuf_ref,
                       cat_wh_v, cat_we_v, lin_w_v, head_sem,
                       *, hidden_size, tv, td, bpad, enc_unroll, dec_unroll):
    H = hidden_size
    G = 4 * H                  # encoder gate width per direction
    Hd = 2 * H                 # decoder hidden size
    Bp = bpad

    # ---- overlap head-weight DMA with the recurrences (manual copies) ------
    cp_wh = pltpu.make_async_copy(cat_wh_hbm, cat_wh_v, head_sem.at[0])
    cp_we = pltpu.make_async_copy(cat_we_hbm, cat_we_v, head_sem.at[1])
    cp_lw = pltpu.make_async_copy(lin_w_hbm, lin_w_v, head_sem.at[2])
    cp_wh.start()
    cp_we.start()
    cp_lw.start()

    # ---------------- encoder ----------------
    # Hoisted input projection for BOTH directions as one matmul, bias folded
    # in once.  Columns: [fwd 4H (i,f,o,g) | bwd 4H (i,f,o,g)].
    encproj_ref[...] = (
        jnp.dot(video_ref[...], enc_wih_ref[...],
                preferred_element_type=jnp.float32) + enc_b_ref[...])

    whh_blk = enc_whh_ref[...]            # (2H, 8H) block-diagonal fwd/bwd

    # Peeled step t == 0: h == 0 so no recurrent matmul; this is also where
    # hb_last (backward output at original time tv-1) is captured, removing
    # the per-step jnp.where of the previous version.
    row_f0 = encproj_ref[pl.ds(0, Bp), :]
    row_b0 = encproj_ref[pl.ds((tv - 1) * Bp, Bp), :]
    gates0 = jnp.concatenate([row_f0[:, :G], row_b0[:, G:]], axis=-1)
    z = jnp.zeros((Bp, H), jnp.float32)
    h_f0, c_f0 = _lstm_cell(gates0[:, :G], z, H)
    h_b0, c_b0 = _lstm_cell(gates0[:, G:], z, H)
    hb_last = h_b0
    h_fb0 = jnp.concatenate([h_f0, h_b0], axis=-1)           # (Bp, 2H)

    def enc_step(t, carry):
        h_fb, c_f, c_b = carry
        off_f = pl.multiple_of(t * Bp, Bp)
        off_b = pl.multiple_of((tv - 1 - t) * Bp, Bp)
        row_f = encproj_ref[pl.ds(off_f, Bp), :]              # time t (fwd)
        row_b = encproj_ref[pl.ds(off_b, Bp), :]              # time tv-1-t
        gates_in = jnp.concatenate([row_f[:, :G], row_b[:, G:]], axis=-1)
        gates = gates_in + jnp.dot(h_fb, whh_blk,
                                   preferred_element_type=jnp.float32)
        h_f, c_f = _lstm_cell(gates[:, :G], c_f, H)
        h_b, c_b = _lstm_cell(gates[:, G:], c_b, H)
        return jnp.concatenate([h_f, h_b], axis=-1), c_f, c_b

    h_fb, _, _ = lax.fori_loop(1, tv, enc_step, (h_fb0, c_f0, c_b0),
                               unroll=enc_unroll)

    # ---------------- decoder ----------------
    # Hoisted input projection for the whole caption sequence.
    decproj_ref[...] = (
        jnp.dot(emb_ref[...], dec_wih_ref[...],
                preferred_element_type=jnp.float32) + dec_b_ref[...])

    dec_whh = dec_whh_ref[...]

    # Decoder h0 = video_embedding[-1] = [h_fwd(tv-1) | h_bwd(tv-1)]; seed the
    # recurrence with a single matmul on the concatenated state.
    h0 = jnp.concatenate([h_fb[:, :H], hb_last], axis=-1)
    rec0 = jnp.dot(h0, dec_whh, preferred_element_type=jnp.float32)

    def dec_step(t, carry):
        h_rec, c = carry                                   # h_{t-1} @ W_hh
        off = pl.multiple_of(t * Bp, Bp)
        gates = decproj_ref[pl.ds(off, Bp), :] + h_rec
        h, c = _lstm_cell(gates, c, Hd)
        hbuf_ref[pl.ds(off, Bp), :] = h                    # stash for the head
        return (jnp.dot(h, dec_whh, preferred_element_type=jnp.float32), c)

    zd = jnp.zeros((Bp, Hd), jnp.float32)
    h_rec, c = lax.fori_loop(0, td - 1, dec_step, (rec0, zd),
                             unroll=dec_unroll)

    # Peeled last decoder step: its trailing h @ W_hh is dead, so skip it.
    gates_last = decproj_ref[pl.ds((td - 1) * Bp, Bp), :] + h_rec
    h_last, _ = _lstm_cell(gates_last, c, Hd)
    hbuf_ref[pl.ds((td - 1) * Bp, Bp), :] = h_last

    # ---------------- hoisted head (cat -> tanh -> linear) ----------------
    cp_wh.wait()
    cp_we.wait()
    cp_lw.wait()
    h_all = hbuf_ref[...]                                  # (td*Bp, 2H)
    e_all = emb_ref[...]                                   # (td*Bp, 2H)
    hcat = jnp.tanh(
        jnp.dot(h_all, cat_wh_v[...], preferred_element_type=jnp.float32)
        + jnp.dot(e_all, cat_we_v[...], preferred_element_type=jnp.float32)
        + cat_b_ref[...])
    out_ref[...] = (jnp.dot(hcat, lin_w_v[...],
                            preferred_element_type=jnp.float32)
                    + lin_b_ref[...])


# ----------------------------------------------------------------------------
# One-time parameter preparation (outside jit)
# ----------------------------------------------------------------------------
def prepare_params(params, hidden_size, out_size):
    """Transpose / fuse biases / reorder gate columns / lane-pad the head.

    NOTE: correctness relies on the padded lanes of cat_wh/cat_we/cat_b and
    rows H:Hpad of lin_w staying exactly zero (re-run this if weights change).
    """
    H = hidden_size

    def gate_perm(w, h):   # torch row order (i, f, g, o) -> (i, f, o, g)
        return jnp.concatenate([w[:2 * h], w[3 * h:4 * h], w[2 * h:3 * h]],
                               axis=0)

    def lstm_pack(w_ih, w_hh, b_ih, b_hh, h):
        wih_t = jnp.transpose(gate_perm(w_ih, h))          # (D, 4h)
        whh_t = jnp.transpose(gate_perm(w_hh, h))          # (h, 4h)
        b = gate_perm(b_ih + b_hh, h).reshape(1, 4 * h)
        return wih_t, whh_t, b

    f_wih, f_whh, f_b = lstm_pack(params['enc_f_w_ih'], params['enc_f_w_hh'],
                                  params['enc_f_b_ih'], params['enc_f_b_hh'], H)
    b_wih, b_whh, b_b = lstm_pack(params['enc_b_w_ih'], params['enc_b_w_hh'],
                                  params['enc_b_b_ih'], params['enc_b_b_hh'], H)
    d_wih, d_whh, d_b = lstm_pack(params['dec_w_ih'], params['dec_w_hh'],
                                  params['dec_b_ih'], params['dec_b_hh'], 2 * H)

    # Block-diagonal fused encoder recurrent weight:
    #   rows 0:H  (h_fwd) -> fwd gate columns [0:4H)
    #   rows H:2H (h_bwd) -> bwd gate columns [4H:8H)
    enc_whh_blk = jnp.zeros((2 * H, 8 * H), jnp.float32)
    enc_whh_blk = enc_whh_blk.at[:H, :4 * H].set(f_whh)
    enc_whh_blk = enc_whh_blk.at[H:, 4 * H:].set(b_whh)

    Hpad = _round_up(H, 128)
    out_pad = _round_up(out_size, 128)
    cat_w = params['cat_w']                                # (H, 4H)
    cat_wh = jnp.zeros((2 * H, Hpad), jnp.float32).at[:, :H].set(
        jnp.transpose(cat_w[:, :2 * H]))
    cat_we = jnp.zeros((2 * H, Hpad), jnp.float32).at[:, :H].set(
        jnp.transpose(cat_w[:, 2 * H:]))
    cat_b = jnp.zeros((1, Hpad), jnp.float32).at[:, :H].set(
        params['cat_b'].reshape(1, H))
    lin_w = jnp.zeros((Hpad, out_pad), jnp.float32).at[:H, :out_size].set(
        jnp.transpose(params['lin_w']))
    lin_b = jnp.zeros((1, out_pad), jnp.float32).at[:, :out_size].set(
        params['lin_b'].reshape(1, out_size))

    return {
        'emb': params['emb'],
        'enc_wih': jnp.concatenate([f_wih, b_wih], axis=1),   # (D, 8H)
        'enc_b': jnp.concatenate([f_b, b_b], axis=1),         # (1, 8H)
        'enc_whh_blk': enc_whh_blk,
        'dec_wih': d_wih, 'dec_b': d_b, 'dec_whh': d_whh,
        'cat_wh': cat_wh, 'cat_we': cat_we, 'cat_b': cat_b,
        'lin_w': lin_w, 'lin_b': lin_b,
    }


# ----------------------------------------------------------------------------
# Forward wrapper
# ----------------------------------------------------------------------------
_VMEM = pl.BlockSpec(memory_space=pltpu.MemorySpace.VMEM)
_ANY = pl.BlockSpec(memory_space=pl.ANY)


def s2vt_forward(prepared, video_seq, guided_token, *, hidden_size, out_size):
    H = hidden_size
    Tv, B, D = video_seq.shape
    Hpad = prepared['cat_b'].shape[1]
    out_pad = prepared['lin_b'].shape[1]

    # Token embedding lookup (XLA gather); dropout is identity in eval mode.
    tokens = jnp.squeeze(guided_token, axis=-1)            # (Td, B)
    Td = tokens.shape[0]
    emb = prepared['emb'][tokens]                          # (Td, B, 2H)

    # Pad batch to a sublane multiple so every per-step pl.ds window inside
    # the kernel is 8-row aligned (padded rows carry junk and are sliced off).
    Bp = _round_up(B, 8)
    if Bp != B:
        video_seq = jnp.pad(video_seq, ((0, 0), (0, Bp - B), (0, 0)))
        emb = jnp.pad(emb, ((0, 0), (0, Bp - B), (0, 0)))

    video2d = video_seq.reshape(Tv * Bp, D)
    emb2d = emb.reshape(Td * Bp, 2 * H)

    enc_unroll = True if Tv <= 16 else 4
    dec_unroll = True if Td <= 16 else 4

    kernel = functools.partial(_s2vt_fused_kernel, hidden_size=H, tv=Tv,
                               td=Td, bpad=Bp, enc_unroll=enc_unroll,
                               dec_unroll=dec_unroll)

    flops = 2 * (Tv * Bp * D * 8 * H                      # enc input proj
                 + max(Tv - 1, 0) * Bp * 2 * H * 8 * H    # enc recurrence
                 + Td * Bp * 2 * H * 8 * H                # dec input proj
                 + Td * Bp * 2 * H * 8 * H                # dec recurrence
                 + 2 * Td * Bp * 2 * H * Hpad             # cat head
                 + Td * Bp * Hpad * out_pad)              # linear head
    transcendentals = Tv * Bp * 10 * H + Td * Bp * 10 * H + Td * Bp * Hpad
    weight_bytes = 4 * sum(prepared[k].size for k in
                           ('enc_wih', 'enc_b', 'enc_whh_blk',
                            'dec_wih', 'dec_b', 'dec_whh',
                            'cat_wh', 'cat_we', 'cat_b', 'lin_w', 'lin_b'))
    bytes_accessed = 4 * (video2d.size + emb2d.size + Td * Bp * out_pad) \
        + weight_bytes

    out_tm = pl.pallas_call(
        kernel,
        in_specs=[_VMEM] * 10 + [_ANY] * 3,
        out_specs=_VMEM,
        out_shape=jax.ShapeDtypeStruct((Td * Bp, out_pad), jnp.float32),
        scratch_shapes=[
            pltpu.VMEM((Tv * Bp, 8 * H), jnp.float32),   # encoder input proj
            pltpu.VMEM((Td * Bp, 8 * H), jnp.float32),   # decoder input proj
            pltpu.VMEM((Td * Bp, 2 * H), jnp.float32),   # decoder h stash
            pltpu.VMEM((2 * H, Hpad), jnp.float32),      # cat_wh landing buf
            pltpu.VMEM((2 * H, Hpad), jnp.float32),      # cat_we landing buf
            pltpu.VMEM((Hpad, out_pad), jnp.float32),    # lin_w landing buf
            pltpu.SemaphoreType.DMA((3,)),
        ],
        compiler_params=pltpu.CompilerParams(
            vmem_limit_bytes=64 * 1024 * 1024),
        cost_estimate=pl.CostEstimate(flops=flops,
                                      transcendentals=transcendentals,
                                      bytes_accessed=bytes_accessed),
    )(video2d, emb2d,
      prepared['enc_wih'], prepared['enc_b'], prepared['enc_whh_blk'],
      prepared['dec_wih'], prepared['dec_b'], prepared['dec_whh'],
      prepared['cat_b'], prepared['lin_b'],
      prepared['cat_wh'], prepared['cat_we'], prepared['lin_w'])

    # _time_flatten ordering (batch-major) + strip batch / lane padding.
    out = out_tm.reshape(Td, Bp, out_pad)[:, :B, :out_size]
    return jnp.transpose(out, (1, 0, 2)).reshape(B * Td, out_size)


# ----------------------------------------------------------------------------
# Pure-JAX reference (mirrors the PyTorch forward, eval mode, mode='guide' /
# mode='self' with the deterministic select=False branch: cat(hiddens, emb)).
# TODO(synk): the stochastic `select` branch uses Python random.random(); we
# deterministically take the select=False branch.  The attention context in
# the reference forward is always overwritten for these modes, so it is elided
# here and in the kernel.
# ----------------------------------------------------------------------------
def s2vt_reference(params, video_seq, guided_token, *, hidden_size):
    H = hidden_size
    Tv, B, _ = video_seq.shape

    def lstm(x, h, c, w_ih, w_hh, b_ih, b_hh):
        hsz = w_hh.shape[1]
        hs = []
        for t in range(x.shape[0]):
            gates = x[t] @ w_ih.T + h @ w_hh.T + b_ih + b_hh
            i = jax.nn.sigmoid(gates[:, 0:hsz])
            f = jax.nn.sigmoid(gates[:, hsz:2 * hsz])
            g = jnp.tanh(gates[:, 2 * hsz:3 * hsz])
            o = jax.nn.sigmoid(gates[:, 3 * hsz:4 * hsz])
            c = f * c + i * g
            h = o * jnp.tanh(c)
            hs.append(h)
        return jnp.stack(hs), h, c

    z = jnp.zeros((B, H), jnp.float32)
    hs_f, _, _ = lstm(video_seq, z, z, params['enc_f_w_ih'],
                      params['enc_f_w_hh'], params['enc_f_b_ih'],
                      params['enc_f_b_hh'])
    hs_b, _, _ = lstm(video_seq[::-1], z, z, params['enc_b_w_ih'],
                      params['enc_b_w_hh'], params['enc_b_b_ih'],
                      params['enc_b_b_hh'])
    video_embedding = jnp.concatenate([hs_f, hs_b[::-1]], axis=-1)

    tokens = jnp.squeeze(guided_token, axis=-1)
    emb = params['emb'][tokens]
    Td = tokens.shape[0]
    zd = jnp.zeros((B, 2 * H), jnp.float32)
    hiddens, _, _ = lstm(emb, video_embedding[-1], zd,
                         params['dec_w_ih'], params['dec_w_hh'],
                         params['dec_b_ih'], params['dec_b_hh'])
    words = jnp.concatenate([hiddens, emb], axis=-1)
    flat = jnp.transpose(words, (1, 0, 2)).reshape(B * Td, 4 * H)
    h_cat = jnp.tanh(flat @ params['cat_w'].T + params['cat_b'])
    return h_cat @ params['lin_w'].T + params['lin_b']


# ----------------------------------------------------------------------------
# Deterministic parameter init (shapes follow the PyTorch module __init__)
# ----------------------------------------------------------------------------
def init_params(key, out_size, input_size, hidden_size):
    H = hidden_size
    ks = jax.random.split(key, 19)

    def nrm(k, shape, scale=0.08):
        return (scale * jax.random.normal(k, shape)).astype(jnp.float32)

    return {
        'enc_f_w_ih': nrm(ks[0], (4 * H, input_size)),
        'enc_f_w_hh': nrm(ks[1], (4 * H, H)),
        'enc_f_b_ih': nrm(ks[2], (4 * H,)),
        'enc_f_b_hh': nrm(ks[3], (4 * H,)),
        'enc_b_w_ih': nrm(ks[4], (4 * H, input_size)),
        'enc_b_w_hh': nrm(ks[5], (4 * H, H)),
        'enc_b_b_ih': nrm(ks[6], (4 * H,)),
        'enc_b_b_hh': nrm(ks[7], (4 * H,)),
        'emb': nrm(ks[8], (out_size, 2 * H)),
        'dec_w_ih': nrm(ks[9], (8 * H, 2 * H)),
        'dec_w_hh': nrm(ks[10], (8 * H, 2 * H)),
        'dec_b_ih': nrm(ks[11], (8 * H,)),
        'dec_b_hh': nrm(ks[12], (8 * H,)),
        'attn_w': nrm(ks[13], (2 * H, 2 * H)),   # unused: dead in forward
        'attn_b': nrm(ks[14], (2 * H,)),
        'cat_w': nrm(ks[15], (H, 4 * H)),
        'cat_b': nrm(ks[16], (H,)),
        'lin_w': nrm(ks[17], (out_size, H)),
        'lin_b': nrm(ks[18], (out_size,)),
    }


# ----------------------------------------------------------------------------
if __name__ == "__main__":
    B, Tv, Td = 2, 8, 6
    input_size, hidden_size, out_size = 64, 32, 48

    key = jax.random.PRNGKey(0)
    k_par, k_vid, k_tok = jax.random.split(key, 3)

    params = init_params(k_par, out_size, input_size, hidden_size)
    video_seq = jax.random.normal(k_vid, (Tv, B, input_size), jnp.float32)
    guided_token = jax.random.randint(k_tok, (Td, B, 1), 0, out_size,
                                      dtype=jnp.int32)

    # One-time weight preparation (transpose / fuse / reorder / pad), not jitted.
    prepared = prepare_params(params, hidden_size, out_size)

    fwd = jax.jit(functools.partial(s2vt_forward, hidden_size=hidden_size,
                                    out_size=out_size))
    out = jax.block_until_ready(fwd(prepared, video_seq, guided_token))

    assert out.shape == (B * Td, out_size), out.shape
    assert bool(jnp.all(jnp.isfinite(out)))

    ref = s2vt_reference(params, video_seq, guided_token,
                         hidden_size=hidden_size)
    assert bool(jnp.allclose(out, ref, rtol=1e-4, atol=1e-4)), \
        float(jnp.max(jnp.abs(out - ref)))

    print("KERNEL_OK")
</pallas_src>

<mosaic_0001>
module attributes {stable_mosaic.version = 11 : i64} {
  func.func @_s2vt_fused_kernel(%arg0: memref<64x64xf32, #tpu.memory_space<vmem>>, %arg1: memref<48x64xf32, #tpu.memory_space<vmem>>, %arg2: memref<64x256xf32, #tpu.memory_space<vmem>>, %arg3: memref<1x256xf32, #tpu.memory_space<vmem>>, %arg4: memref<64x256xf32, #tpu.memory_space<vmem>>, %arg5: memref<64x256xf32, #tpu.memory_space<vmem>>, %arg6: memref<1x256xf32, #tpu.memory_space<vmem>>, %arg7: memref<64x256xf32, #tpu.memory_space<vmem>>, %arg8: memref<1x128xf32, #tpu.memory_space<vmem>>, %arg9: memref<1x128xf32, #tpu.memory_space<vmem>>, %arg10: memref<64x128xf32, #tpu.memory_space<any>>, %arg11: memref<64x128xf32, #tpu.memory_space<any>>, %arg12: memref<128x128xf32, #tpu.memory_space<any>>, %arg13: memref<48x128xf32, #tpu.memory_space<vmem>>, %arg14: memref<64x256xf32, #tpu.memory_space<vmem>>, %arg15: memref<48x256xf32, #tpu.memory_space<vmem>>, %arg16: memref<48x64xf32, #tpu.memory_space<vmem>>, %arg17: memref<64x128xf32, #tpu.memory_space<vmem>>, %arg18: memref<64x128xf32, #tpu.memory_space<vmem>>, %arg19: memref<128x128xf32, #tpu.memory_space<vmem>>, %arg20: memref<3x!tpu.dma_semaphore, #tpu.memory_space<semaphore_mem>>) attributes {dimension_semantics = [], scalar_prefetch = 0 : i64, scratch_operands = 7 : i64, tpu.core_type = #tpu.core_type<tc>} {
    %c0_i32 = arith.constant 0 : i32
    %0 = tpu.memref_slice %arg20[%c0_i32] : memref<3x!tpu.dma_semaphore, #tpu.memory_space<semaphore_mem>> -> memref<1x!tpu.dma_semaphore, #tpu.memory_space<semaphore_mem>>
    %1 = tpu.memref_squeeze %0 : memref<1x!tpu.dma_semaphore, #tpu.memory_space<semaphore_mem>> -> memref<!tpu.dma_semaphore, #tpu.memory_space<semaphore_mem>>
    tpu.enqueue_dma source(%arg10 : memref<64x128xf32, #tpu.memory_space<any>>) target(%arg17 : memref<64x128xf32, #tpu.memory_space<vmem>>) target_semaphore(%1 : memref<!tpu.dma_semaphore, #tpu.memory_space<semaphore_mem>>)
    %c1_i32 = arith.constant 1 : i32
    %2 = tpu.memref_slice %arg20[%c1_i32] : memref<3x!tpu.dma_semaphore, #tpu.memory_space<semaphore_mem>> -> memref<1x!tpu.dma_semaphore, #tpu.memory_space<semaphore_mem>>
    %3 = tpu.memref_squeeze %2 : memref<1x!tpu.dma_semaphore, #tpu.memory_space<semaphore_mem>> -> memref<!tpu.dma_semaphore, #tpu.memory_space<semaphore_mem>>
    tpu.enqueue_dma source(%arg11 : memref<64x128xf32, #tpu.memory_space<any>>) target(%arg18 : memref<64x128xf32, #tpu.memory_space<vmem>>) target_semaphore(%3 : memref<!tpu.dma_semaphore, #tpu.memory_space<semaphore_mem>>)
    %c2_i32 = arith.constant 2 : i32
    %4 = tpu.memref_slice %arg20[%c2_i32] : memref<3x!tpu.dma_semaphore, #tpu.memory_space<semaphore_mem>> -> memref<1x!tpu.dma_semaphore, #tpu.memory_space<semaphore_mem>>
    %5 = tpu.memref_squeeze %4 : memref<1x!tpu.dma_semaphore, #tpu.memory_space<semaphore_mem>> -> memref<!tpu.dma_semaphore, #tpu.memory_space<semaphore_mem>>
    tpu.enqueue_dma source(%arg12 : memref<128x128xf32, #tpu.memory_space<any>>) target(%arg19 : memref<128x128xf32, #tpu.memory_space<vmem>>) target_semaphore(%5 : memref<!tpu.dma_semaphore, #tpu.memory_space<semaphore_mem>>)
    %c0 = arith.constant 0 : index
    %c0_0 = arith.constant 0 : index
    %6 = vector.load %arg0[%c0, %c0_0] : memref<64x64xf32, #tpu.memory_space<vmem>>, vector<64x64xf32>
    %c0_1 = arith.constant 0 : index
    %c0_2 = arith.constant 0 : index
    %7 = vector.load %arg2[%c0_1, %c0_2] : memref<64x256xf32, #tpu.memory_space<vmem>>, vector<64x256xf32>
    %cst = arith.constant dense<0.000000e+00> : vector<64x256xf32>
    %8 = tpu.matmul %6, %7, %cst {dimension_numbers = #tpu.dot_dimension_numbers<[1], [0], [0], [1], [0, 0, 1, 1], [], []>} : vector<64x64xf32>, vector<64x256xf32>, vector<64x256xf32> -> vector<64x256xf32>
    %c0_3 = arith.constant 0 : index
    %c0_4 = arith.constant 0 : index
    %9 = vector.load %arg3[%c0_3, %c0_4] : memref<1x256xf32, #tpu.memory_space<vmem>>, vector<1x256xf32>
    %10 = vector.broadcast %9 : vector<1x256xf32> to vector<64x256xf32>
    %11 = arith.addf %8, %10 : vector<64x256xf32>
    %c0_5 = arith.constant 0 : index
    %c0_6 = arith.constant 0 : index
    %12 = vector.load %arg14[%c0_5, %c0_6] : memref<64x256xf32, #tpu.memory_space<vmem>>, vector<64x256xf32>
    tpu.vector_store %arg14[%c0_5, %c0_6], %11 {strides = array<i32>} : memref<64x256xf32, #tpu.memory_space<vmem>>, vector<64x256xf32>,
    %c0_7 = arith.constant 0 : index
    %c0_8 = arith.constant 0 : index
    %13 = vector.load %arg4[%c0_7, %c0_8] : memref<64x256xf32, #tpu.memory_space<vmem>>, vector<64x256xf32>
    %c0_9 = arith.constant 0 : index
    %c0_10 = arith.constant 0 : index
    %14 = vector.load %arg14[%c0_9, %c0_10] : memref<64x256xf32, #tpu.memory_space<vmem>>, vector<8x256xf32>
    %c56 = arith.constant 56 : index
    %c0_11 = arith.constant 0 : index
    %15 = vector.load %arg14[%c56, %c0_11] : memref<64x256xf32, #tpu.memory_space<vmem>>, vector<8x256xf32>
    %16 = vector.extract_strided_slice %14 {offsets = [0, 0], sizes = [8, 128], strides = [1, 1]} : vector<8x256xf32> to vector<8x128xf32>
    %17 = vector.extract_strided_slice %15 {offsets = [0, 128], sizes = [8, 128], strides = [1, 1]} : vector<8x256xf32> to vector<8x128xf32>
    %18 = tpu.concatenate %16, %17 in 1 : vector<8x128xf32>, vector<8x128xf32> -> vector<8x256xf32>
    %cst_12 = arith.constant 0.000000e+00 : f32
    %19 = vector.broadcast %cst_12 : f32 to vector<8x32xf32>
    %20 = vector.extract_strided_slice %18 {offsets = [0, 0], sizes = [8, 128], strides = [1, 1]} : vector<8x256xf32> to vector<8x128xf32>
    %21 = vector.extract_strided_slice %20 {offsets = [0, 0], sizes = [8, 96], strides = [1, 1]} : vector<8x128xf32> to vector<8x96xf32>
    %22 = arith.negf %21 : vector<8x96xf32>
    %23 = math.exp %22 : vector<8x96xf32>
    %cst_13 = arith.constant 1.000000e+00 : f32
    %24 = vector.broadcast %cst_13 : f32 to vector<8x96xf32>
    %25 = arith.addf %24, %23 : vector<8x96xf32>
    %26 = arith.divf %24, %25 : vector<8x96xf32>
    %27 = vector.extract_strided_slice %20 {offsets = [0, 96], sizes = [8, 32], strides = [1, 1]} : vector<8x128xf32> to vector<8x32xf32>
    %28 = math.tanh %27 : vector<8x32xf32>
    %29 = vector.extract_strided_slice %26 {offsets = [0, 0], sizes = [8, 32], strides = [1, 1]} : vector<8x96xf32> to vector<8x32xf32>
    %30 = vector.extract_strided_slice %26 {offsets = [0, 32], sizes = [8, 32], strides = [1, 1]} : vector<8x96xf32> to vector<8x32xf32>
    %31 = vector.extract_strided_slice %26 {offsets = [0, 64], sizes = [8, 32], strides = [1, 1]} : vector<8x96xf32> to vector<8x32xf32>
    %32 = arith.mulf %30, %19 : vector<8x32xf32>
    %33 = arith.mulf %29, %28 : vector<8x32xf32>
    %34 = arith.addf %32, %33 : vector<8x32xf32>
    %35 = math.tanh %34 : vector<8x32xf32>
    %36 = arith.mulf %31, %35 : vector<8x32xf32>
    %37 = vector.extract_strided_slice %18 {offsets = [0, 128], sizes = [8, 128], strides = [1, 1]} : vector<8x256xf32> to vector<8x128xf32>
    %38 = vector.extract_strided_slice %37 {offsets = [0, 0], sizes = [8, 96], strides = [1, 1]} : vector<8x128xf32> to vector<8x96xf32>
    %39 = arith.negf %38 : vector<8x96xf32>
    %40 = math.exp %39 : vector<8x96xf32>
    %cst_14 = arith.constant 1.000000e+00 : f32
    %41 = vector.broadcast %cst_14 : f32 to vector<8x96xf32>
    %42 = arith.addf %41, %40 : vector<8x96xf32>
    %43 = arith.divf %41, %42 : vector<8x96xf32>
    %44 = vector.extract_strided_slice %37 {offsets = [0, 96], sizes = [8, 32], strides = [1, 1]} : vector<8x128xf32> to vector<8x32xf32>
    %45 = math.tanh %44 : vector<8x32xf32>
    %46 = vector.extract_strided_slice %43 {offsets = [0, 0], sizes = [8, 32], strides = [1, 1]} : vector<8x96xf32> to vector<8x32xf32>
    %47 = vector.extract_strided_slice %43 {offsets = [0, 32], sizes = [8, 32], strides = [1, 1]} : vector<8x96xf32> to vector<8x32xf32>
    %48 = vector.extract_strided_slice %43 {offsets = [0, 64], sizes = [8, 32], strides = [1, 1]} : vector<8x96xf32> to vector<8x32xf32>
    %49 = arith.mulf %47, %19 : vector<8x32xf32>
    %50 = arith.mulf %46, %45 : vector<8x32xf32>
    %51 = arith.addf %49, %50 : vector<8x32xf32>
    %52 = math.tanh %51 : vector<8x32xf32>
    %53 = arith.mulf %48, %52 : vector<8x32xf32>
    %54 = tpu.concatenate %36, %53 in 1 : vector<8x32xf32>, vector<8x32xf32> -> vector<8x64xf32>
    %c1_i32_15 = arith.constant 1 : i32
    %c8_i32 = arith.constant 8 : i32
    %55 = arith.muli %c1_i32_15, %c8_i32 : i32
    %56 = tpu.assume_multiple %55, 8 : i32
    %c7_i32 = arith.constant 7 : i32
    %57 = arith.subi %c7_i32, %c1_i32_15 : i32
    %c8_i32_16 = arith.constant 8 : i32
    %58 = arith.muli %57, %c8_i32_16 : i32
    %59 = tpu.assume_multiple %58, 8 : i32
    %60 = arith.index_cast %56 : i32 to index
    %c0_17 = arith.constant 0 : index
    %61 = vector.load %arg14[%60, %c0_17] : memref<64x256xf32, #tpu.memory_space<vmem>>, vector<8x256xf32>
    %62 = arith.index_cast %59 : i32 to index
    %c0_18 = arith.constant 0 : index
    %63 = vector.load %arg14[%62, %c0_18] : memref<64x256xf32, #tpu.memory_space<vmem>>, vector<8x256xf32>
    %64 = vector.extract_strided_slice %61 {offsets = [0, 0], sizes = [8, 128], strides = [1, 1]} : vector<8x256xf32> to vector<8x128xf32>
    %65 = vector.extract_strided_slice %63 {offsets = [0, 128], sizes = [8, 128], strides = [1, 1]} : vector<8x256xf32> to vector<8x128xf32>
    %66 = tpu.concatenate %64, %65 in 1 : vector<8x128xf32>, vector<8x128xf32> -> vector<8x256xf32>
    %cst_19 = arith.constant dense<0.000000e+00> : vector<8x256xf32>
    %67 = tpu.matmul %54, %13, %cst_19 {dimension_numbers = #tpu.dot_dimension_numbers<[1], [0], [0], [1], [0, 0, 1, 1], [], []>} : vector<8x64xf32>, vector<64x256xf32>, vector<8x256xf32> -> vector<8x256xf32>
    %68 = arith.addf %66, %67 : vector<8x256xf32>
    %69 = vector.extract_strided_slice %68 {offsets = [0, 0], sizes = [8, 128], strides = [1, 1]} : vector<8x256xf32> to vector<8x128xf32>
    %70 = vector.extract_strided_slice %69 {offsets = [0, 0], sizes = [8, 96], strides = [1, 1]} : vector<8x128xf32> to vector<8x96xf32>
    %71 = arith.negf %70 : vector<8x96xf32>
    %72 = math.exp %71 : vector<8x96xf32>
    %cst_20 = arith.constant 1.000000e+00 : f32
    %73 = vector.broadcast %cst_20 : f32 to vector<8x96xf32>
    %74 = arith.addf %73, %72 : vector<8x96xf32>
    %75 = arith.divf %73, %74 : vector<8x96xf32>
    %76 = vector.extract_strided_slice %69 {offsets = [0, 96], sizes = [8, 32], strides = [1, 1]} : vector<8x128xf32> to vector<8x32xf32>
    %77 = math.tanh %76 : vector<8x32xf32>
    %78 = vector.extract_strided_slice %75 {offsets = [0, 0], sizes = [8, 32], strides = [1, 1]} : vector<8x96xf32> to vector<8x32xf32>
    %79 = vector.extract_strided_slice %75 {offsets = [0, 32], sizes = [8, 32], strides = [1, 1]} : vector<8x96xf32> to vector<8x32xf32>
    %80 = vector.extract_strided_slice %75 {offsets = [0, 64], sizes = [8, 32], strides = [1, 1]} : vector<8x96xf32> to vector<8x32xf32>
    %81 = arith.mulf %79, %34 : vector<8x32xf32>
    %82 = arith.mulf %78, %77 : vector<8x32xf32>
    %83 = arith.addf %81, %82 : vector<8x32xf32>
    %84 = math.tanh %83 : vector<8x32xf32>
    %85 = arith.mulf %80, %84 : vector<8x32xf32>
    %86 = vector.extract_strided_slice %68 {offsets = [0, 128], sizes = [8, 128], strides = [1, 1]} : vector<8x256xf32> to vector<8x128xf32>
    %87 = vector.extract_strided_slice %86 {offsets = [0, 0], sizes = [8, 96], strides = [1, 1]} : vector<8x128xf32> to vector<8x96xf32>
    %88 = arith.negf %87 : vector<8x96xf32>
    %89 = math.exp %88 : vector<8x96xf32>
    %cst_21 = arith.constant 1.000000e+00 : f32
    %90 = vector.broadcast %cst_21 : f32 to vector<8x96xf32>
    %91 = arith.addf %90, %89 : vector<8x96xf32>
    %92 = arith.divf %90, %91 : vector<8x96xf32>
    %93 = vector.extract_strided_slice %86 {offsets = [0, 96], sizes = [8, 32], strides = [1, 1]} : vector<8x128xf32> to vector<8x32xf32>
    %94 = math.tanh %93 : vector<8x32xf32>
    %95 = vector.extract_strided_slice %92 {offsets = [0, 0], sizes = [8, 32], strides = [1, 1]} : vector<8x96xf32> to vector<8x32xf32>
    %96 = vector.extract_strided_slice %92 {offsets = [0, 32], sizes = [8, 32], strides = [1, 1]} : vector<8x96xf32> to vector<8x32xf32>
    %97 = vector.extract_strided_slice %92 {offsets = [0, 64], sizes = [8, 32], strides = [1, 1]} : vector<8x96xf32> to vector<8x32xf32>
    %98 = arith.mulf %96, %51 : vector<8x32xf32>
    %99 = arith.mulf %95, %94 : vector<8x32xf32>
    %100 = arith.addf %98, %99 : vector<8x32xf32>
    %101 = math.tanh %100 : vector<8x32xf32>
    %102 = arith.mulf %97, %101 : vector<8x32xf32>
    %103 = tpu.concatenate %85, %102 in 1 : vector<8x32xf32>, vector<8x32xf32> -> vector<8x64xf32>
    %c2_i32_22 = arith.constant 2 : i32
    %c8_i32_23 = arith.constant 8 : i32
    %104 = arith.muli %c2_i32_22, %c8_i32_23 : i32
    %105 = tpu.assume_multiple %104, 8 : i32
    %c7_i32_24 = arith.constant 7 : i32
    %106 = arith.subi %c7_i32_24, %c2_i32_22 : i32
    %c8_i32_25 = arith.constant 8 : i32
    %107 = arith.muli %106, %c8_i32_25 : i32
    %108 = tpu.assume_multiple %107, 8 : i32
    %109 = arith.index_cast %105 : i32 to index
    %c0_26 = arith.constant 0 : index
    %110 = vector.load %arg14[%109, %c0_26] : memref<64x256xf32, #tpu.memory_space<vmem>>, vector<8x256xf32>
    %111 = arith.index_cast %108 : i32 to index
    %c0_27 = arith.constant 0 : index
    %112 = vector.load %arg14[%111, %c0_27] : memref<64x256xf32, #tpu.memory_space<vmem>>, vector<8x256xf32>
    %113 = vector.extract_strided_slice %110 {offsets = [0, 0], sizes = [8, 128], strides = [1, 1]} : vector<8x256xf32> to vector<8x128xf32>
    %114 = vector.extract_strided_slice %112 {offsets = [0, 128], sizes = [8, 128], strides = [1, 1]} : vector<8x256xf32> to vector<8x128xf32>
    %115 = tpu.concatenate %113, %114 in 1 : vector<8x128xf32>, vector<8x128xf32> -> vector<8x256xf32>
    %cst_28 = arith.constant dense<0.000000e+00> : vector<8x256xf32>
    %116 = tpu.matmul %103, %13, %cst_28 {dimension_numbers = #tpu.dot_dimension_numbers<[1], [0], [0], [1], [0, 0, 1, 1], [], []>} : vector<8x64xf32>, vector<64x256xf32>, vector<8x256xf32> -> vector<8x256xf32>
    %117 = arith.addf %115, %116 : vector<8x256xf32>
    %118 = vector.extract_strided_slice %117 {offsets = [0, 0], sizes = [8, 128], strides = [1, 1]} : vector<8x256xf32> to vector<8x128xf32>
    %119 = vector.extract_strided_slice %118 {offsets = [0, 0], sizes = [8, 96], strides = [1, 1]} : vector<8x128xf32> to vector<8x96xf32>
    %120 = arith.negf %119 : vector<8x96xf32>
    %121 = math.exp %120 : vector<8x96xf32>
    %cst_29 = arith.constant 1.000000e+00 : f32
    %122 = vector.broadcast %cst_29 : f32 to vector<8x96xf32>
    %123 = arith.addf %122, %121 : vector<8x96xf32>
    %124 = arith.divf %122, %123 : vector<8x96xf32>
    %125 = vector.extract_strided_slice %118 {offsets = [0, 96], sizes = [8, 32], strides = [1, 1]} : vector<8x128xf32> to vector<8x32xf32>
    %126 = math.tanh %125 : vector<8x32xf32>
    %127 = vector.extract_strided_slice %124 {offsets = [0, 0], sizes = [8, 32], strides = [1, 1]} : vector<8x96xf32> to vector<8x32xf32>
    %128 = vector.extract_strided_slice %124 {offsets = [0, 32], sizes = [8, 32], strides = [1, 1]} : vector<8x96xf32> to vector<8x32xf32>
    %129 = vector.extract_strided_slice %124 {offsets = [0, 64], sizes = [8, 32], strides = [1, 1]} : vector<8x96xf32> to vector<8x32xf32>
    %130 = arith.mulf %128, %83 : vector<8x32xf32>
    %131 = arith.mulf %127, %126 : vector<8x32xf32>
    %132 = arith.addf %130, %131 : vector<8x32xf32>
    %133 = math.tanh %132 : vector<8x32xf32>
    %134 = arith.mulf %129, %133 : vector<8x32xf32>
    %135 = vector.extract_strided_slice %117 {offsets = [0, 128], sizes = [8, 128], strides = [1, 1]} : vector<8x256xf32> to vector<8x128xf32>
    %136 = vector.extract_strided_slice %135 {offsets = [0, 0], sizes = [8, 96], strides = [1, 1]} : vector<8x128xf32> to vector<8x96xf32>
    %137 = arith.negf %136 : vector<8x96xf32>
    %138 = math.exp %137 : vector<8x96xf32>
    %cst_30 = arith.constant 1.000000e+00 : f32
    %139 = vector.broadcast %cst_30 : f32 to vector<8x96xf32>
    %140 = arith.addf %139, %138 : vector<8x96xf32>
    %141 = arith.divf %139, %140 : vector<8x96xf32>
    %142 = vector.extract_strided_slice %135 {offsets = [0, 96], sizes = [8, 32], strides = [1, 1]} : vector<8x128xf32> to vector<8x32xf32>
    %143 = math.tanh %142 : vector<8x32xf32>
    %144 = vector.extract_strided_slice %141 {offsets = [0, 0], sizes = [8, 32], strides = [1, 1]} : vector<8x96xf32> to vector<8x32xf32>
    %145 = vector.extract_strided_slice %141 {offsets = [0, 32], sizes = [8, 32], strides = [1, 1]} : vector<8x96xf32> to vector<8x32xf32>
    %146 = vector.extract_strided_slice %141 {offsets = [0, 64], sizes = [8, 32], strides = [1, 1]} : vector<8x96xf32> to vector<8x32xf32>
    %147 = arith.mulf %145, %100 : vector<8x32xf32>
    %148 = arith.mulf %144, %143 : vector<8x32xf32>
    %149 = arith.addf %147, %148 : vector<8x32xf32>
    %150 = math.tanh %149 : vector<8x32xf32>
    %151 = arith.mulf %146, %150 : vector<8x32xf32>
    %152 = tpu.concatenate %134, %151 in 1 : vector<8x32xf32>, vector<8x32xf32> -> vector<8x64xf32>
    %c3_i32 = arith.constant 3 : i32
    %c8_i32_31 = arith.constant 8 : i32
    %153 = arith.muli %c3_i32, %c8_i32_31 : i32
    %154 = tpu.assume_multiple %153, 8 : i32
    %c7_i32_32 = arith.constant 7 : i32
    %155 = arith.subi %c7_i32_32, %c3_i32 : i32
    %c8_i32_33 = arith.constant 8 : i32
    %156 = arith.muli %155, %c8_i32_33 : i32
    %157 = tpu.assume_multiple %156, 8 : i32
    %158 = arith.index_cast %154 : i32 to index
    %c0_34 = arith.constant 0 : index
    %159 = vector.load %arg14[%158, %c0_34] : memref<64x256xf32, #tpu.memory_space<vmem>>, vector<8x256xf32>
    %160 = arith.index_cast %157 : i32 to index
    %c0_35 = arith.constant 0 : index
    %161 = vector.load %arg14[%160, %c0_35] : memref<64x256xf32, #tpu.memory_space<vmem>>, vector<8x256xf32>
    %162 = vector.extract_strided_slice %159 {offsets = [0, 0], sizes = [8, 128], strides = [1, 1]} : vector<8x256xf32> to vector<8x128xf32>
    %163 = vector.extract_strided_slice %161 {offsets = [0, 128], sizes = [8, 128], strides = [1, 1]} : vector<8x256xf32> to vector<8x128xf32>
    %164 = tpu.concatenate %162, %163 in 1 : vector<8x128xf32>, vector<8x128xf32> -> vector<8x256xf32>
    %cst_36 = arith.constant dense<0.000000e+00> : vector<8x256xf32>
    %165 = tpu.matmul %152, %13, %cst_36 {dimension_numbers = #tpu.dot_dimension_numbers<[1], [0], [0], [1], [0, 0, 1, 1], [], []>} : vector<8x64xf32>, vector<64x256xf32>, vector<8x256xf32> -> vector<8x256xf32>
    %166 = arith.addf %164, %165 : vector<8x256xf32>
    %167 = vector.extract_strided_slice %166 {offsets = [0, 0], sizes = [8, 128], strides = [1, 1]} : vector<8x256xf32> to vector<8x128xf32>
    %168 = vector.extract_strided_slice %167 {offsets = [0, 0], sizes = [8, 96], strides = [1, 1]} : vector<8x128xf32> to vector<8x96xf32>
    %169 = arith.negf %168 : vector<8x96xf32>
    %170 = math.exp %169 : vector<8x96xf32>
    %cst_37 = arith.constant 1.000000e+00 : f32
    %171 = vector.broadcast %cst_37 : f32 to vector<8x96xf32>
    %172 = arith.addf %171, %170 : vector<8x96xf32>
    %173 = arith.divf %171, %172 : vector<8x96xf32>
    %174 = vector.extract_strided_slice %167 {offsets = [0, 96], sizes = [8, 32], strides = [1, 1]} : vector<8x128xf32> to vector<8x32xf32>
    %175 = math.tanh %174 : vector<8x32xf32>
    %176 = vector.extract_strided_slice %173 {offsets = [0, 0], sizes = [8, 32], strides = [1, 1]} : vector<8x96xf32> to vector<8x32xf32>
    %177 = vector.extract_strided_slice %173 {offsets = [0, 32], sizes = [8, 32], strides = [1, 1]} : vector<8x96xf32> to vector<8x32xf32>
    %178 = vector.extract_strided_slice %173 {offsets = [0, 64], sizes = [8, 32], strides = [1, 1]} : vector<8x96xf32> to vector<8x32xf32>
    %179 = arith.mulf %177, %132 : vector<8x32xf32>
    %180 = arith.mulf %176, %175 : vector<8x32xf32>
    %181 = arith.addf %179, %180 : vector<8x32xf32>
    %182 = math.tanh %181 : vector<8x32xf32>
    %183 = arith.mulf %178, %182 : vector<8x32xf32>
    %184 = vector.extract_strided_slice %166 {offsets = [0, 128], sizes = [8, 128], strides = [1, 1]} : vector<8x256xf32> to vector<8x128xf32>
    %185 = vector.extract_strided_slice %184 {offsets = [0, 0], sizes = [8, 96], strides = [1, 1]} : vector<8x128xf32> to vector<8x96xf32>
    %186 = arith.negf %185 : vector<8x96xf32>
    %187 = math.exp %186 : vector<8x96xf32>
    %cst_38 = arith.constant 1.000000e+00 : f32
    %188 = vector.broadcast %cst_38 : f32 to vector<8x96xf32>
    %189 = arith.addf %188, %187 : vector<8x96xf32>
    %190 = arith.divf %188, %189 : vector<8x96xf32>
    %191 = vector.extract_strided_slice %184 {offsets = [0, 96], sizes = [8, 32], strides = [1, 1]} : vector<8x128xf32> to vector<8x32xf32>
    %192 = math.tanh %191 : vector<8x32xf32>
    %193 = vector.extract_strided_slice %190 {offsets = [0, 0], sizes = [8, 32], strides = [1, 1]} : vector<8x96xf32> to vector<8x32xf32>
    %194 = vector.extract_strided_slice %190 {offsets = [0, 32], sizes = [8, 32], strides = [1, 1]} : vector<8x96xf32> to vector<8x32xf32>
    %195 = vector.extract_strided_slice %190 {offsets = [0, 64], sizes = [8, 32], strides = [1, 1]} : vector<8x96xf32> to vector<8x32xf32>
    %196 = arith.mulf %194, %149 : vector<8x32xf32>
    %197 = arith.mulf %193, %192 : vector<8x32xf32>
    %198 = arith.addf %196, %197 : vector<8x32xf32>
    %199 = math.tanh %198 : vector<8x32xf32>
    %200 = arith.mulf %195, %199 : vector<8x32xf32>
    %201 = tpu.concatenate %183, %200 in 1 : vector<8x32xf32>, vector<8x32xf32> -> vector<8x64xf32>
    %c4_i32 = arith.constant 4 : i32
    %c8_i32_39 = arith.constant 8 : i32
    %202 = arith.muli %c4_i32, %c8_i32_39 : i32
    %203 = tpu.assume_multiple %202, 8 : i32
    %c7_i32_40 = arith.constant 7 : i32
    %204 = arith.subi %c7_i32_40, %c4_i32 : i32
    %c8_i32_41 = arith.constant 8 : i32
    %205 = arith.muli %204, %c8_i32_41 : i32
    %206 = tpu.assume_multiple %205, 8 : i32
    %207 = arith.index_cast %203 : i32 to index
    %c0_42 = arith.constant 0 : index
    %208 = vector.load %arg14[%207, %c0_42] : memref<64x256xf32, #tpu.memory_space<vmem>>, vector<8x256xf32>
    %209 = arith.index_cast %206 : i32 to index
    %c0_43 = arith.constant 0 : index
    %210 = vector.load %arg14[%209, %c0_43] : memref<64x256xf32, #tpu.memory_space<vmem>>, vector<8x256xf32>
    %211 = vector.extract_strided_slice %208 {offsets = [0, 0], sizes = [8, 128], strides = [1, 1]} : vector<8x256xf32> to vector<8x128xf32>
    %212 = vector.extract_strided_slice %210 {offsets = [0, 128], sizes = [8, 128], strides = [1, 1]} : vector<8x256xf32> to vector<8x128xf32>
    %213 = tpu.concatenate %211, %212 in 1 : vector<8x128xf32>, vector<8x128xf32> -> vector<8x256xf32>
    %cst_44 = arith.constant dense<0.000000e+00> : vector<8x256xf32>
    %214 = tpu.matmul %201, %13, %cst_44 {dimension_numbers = #tpu.dot_dimension_numbers<[1], [0], [0], [1], [0, 0, 1, 1], [], []>} : vector<8x64xf32>, vector<64x256xf32>, vector<8x256xf32> -> vector<8x256xf32>
    %215 = arith.addf %213, %214 : vector<8x256xf32>
    %216 = vector.extract_strided_slice %215 {offsets = [0, 0], sizes = [8, 128], strides = [1, 1]} : vector<8x256xf32> to vector<8x128xf32>
    %217 = vector.extract_strided_slice %216 {offsets = [0, 0], sizes = [8, 96], strides = [1, 1]} : vector<8x128xf32> to vector<8x96xf32>
    %218 = arith.negf %217 : vector<8x96xf32>
    %219 = math.exp %218 : vector<8x96xf32>
    %cst_45 = arith.constant 1.000000e+00 : f32
    %220 = vector.broadcast %cst_45 : f32 to vector<8x96xf32>
    %221 = arith.addf %220, %219 : vector<8x96xf32>
    %222 = arith.divf %220, %221 : vector<8x96xf32>
    %223 = vector.extract_strided_slice %216 {offsets = [0, 96], sizes = [8, 32], strides = [1, 1]} : vector<8x128xf32> to vector<8x32xf32>
    %224 = math.tanh %223 : vector<8x32xf32>
    %225 = vector.extract_strided_slice %222 {offsets = [0, 0], sizes = [8, 32], strides = [1, 1]} : vector<8x96xf32> to vector<8x32xf32>
    %226 = vector.extract_strided_slice %222 {offsets = [0, 32], sizes = [8, 32], strides = [1, 1]} : vector<8x96xf32> to vector<8x32xf32>
    %227 = vector.extract_strided_slice %222 {offsets = [0, 64], sizes = [8, 32], strides = [1, 1]} : vector<8x96xf32> to vector<8x32xf32>
    %228 = arith.mulf %226, %181 : vector<8x32xf32>
    %229 = arith.mulf %225, %224 : vector<8x32xf32>
    %230 = arith.addf %228, %229 : vector<8x32xf32>
    %231 = math.tanh %230 : vector<8x32xf32>
    %232 = arith.mulf %227, %231 : vector<8x32xf32>
    %233 = vector.extract_strided_slice %215 {offsets = [0, 128], sizes = [8, 128], strides = [1, 1]} : vector<8x256xf32> to vector<8x128xf32>
    %234 = vector.extract_strided_slice %233 {offsets = [0, 0], sizes = [8, 96], strides = [1, 1]} : vector<8x128xf32> to vector<8x96xf32>
    %235 = arith.negf %234 : vector<8x96xf32>
    %236 = math.exp %235 : vector<8x96xf32>
    %cst_46 = arith.constant 1.000000e+00 : f32
    %237 = vector.broadcast %cst_46 : f32 to vector<8x96xf32>
    %238 = arith.addf %237, %236 : vector<8x96xf32>
    %239 = arith.divf %237, %238 : vector<8x96xf32>
    %240 = vector.extract_strided_slice %233 {offsets = [0, 96], sizes = [8, 32], strides = [1, 1]} : vector<8x128xf32> to vector<8x32xf32>
    %241 = math.tanh %240 : vector<8x32xf32>
    %242 = vector.extract_strided_slice %239 {offsets = [0, 0], sizes = [8, 32], strides = [1, 1]} : vector<8x96xf32> to vector<8x32xf32>
    %243 = vector.extract_strided_slice %239 {offsets = [0, 32], sizes = [8, 32], strides = [1, 1]} : vector<8x96xf32> to vector<8x32xf32>
    %244 = vector.extract_strided_slice %239 {offsets = [0, 64], sizes = [8, 32], strides = [1, 1]} : vector<8x96xf32> to vector<8x32xf32>
    %245 = arith.mulf %243, %198 : vector<8x32xf32>
    %246 = arith.mulf %242, %241 : vector<8x32xf32>
    %247 = arith.addf %245, %246 : vector<8x32xf32>
    %248 = math.tanh %247 : vector<8x32xf32>
    %249 = arith.mulf %244, %248 : vector<8x32xf32>
    %250 = tpu.concatenate %232, %249 in 1 : vector<8x32xf32>, vector<8x32xf32> -> vector<8x64xf32>
    %c5_i32 = arith.constant 5 : i32
    %c8_i32_47 = arith.constant 8 : i32
    %251 = arith.muli %c5_i32, %c8_i32_47 : i32
    %252 = tpu.assume_multiple %251, 8 : i32
    %c7_i32_48 = arith.constant 7 : i32
    %253 = arith.subi %c7_i32_48, %c5_i32 : i32
    %c8_i32_49 = arith.constant 8 : i32
    %254 = arith.muli %253, %c8_i32_49 : i32
    %255 = tpu.assume_multiple %254, 8 : i32
    %256 = arith.index_cast %252 : i32 to index
    %c0_50 = arith.constant 0 : index
    %257 = vector.load %arg14[%256, %c0_50] : memref<64x256xf32, #tpu.memory_space<vmem>>, vector<8x256xf32>
    %258 = arith.index_cast %255 : i32 to index
    %c0_51 = arith.constant 0 : index
    %259 = vector.load %arg14[%258, %c0_51] : memref<64x256xf32, #tpu.memory_space<vmem>>, vector<8x256xf32>
    %260 = vector.extract_strided_slice %257 {offsets = [0, 0], sizes = [8, 128], strides = [1, 1]} : vector<8x256xf32> to vector<8x128xf32>
    %261 = vector.extract_strided_slice %259 {offsets = [0, 128], sizes = [8, 128], strides = [1, 1]} : vector<8x256xf32> to vector<8x128xf32>
    %262 = tpu.concatenate %260, %261 in 1 : vector<8x128xf32>, vector<8x128xf32> -> vector<8x256xf32>
    %cst_52 = arith.constant dense<0.000000e+00> : vector<8x256xf32>
    %263 = tpu.matmul %250, %13, %cst_52 {dimension_numbers = #tpu.dot_dimension_numbers<[1], [0], [0], [1], [0, 0, 1, 1], [], []>} : vector<8x64xf32>, vector<64x256xf32>, vector<8x256xf32> -> vector<8x256xf32>
    %264 = arith.addf %262, %263 : vector<8x256xf32>
    %265 = vector.extract_strided_slice %264 {offsets = [0, 0], sizes = [8, 128], strides = [1, 1]} : vector<8x256xf32> to vector<8x128xf32>
    %266 = vector.extract_strided_slice %265 {offsets = [0, 0], sizes = [8, 96], strides = [1, 1]} : vector<8x128xf32> to vector<8x96xf32>
    %267 = arith.negf %266 : vector<8x96xf32>
    %268 = math.exp %267 : vector<8x96xf32>
    %cst_53 = arith.constant 1.000000e+00 : f32
    %269 = vector.broadcast %cst_53 : f32 to vector<8x96xf32>
    %270 = arith.addf %269, %268 : vector<8x96xf32>
    %271 = arith.divf %269, %270 : vector<8x96xf32>
    %272 = vector.extract_strided_slice %265 {offsets = [0, 96], sizes = [8, 32], strides = [1, 1]} : vector<8x128xf32> to vector<8x32xf32>
    %273 = math.tanh %272 : vector<8x32xf32>
    %274 = vector.extract_strided_slice %271 {offsets = [0, 0], sizes = [8, 32], strides = [1, 1]} : vector<8x96xf32> to vector<8x32xf32>
    %275 = vector.extract_strided_slice %271 {offsets = [0, 32], sizes = [8, 32], strides = [1, 1]} : vector<8x96xf32> to vector<8x32xf32>
    %276 = vector.extract_strided_slice %271 {offsets = [0, 64], sizes = [8, 32], strides = [1, 1]} : vector<8x96xf32> to vector<8x32xf32>
    %277 = arith.mulf %275, %230 : vector<8x32xf32>
    %278 = arith.mulf %274, %273 : vector<8x32xf32>
    %279 = arith.addf %277, %278 : vector<8x32xf32>
    %280 = math.tanh %279 : vector<8x32xf32>
    %281 = arith.mulf %276, %280 : vector<8x32xf32>
    %282 = vector.extract_strided_slice %264 {offsets = [0, 128], sizes = [8, 128], strides = [1, 1]} : vector<8x256xf32> to vector<8x128xf32>
    %283 = vector.extract_strided_slice %282 {offsets = [0, 0], sizes = [8, 96], strides = [1, 1]} : vector<8x128xf32> to vector<8x96xf32>
    %284 = arith.negf %283 : vector<8x96xf32>
    %285 = math.exp %284 : vector<8x96xf32>
    %cst_54 = arith.constant 1.000000e+00 : f32
    %286 = vector.broadcast %cst_54 : f32 to vector<8x96xf32>
    %287 = arith.addf %286, %285 : vector<8x96xf32>
    %288 = arith.divf %286, %287 : vector<8x96xf32>
    %289 = vector.extract_strided_slice %282 {offsets = [0, 96], sizes = [8, 32], strides = [1, 1]} : vector<8x128xf32> to vector<8x32xf32>
    %290 = math.tanh %289 : vector<8x32xf32>
    %291 = vector.extract_strided_slice %288 {offsets = [0, 0], sizes = [8, 32], strides = [1, 1]} : vector<8x96xf32> to vector<8x32xf32>
    %292 = vector.extract_strided_slice %288 {offsets = [0, 32], sizes = [8, 32], strides = [1, 1]} : vector<8x96xf32> to vector<8x32xf32>
    %293 = vector.extract_strided_slice %288 {offsets = [0, 64], sizes = [8, 32], strides = [1, 1]} : vector<8x96xf32> to vector<8x32xf32>
    %294 = arith.mulf %292, %247 : vector<8x32xf32>
    %295 = arith.mulf %291, %290 : vector<8x32xf32>
    %296 = arith.addf %294, %295 : vector<8x32xf32>
    %297 = math.tanh %296 : vector<8x32xf32>
    %298 = arith.mulf %293, %297 : vector<8x32xf32>
    %299 = tpu.concatenate %281, %298 in 1 : vector<8x32xf32>, vector<8x32xf32> -> vector<8x64xf32>
    %c6_i32 = arith.constant 6 : i32
    %c8_i32_55 = arith.constant 8 : i32
    %300 = arith.muli %c6_i32, %c8_i32_55 : i32
    %301 = tpu.assume_multiple %300, 8 : i32
    %c7_i32_56 = arith.constant 7 : i32
    %302 = arith.subi %c7_i32_56, %c6_i32 : i32
    %c8_i32_57 = arith.constant 8 : i32
    %303 = arith.muli %302, %c8_i32_57 : i32
    %304 = tpu.assume_multiple %303, 8 : i32
    %305 = arith.index_cast %301 : i32 to index
    %c0_58 = arith.constant 0 : index
    %306 = vector.load %arg14[%305, %c0_58] : memref<64x256xf32, #tpu.memory_space<vmem>>, vector<8x256xf32>
    %307 = arith.index_cast %304 : i32 to index
    %c0_59 = arith.constant 0 : index
    %308 = vector.load %arg14[%307, %c0_59] : memref<64x256xf32, #tpu.memory_space<vmem>>, vector<8x256xf32>
    %309 = vector.extract_strided_slice %306 {offsets = [0, 0], sizes = [8, 128], strides = [1, 1]} : vector<8x256xf32> to vector<8x128xf32>
    %310 = vector.extract_strided_slice %308 {offsets = [0, 128], sizes = [8, 128], strides = [1, 1]} : vector<8x256xf32> to vector<8x128xf32>
    %311 = tpu.concatenate %309, %310 in 1 : vector<8x128xf32>, vector<8x128xf32> -> vector<8x256xf32>
    %cst_60 = arith.constant dense<0.000000e+00> : vector<8x256xf32>
    %312 = tpu.matmul %299, %13, %cst_60 {dimension_numbers = #tpu.dot_dimension_numbers<[1], [0], [0], [1], [0, 0, 1, 1], [], []>} : vector<8x64xf32>, vector<64x256xf32>, vector<8x256xf32> -> vector<8x256xf32>
    %313 = arith.addf %311, %312 : vector<8x256xf32>
    %314 = vector.extract_strided_slice %313 {offsets = [0, 0], sizes = [8, 128], strides = [1, 1]} : vector<8x256xf32> to vector<8x128xf32>
    %315 = vector.extract_strided_slice %314 {offsets = [0, 0], sizes = [8, 96], strides = [1, 1]} : vector<8x128xf32> to vector<8x96xf32>
    %316 = arith.negf %315 : vector<8x96xf32>
    %317 = math.exp %316 : vector<8x96xf32>
    %cst_61 = arith.constant 1.000000e+00 : f32
    %318 = vector.broadcast %cst_61 : f32 to vector<8x96xf32>
    %319 = arith.addf %318, %317 : vector<8x96xf32>
    %320 = arith.divf %318, %319 : vector<8x96xf32>
    %321 = vector.extract_strided_slice %314 {offsets = [0, 96], sizes = [8, 32], strides = [1, 1]} : vector<8x128xf32> to vector<8x32xf32>
    %322 = math.tanh %321 : vector<8x32xf32>
    %323 = vector.extract_strided_slice %320 {offsets = [0, 0], sizes = [8, 32], strides = [1, 1]} : vector<8x96xf32> to vector<8x32xf32>
    %324 = vector.extract_strided_slice %320 {offsets = [0, 32], sizes = [8, 32], strides = [1, 1]} : vector<8x96xf32> to vector<8x32xf32>
    %325 = vector.extract_strided_slice %320 {offsets = [0, 64], sizes = [8, 32], strides = [1, 1]} : vector<8x96xf32> to vector<8x32xf32>
    %326 = arith.mulf %324, %279 : vector<8x32xf32>
    %327 = arith.mulf %323, %322 : vector<8x32xf32>
    %328 = arith.addf %326, %327 : vector<8x32xf32>
    %329 = math.tanh %328 : vector<8x32xf32>
    %330 = arith.mulf %325, %329 : vector<8x32xf32>
    %331 = vector.extract_strided_slice %313 {offsets = [0, 128], sizes = [8, 128], strides = [1, 1]} : vector<8x256xf32> to vector<8x128xf32>
    %332 = vector.extract_strided_slice %331 {offsets = [0, 0], sizes = [8, 96], strides = [1, 1]} : vector<8x128xf32> to vector<8x96xf32>
    %333 = arith.negf %332 : vector<8x96xf32>
    %334 = math.exp %333 : vector<8x96xf32>
    %cst_62 = arith.constant 1.000000e+00 : f32
    %335 = vector.broadcast %cst_62 : f32 to vector<8x96xf32>
    %336 = arith.addf %335, %334 : vector<8x96xf32>
    %337 = arith.divf %335, %336 : vector<8x96xf32>
    %338 = vector.extract_strided_slice %331 {offsets = [0, 96], sizes = [8, 32], strides = [1, 1]} : vector<8x128xf32> to vector<8x32xf32>
    %339 = math.tanh %338 : vector<8x32xf32>
    %340 = vector.extract_strided_slice %337 {offsets = [0, 0], sizes = [8, 32], strides = [1, 1]} : vector<8x96xf32> to vector<8x32xf32>
    %341 = vector.extract_strided_slice %337 {offsets = [0, 32], sizes = [8, 32], strides = [1, 1]} : vector<8x96xf32> to vector<8x32xf32>
    %342 = vector.extract_strided_slice %337 {offsets = [0, 64], sizes = [8, 32], strides = [1, 1]} : vector<8x96xf32> to vector<8x32xf32>
    %343 = arith.mulf %341, %296 : vector<8x32xf32>
    %344 = arith.mulf %340, %339 : vector<8x32xf32>
    %345 = arith.addf %343, %344 : vector<8x32xf32>
    %346 = math.tanh %345 : vector<8x32xf32>
    %347 = arith.mulf %342, %346 : vector<8x32xf32>
    %348 = tpu.concatenate %330, %347 in 1 : vector<8x32xf32>, vector<8x32xf32> -> vector<8x64xf32>
    %c7_i32_63 = arith.constant 7 : i32
    %c8_i32_64 = arith.constant 8 : i32
    %349 = arith.muli %c7_i32_63, %c8_i32_64 : i32
    %350 = tpu.assume_multiple %349, 8 : i32
    %c7_i32_65 = arith.constant 7 : i32
    %351 = arith.subi %c7_i32_65, %c7_i32_63 : i32
    %c8_i32_66 = arith.constant 8 : i32
    %352 = arith.muli %351, %c8_i32_66 : i32
    %353 = tpu.assume_multiple %352, 8 : i32
    %354 = arith.index_cast %350 : i32 to index
    %c0_67 = arith.constant 0 : index
    %355 = vector.load %arg14[%354, %c0_67] : memref<64x256xf32, #tpu.memory_space<vmem>>, vector<8x256xf32>
    %356 = arith.index_cast %353 : i32 to index
    %c0_68 = arith.constant 0 : index
    %357 = vector.load %arg14[%356, %c0_68] : memref<64x256xf32, #tpu.memory_space<vmem>>, vector<8x256xf32>
    %358 = vector.extract_strided_slice %355 {offsets = [0, 0], sizes = [8, 128], strides = [1, 1]} : vector<8x256xf32> to vector<8x128xf32>
    %359 = vector.extract_strided_slice %357 {offsets = [0, 128], sizes = [8, 128], strides = [1, 1]} : vector<8x256xf32> to vector<8x128xf32>
    %360 = tpu.concatenate %358, %359 in 1 : vector<8x128xf32>, vector<8x128xf32> -> vector<8x256xf32>
    %cst_69 = arith.constant dense<0.000000e+00> : vector<8x256xf32>
    %361 = tpu.matmul %348, %13, %cst_69 {dimension_numbers = #tpu.dot_dimension_numbers<[1], [0], [0], [1], [0, 0, 1, 1], [], []>} : vector<8x64xf32>, vector<64x256xf32>, vector<8x256xf32> -> vector<8x256xf32>
    %362 = arith.addf %360, %361 : vector<8x256xf32>
    %363 = vector.extract_strided_slice %362 {offsets = [0, 0], sizes = [8, 128], strides = [1, 1]} : vector<8x256xf32> to vector<8x128xf32>
    %364 = vector.extract_strided_slice %363 {offsets = [0, 0], sizes = [8, 96], strides = [1, 1]} : vector<8x128xf32> to vector<8x96xf32>
    %365 = arith.negf %364 : vector<8x96xf32>
    %366 = math.exp %365 : vector<8x96xf32>
    %cst_70 = arith.constant 1.000000e+00 : f32
    %367 = vector.broadcast %cst_70 : f32 to vector<8x96xf32>
    %368 = arith.addf %367, %366 : vector<8x96xf32>
    %369 = arith.divf %367, %368 : vector<8x96xf32>
    %370 = vector.extract_strided_slice %363 {offsets = [0, 96], sizes = [8, 32], strides = [1, 1]} : vector<8x128xf32> to vector<8x32xf32>
    %371 = math.tanh %370 : vector<8x32xf32>
    %372 = vector.extract_strided_slice %369 {offsets = [0, 0], sizes = [8, 32], strides = [1, 1]} : vector<8x96xf32> to vector<8x32xf32>
    %373 = vector.extract_strided_slice %369 {offsets = [0, 32], sizes = [8, 32], strides = [1, 1]} : vector<8x96xf32> to vector<8x32xf32>
    %374 = vector.extract_strided_slice %369 {offsets = [0, 64], sizes = [8, 32], strides = [1, 1]} : vector<8x96xf32> to vector<8x32xf32>
    %375 = arith.mulf %373, %328 : vector<8x32xf32>
    %376 = arith.mulf %372, %371 : vector<8x32xf32>
    %377 = arith.addf %375, %376 : vector<8x32xf32>
    %378 = math.tanh %377 : vector<8x32xf32>
    %379 = arith.mulf %374, %378 : vector<8x32xf32>
    %380 = vector.extract_strided_slice %362 {offsets = [0, 128], sizes = [8, 128], strides = [1, 1]} : vector<8x256xf32> to vector<8x128xf32>
    %381 = vector.extract_strided_slice %380 {offsets = [0, 0], sizes = [8, 96], strides = [1, 1]} : vector<8x128xf32> to vector<8x96xf32>
    %382 = arith.negf %381 : vector<8x96xf32>
    %383 = math.exp %382 : vector<8x96xf32>
    %cst_71 = arith.constant 1.000000e+00 : f32
    %384 = vector.broadcast %cst_71 : f32 to vector<8x96xf32>
    %385 = arith.addf %384, %383 : vector<8x96xf32>
    %386 = arith.divf %384, %385 : vector<8x96xf32>
    %387 = vector.extract_strided_slice %380 {offsets = [0, 96], sizes = [8, 32], strides = [1, 1]} : vector<8x128xf32> to vector<8x32xf32>
    %388 = math.tanh %387 : vector<8x32xf32>
    %389 = vector.extract_strided_slice %386 {offsets = [0, 0], sizes = [8, 32], strides = [1, 1]} : vector<8x96xf32> to vector<8x32xf32>
    %390 = vector.extract_strided_slice %386 {offsets = [0, 32], sizes = [8, 32], strides = [1, 1]} : vector<8x96xf32> to vector<8x32xf32>
    %391 = vector.extract_strided_slice %386 {offsets = [0, 64], sizes = [8, 32], strides = [1, 1]} : vector<8x96xf32> to vector<8x32xf32>
    %392 = arith.mulf %390, %345 : vector<8x32xf32>
    %393 = arith.mulf %389, %388 : vector<8x32xf32>
    %394 = arith.addf %392, %393 : vector<8x32xf32>
    %395 = math.tanh %394 : vector<8x32xf32>
    %396 = arith.mulf %391, %395 : vector<8x32xf32>
    %397 = tpu.concatenate %379, %396 in 1 : vector<8x32xf32>, vector<8x32xf32> -> vector<8x64xf32>
    %c7_i32_72 = arith.constant 7 : i32
    %c0_73 = arith.constant 0 : index
    %c0_74 = arith.constant 0 : index
    %398 = vector.load %arg1[%c0_73, %c0_74] : memref<48x64xf32, #tpu.memory_space<vmem>>, vector<48x64xf32>
    %c0_75 = arith.constant 0 : index
    %c0_76 = arith.constant 0 : index
    %399 = vector.load %arg5[%c0_75, %c0_76] : memref<64x256xf32, #tpu.memory_space<vmem>>, vector<64x256xf32>
    %cst_77 = arith.constant dense<0.000000e+00> : vector<48x256xf32>
    %400 = tpu.matmul %398, %399, %cst_77 {dimension_numbers = #tpu.dot_dimension_numbers<[1], [0], [0], [1], [0, 0, 1, 1], [], []>} : vector<48x64xf32>, vector<64x256xf32>, vector<48x256xf32> -> vector<48x256xf32>
    %c0_78 = arith.constant 0 : index
    %c0_79 = arith.constant 0 : index
    %401 = vector.load %arg6[%c0_78, %c0_79] : memref<1x256xf32, #tpu.memory_space<vmem>>, vector<1x256xf32>
    %402 = vector.broadcast %401 : vector<1x256xf32> to vector<48x256xf32>
    %403 = arith.addf %400, %402 : vector<48x256xf32>
    %c0_80 = arith.constant 0 : index
    %c0_81 = arith.constant 0 : index
    %404 = vector.load %arg15[%c0_80, %c0_81] : memref<48x256xf32, #tpu.memory_space<vmem>>, vector<48x256xf32>
    tpu.vector_store %arg15[%c0_80, %c0_81], %403 {strides = array<i32>} : memref<48x256xf32, #tpu.memory_space<vmem>>, vector<48x256xf32>,
    %c0_82 = arith.constant 0 : index
    %c0_83 = arith.constant 0 : index
    %405 = vector.load %arg7[%c0_82, %c0_83] : memref<64x256xf32, #tpu.memory_space<vmem>>, vector<64x256xf32>
    %406 = vector.extract_strided_slice %397 {offsets = [0, 0], sizes = [8, 32], strides = [1, 1]} : vector<8x64xf32> to vector<8x32xf32>
    %407 = tpu.concatenate %406, %53 in 1 : vector<8x32xf32>, vector<8x32xf32> -> vector<8x64xf32>
    %cst_84 = arith.constant dense<0.000000e+00> : vector<8x256xf32>
    %408 = tpu.matmul %407, %405, %cst_84 {dimension_numbers = #tpu.dot_dimension_numbers<[1], [0], [0], [1], [0, 0, 1, 1], [], []>} : vector<8x64xf32>, vector<64x256xf32>, vector<8x256xf32> -> vector<8x256xf32>
    %cst_85 = arith.constant 0.000000e+00 : f32
    %409 = vector.broadcast %cst_85 : f32 to vector<8x64xf32>
    %c0_i32_86 = arith.constant 0 : i32
    %c8_i32_87 = arith.constant 8 : i32
    %410 = arith.muli %c0_i32_86, %c8_i32_87 : i32
    %411 = tpu.assume_multiple %410, 8 : i32
    %412 = arith.index_cast %411 : i32 to index
    %c0_88 = arith.constant 0 : index
    %413 = vector.load %arg15[%412, %c0_88] : memref<48x256xf32, #tpu.memory_space<vmem>>, vector<8x256xf32>
    %414 = arith.addf %413, %408 : vector<8x256xf32>
    %415 = vector.extract_strided_slice %414 {offsets = [0, 0], sizes = [8, 192], strides = [1, 1]} : vector<8x256xf32> to vector<8x192xf32>
    %416 = arith.negf %415 : vector<8x192xf32>
    %417 = math.exp %416 : vector<8x192xf32>
    %cst_89 = arith.constant 1.000000e+00 : f32
    %418 = vector.broadcast %cst_89 : f32 to vector<8x192xf32>
    %419 = arith.addf %418, %417 : vector<8x192xf32>
    %420 = arith.divf %418, %419 : vector<8x192xf32>
    %421 = vector.extract_strided_slice %414 {offsets = [0, 192], sizes = [8, 64], strides = [1, 1]} : vector<8x256xf32> to vector<8x64xf32>
    %422 = math.tanh %421 : vector<8x64xf32>
    %423 = vector.extract_strided_slice %420 {offsets = [0, 0], sizes = [8, 64], strides = [1, 1]} : vector<8x192xf32> to vector<8x64xf32>
    %424 = vector.extract_strided_slice %420 {offsets = [0, 64], sizes = [8, 64], strides = [1, 1]} : vector<8x192xf32> to vector<8x64xf32>
    %425 = vector.extract_strided_slice %420 {offsets = [0, 128], sizes = [8, 64], strides = [1, 1]} : vector<8x192xf32> to vector<8x64xf32>
    %426 = arith.mulf %424, %409 : vector<8x64xf32>
    %427 = arith.mulf %423, %422 : vector<8x64xf32>
    %428 = arith.addf %426, %427 : vector<8x64xf32>
    %429 = math.tanh %428 : vector<8x64xf32>
    %430 = arith.mulf %425, %429 : vector<8x64xf32>
    %431 = arith.index_cast %411 : i32 to index
    %c0_90 = arith.constant 0 : index
    %432 = vector.load %arg16[%431, %c0_90] : memref<48x64xf32, #tpu.memory_space<vmem>>, vector<8x64xf32>
    tpu.vector_store %arg16[%431, %c0_90], %430 {strides = array<i32>} : memref<48x64xf32, #tpu.memory_space<vmem>>, vector<8x64xf32>,
    %cst_91 = arith.constant dense<0.000000e+00> : vector<8x256xf32>
    %433 = tpu.matmul %430, %405, %cst_91 {dimension_numbers = #tpu.dot_dimension_numbers<[1], [0], [0], [1], [0, 0, 1, 1], [], []>} : vector<8x64xf32>, vector<64x256xf32>, vector<8x256xf32> -> vector<8x256xf32>
    %c1_i32_92 = arith.constant 1 : i32
    %c8_i32_93 = arith.constant 8 : i32
    %434 = arith.muli %c1_i32_92, %c8_i32_93 : i32
    %435 = tpu.assume_multiple %434, 8 : i32
    %436 = arith.index_cast %435 : i32 to index
    %c0_94 = arith.constant 0 : index
    %437 = vector.load %arg15[%436, %c0_94] : memref<48x256xf32, #tpu.memory_space<vmem>>, vector<8x256xf32>
    %438 = arith.addf %437, %433 : vector<8x256xf32>
    %439 = vector.extract_strided_slice %438 {offsets = [0, 0], sizes = [8, 192], strides = [1, 1]} : vector<8x256xf32> to vector<8x192xf32>
    %440 = arith.negf %439 : vector<8x192xf32>
    %441 = math.exp %440 : vector<8x192xf32>
    %cst_95 = arith.constant 1.000000e+00 : f32
    %442 = vector.broadcast %cst_95 : f32 to vector<8x192xf32>
    %443 = arith.addf %442, %441 : vector<8x192xf32>
    %444 = arith.divf %442, %443 : vector<8x192xf32>
    %445 = vector.extract_strided_slice %438 {offsets = [0, 192], sizes = [8, 64], strides = [1, 1]} : vector<8x256xf32> to vector<8x64xf32>
    %446 = math.tanh %445 : vector<8x64xf32>
    %447 = vector.extract_strided_slice %444 {offsets = [0, 0], sizes = [8, 64], strides = [1, 1]} : vector<8x192xf32> to vector<8x64xf32>
    %448 = vector.extract_strided_slice %444 {offsets = [0, 64], sizes = [8, 64], strides = [1, 1]} : vector<8x192xf32> to vector<8x64xf32>
    %449 = vector.extract_strided_slice %444 {offsets = [0, 128], sizes = [8, 64], strides = [1, 1]} : vector<8x192xf32> to vector<8x64xf32>
    %450 = arith.mulf %448, %428 : vector<8x64xf32>
    %451 = arith.mulf %447, %446 : vector<8x64xf32>
    %452 = arith.addf %450, %451 : vector<8x64xf32>
    %453 = math.tanh %452 : vector<8x64xf32>
    %454 = arith.mulf %449, %453 : vector<8x64xf32>
    %455 = arith.index_cast %435 : i32 to index
    %c0_96 = arith.constant 0 : index
    %456 = vector.load %arg16[%455, %c0_96] : memref<48x64xf32, #tpu.memory_space<vmem>>, vector<8x64xf32>
    tpu.vector_store %arg16[%455, %c0_96], %454 {strides = array<i32>} : memref<48x64xf32, #tpu.memory_space<vmem>>, vector<8x64xf32>,
    %cst_97 = arith.constant dense<0.000000e+00> : vector<8x256xf32>
    %457 = tpu.matmul %454, %405, %cst_97 {dimension_numbers = #tpu.dot_dimension_numbers<[1], [0], [0], [1], [0, 0, 1, 1], [], []>} : vector<8x64xf32>, vector<64x256xf32>, vector<8x256xf32> -> vector<8x256xf32>
    %c2_i32_98 = arith.constant 2 : i32
    %c8_i32_99 = arith.constant 8 : i32
    %458 = arith.muli %c2_i32_98, %c8_i32_99 : i32
    %459 = tpu.assume_multiple %458, 8 : i32
    %460 = arith.index_cast %459 : i32 to index
    %c0_100 = arith.constant 0 : index
    %461 = vector.load %arg15[%460, %c0_100] : memref<48x256xf32, #tpu.memory_space<vmem>>, vector<8x256xf32>
    %462 = arith.addf %461, %457 : vector<8x256xf32>
    %463 = vector.extract_strided_slice %462 {offsets = [0, 0], sizes = [8, 192], strides = [1, 1]} : vector<8x256xf32> to vector<8x192xf32>
    %464 = arith.negf %463 : vector<8x192xf32>
    %465 = math.exp %464 : vector<8x192xf32>
    %cst_101 = arith.constant 1.000000e+00 : f32
    %466 = vector.broadcast %cst_101 : f32 to vector<8x192xf32>
    %467 = arith.addf %466, %465 : vector<8x192xf32>
    %468 = arith.divf %466, %467 : vector<8x192xf32>
    %469 = vector.extract_strided_slice %462 {offsets = [0, 192], sizes = [8, 64], strides = [1, 1]} : vector<8x256xf32> to vector<8x64xf32>
    %470 = math.tanh %469 : vector<8x64xf32>
    %471 = vector.extract_strided_slice %468 {offsets = [0, 0], sizes = [8, 64], strides = [1, 1]} : vector<8x192xf32> to vector<8x64xf32>
    %472 = vector.extract_strided_slice %468 {offsets = [0, 64], sizes = [8, 64], strides = [1, 1]} : vector<8x192xf32> to vector<8x64xf32>
    %473 = vector.extract_strided_slice %468 {offsets = [0, 128], sizes = [8, 64], strides = [1, 1]} : vector<8x192xf32> to vector<8x64xf32>
    %474 = arith.mulf %472, %452 : vector<8x64xf32>
    %475 = arith.mulf %471, %470 : vector<8x64xf32>
    %476 = arith.addf %474, %475 : vector<8x64xf32>
    %477 = math.tanh %476 : vector<8x64xf32>
    %478 = arith.mulf %473, %477 : vector<8x64xf32>
    %479 = arith.index_cast %459 : i32 to index
    %c0_102 = arith.constant 0 : index
    %480 = vector.load %arg16[%479, %c0_102] : memref<48x64xf32, #tpu.memory_space<vmem>>, vector<8x64xf32>
    tpu.vector_store %arg16[%479, %c0_102], %478 {strides = array<i32>} : memref<48x64xf32, #tpu.memory_space<vmem>>, vector<8x64xf32>,
    %cst_103 = arith.constant dense<0.000000e+00> : vector<8x256xf32>
    %481 = tpu.matmul %478, %405, %cst_103 {dimension_numbers = #tpu.dot_dimension_numbers<[1], [0], [0], [1], [0, 0, 1, 1], [], []>} : vector<8x64xf32>, vector<64x256xf32>, vector<8x256xf32> -> vector<8x256xf32>
    %c3_i32_104 = arith.constant 3 : i32
    %c8_i32_105 = arith.constant 8 : i32
    %482 = arith.muli %c3_i32_104, %c8_i32_105 : i32
    %483 = tpu.assume_multiple %482, 8 : i32
    %484 = arith.index_cast %483 : i32 to index
    %c0_106 = arith.constant 0 : index
    %485 = vector.load %arg15[%484, %c0_106] : memref<48x256xf32, #tpu.memory_space<vmem>>, vector<8x256xf32>
    %486 = arith.addf %485, %481 : vector<8x256xf32>
    %487 = vector.extract_strided_slice %486 {offsets = [0, 0], sizes = [8, 192], strides = [1, 1]} : vector<8x256xf32> to vector<8x192xf32>
    %488 = arith.negf %487 : vector<8x192xf32>
    %489 = math.exp %488 : vector<8x192xf32>
    %cst_107 = arith.constant 1.000000e+00 : f32
    %490 = vector.broadcast %cst_107 : f32 to vector<8x192xf32>
    %491 = arith.addf %490, %489 : vector<8x192xf32>
    %492 = arith.divf %490, %491 : vector<8x192xf32>
    %493 = vector.extract_strided_slice %486 {offsets = [0, 192], sizes = [8, 64], strides = [1, 1]} : vector<8x256xf32> to vector<8x64xf32>
    %494 = math.tanh %493 : vector<8x64xf32>
    %495 = vector.extract_strided_slice %492 {offsets = [0, 0], sizes = [8, 64], strides = [1, 1]} : vector<8x192xf32> to vector<8x64xf32>
    %496 = vector.extract_strided_slice %492 {offsets = [0, 64], sizes = [8, 64], strides = [1, 1]} : vector<8x192xf32> to vector<8x64xf32>
    %497 = vector.extract_strided_slice %492 {offsets = [0, 128], sizes = [8, 64], strides = [1, 1]} : vector<8x192xf32> to vector<8x64xf32>
    %498 = arith.mulf %496, %476 : vector<8x64xf32>
    %499 = arith.mulf %495, %494 : vector<8x64xf32>
    %500 = arith.addf %498, %499 : vector<8x64xf32>
    %501 = math.tanh %500 : vector<8x64xf32>
    %502 = arith.mulf %497, %501 : vector<8x64xf32>
    %503 = arith.index_cast %483 : i32 to index
    %c0_108 = arith.constant 0 : index
    %504 = vector.load %arg16[%503, %c0_108] : memref<48x64xf32, #tpu.memory_space<vmem>>, vector<8x64xf32>
    tpu.vector_store %arg16[%503, %c0_108], %502 {strides = array<i32>} : memref<48x64xf32, #tpu.memory_space<vmem>>, vector<8x64xf32>,
    %cst_109 = arith.constant dense<0.000000e+00> : vector<8x256xf32>
    %505 = tpu.matmul %502, %405, %cst_109 {dimension_numbers = #tpu.dot_dimension_numbers<[1], [0], [0], [1], [0, 0, 1, 1], [], []>} : vector<8x64xf32>, vector<64x256xf32>, vector<8x256xf32> -> vector<8x256xf32>
    %c4_i32_110 = arith.constant 4 : i32
    %c8_i32_111 = arith.constant 8 : i32
    %506 = arith.muli %c4_i32_110, %c8_i32_111 : i32
    %507 = tpu.assume_multiple %506, 8 : i32
    %508 = arith.index_cast %507 : i32 to index
    %c0_112 = arith.constant 0 : index
    %509 = vector.load %arg15[%508, %c0_112] : memref<48x256xf32, #tpu.memory_space<vmem>>, vector<8x256xf32>
    %510 = arith.addf %509, %505 : vector<8x256xf32>
    %511 = vector.extract_strided_slice %510 {offsets = [0, 0], sizes = [8, 192], strides = [1, 1]} : vector<8x256xf32> to vector<8x192xf32>
    %512 = arith.negf %511 : vector<8x192xf32>
    %513 = math.exp %512 : vector<8x192xf32>
    %cst_113 = arith.constant 1.000000e+00 : f32
    %514 = vector.broadcast %cst_113 : f32 to vector<8x192xf32>
    %515 = arith.addf %514, %513 : vector<8x192xf32>
    %516 = arith.divf %514, %515 : vector<8x192xf32>
    %517 = vector.extract_strided_slice %510 {offsets = [0, 192], sizes = [8, 64], strides = [1, 1]} : vector<8x256xf32> to vector<8x64xf32>
    %518 = math.tanh %517 : vector<8x64xf32>
    %519 = vector.extract_strided_slice %516 {offsets = [0, 0], sizes = [8, 64], strides = [1, 1]} : vector<8x192xf32> to vector<8x64xf32>
    %520 = vector.extract_strided_slice %516 {offsets = [0, 64], sizes = [8, 64], strides = [1, 1]} : vector<8x192xf32> to vector<8x64xf32>
    %521 = vector.extract_strided_slice %516 {offsets = [0, 128], sizes = [8, 64], strides = [1, 1]} : vector<8x192xf32> to vector<8x64xf32>
    %522 = arith.mulf %520, %500 : vector<8x64xf32>
    %523 = arith.mulf %519, %518 : vector<8x64xf32>
    %524 = arith.addf %522, %523 : vector<8x64xf32>
    %525 = math.tanh %524 : vector<8x64xf32>
    %526 = arith.mulf %521, %525 : vector<8x64xf32>
    %527 = arith.index_cast %507 : i32 to index
    %c0_114 = arith.constant 0 : index
    %528 = vector.load %arg16[%527, %c0_114] : memref<48x64xf32, #tpu.memory_space<vmem>>, vector<8x64xf32>
    tpu.vector_store %arg16[%527, %c0_114], %526 {strides = array<i32>} : memref<48x64xf32, #tpu.memory_space<vmem>>, vector<8x64xf32>,
    %cst_115 = arith.constant dense<0.000000e+00> : vector<8x256xf32>
    %529 = tpu.matmul %526, %405, %cst_115 {dimension_numbers = #tpu.dot_dimension_numbers<[1], [0], [0], [1], [0, 0, 1, 1], [], []>} : vector<8x64xf32>, vector<64x256xf32>, vector<8x256xf32> -> vector<8x256xf32>
    %c5_i32_116 = arith.constant 5 : i32
    %c40 = arith.constant 40 : index
    %c0_117 = arith.constant 0 : index
    %530 = vector.load %arg15[%c40, %c0_117] : memref<48x256xf32, #tpu.memory_space<vmem>>, vector<8x256xf32>
    %531 = arith.addf %530, %529 : vector<8x256xf32>
    %532 = vector.extract_strided_slice %531 {offsets = [0, 0], sizes = [8, 192], strides = [1, 1]} : vector<8x256xf32> to vector<8x192xf32>
    %533 = arith.negf %532 : vector<8x192xf32>
    %534 = math.exp %533 : vector<8x192xf32>
    %cst_118 = arith.constant 1.000000e+00 : f32
    %535 = vector.broadcast %cst_118 : f32 to vector<8x192xf32>
    %536 = arith.addf %535, %534 : vector<8x192xf32>
    %537 = arith.divf %535, %536 : vector<8x192xf32>
    %538 = vector.extract_strided_slice %531 {offsets = [0, 192], sizes = [8, 64], strides = [1, 1]} : vector<8x256xf32> to vector<8x64xf32>
    %539 = math.tanh %538 : vector<8x64xf32>
    %540 = vector.extract_strided_slice %537 {offsets = [0, 0], sizes = [8, 64], strides = [1, 1]} : vector<8x192xf32> to vector<8x64xf32>
    %541 = vector.extract_strided_slice %537 {offsets = [0, 64], sizes = [8, 64], strides = [1, 1]} : vector<8x192xf32> to vector<8x64xf32>
    %542 = vector.extract_strided_slice %537 {offsets = [0, 128], sizes = [8, 64], strides = [1, 1]} : vector<8x192xf32> to vector<8x64xf32>
    %543 = arith.mulf %541, %524 : vector<8x64xf32>
    %544 = arith.mulf %540, %539 : vector<8x64xf32>
    %545 = arith.addf %543, %544 : vector<8x64xf32>
    %546 = math.tanh %545 : vector<8x64xf32>
    %547 = arith.mulf %542, %546 : vector<8x64xf32>
    %c40_119 = arith.constant 40 : index
    %c0_120 = arith.constant 0 : index
    %548 = vector.load %arg16[%c40_119, %c0_120] : memref<48x64xf32, #tpu.memory_space<vmem>>, vector<8x64xf32>
    tpu.vector_store %arg16[%c40_119, %c0_120], %547 {strides = array<i32>} : memref<48x64xf32, #tpu.memory_space<vmem>>, vector<8x64xf32>,
    %c0_i32_121 = arith.constant 0 : i32
    %549 = tpu.memref_slice %arg20[%c0_i32_121] : memref<3x!tpu.dma_semaphore, #tpu.memory_space<semaphore_mem>> -> memref<1x!tpu.dma_semaphore, #tpu.memory_space<semaphore_mem>>
    %550 = tpu.memref_squeeze %549 : memref<1x!tpu.dma_semaphore, #tpu.memory_space<semaphore_mem>> -> memref<!tpu.dma_semaphore, #tpu.memory_space<semaphore_mem>>
    tpu.wait_dma2 semaphore(%550 : memref<!tpu.dma_semaphore, #tpu.memory_space<semaphore_mem>>) src(%arg10 : memref<64x128xf32, #tpu.memory_space<any>>) dst(%arg17 : memref<64x128xf32, #tpu.memory_space<vmem>>)
    %c1_i32_122 = arith.constant 1 : i32
    %551 = tpu.memref_slice %arg20[%c1_i32_122] : memref<3x!tpu.dma_semaphore, #tpu.memory_space<semaphore_mem>> -> memref<1x!tpu.dma_semaphore, #tpu.memory_space<semaphore_mem>>
    %552 = tpu.memref_squeeze %551 : memref<1x!tpu.dma_semaphore, #tpu.memory_space<semaphore_mem>> -> memref<!tpu.dma_semaphore, #tpu.memory_space<semaphore_mem>>
    tpu.wait_dma2 semaphore(%552 : memref<!tpu.dma_semaphore, #tpu.memory_space<semaphore_mem>>) src(%arg11 : memref<64x128xf32, #tpu.memory_space<any>>) dst(%arg18 : memref<64x128xf32, #tpu.memory_space<vmem>>)
    %c2_i32_123 = arith.constant 2 : i32
    %553 = tpu.memref_slice %arg20[%c2_i32_123] : memref<3x!tpu.dma_semaphore, #tpu.memory_space<semaphore_mem>> -> memref<1x!tpu.dma_semaphore, #tpu.memory_space<semaphore_mem>>
    %554 = tpu.memref_squeeze %553 : memref<1x!tpu.dma_semaphore, #tpu.memory_space<semaphore_mem>> -> memref<!tpu.dma_semaphore, #tpu.memory_space<semaphore_mem>>
    tpu.wait_dma2 semaphore(%554 : memref<!tpu.dma_semaphore, #tpu.memory_space<semaphore_mem>>) src(%arg12 : memref<128x128xf32, #tpu.memory_space<any>>) dst(%arg19 : memref<128x128xf32, #tpu.memory_space<vmem>>)
    %c0_124 = arith.constant 0 : index
    %c0_125 = arith.constant 0 : index
    %555 = vector.load %arg16[%c0_124, %c0_125] : memref<48x64xf32, #tpu.memory_space<vmem>>, vector<48x64xf32>
    %c0_126 = arith.constant 0 : index
    %c0_127 = arith.constant 0 : index
    %556 = vector.load %arg1[%c0_126, %c0_127] : memref<48x64xf32, #tpu.memory_space<vmem>>, vector<48x64xf32>
    %c0_128 = arith.constant 0 : index
    %c0_129 = arith.constant 0 : index
    %557 = vector.load %arg17[%c0_128, %c0_129] : memref<64x128xf32, #tpu.memory_space<vmem>>, vector<64x128xf32>
    %cst_130 = arith.constant dense<0.000000e+00> : vector<48x128xf32>
    %558 = tpu.matmul %555, %557, %cst_130 {dimension_numbers = #tpu.dot_dimension_numbers<[1], [0], [0], [1], [0, 0, 1, 1], [], []>} : vector<48x64xf32>, vector<64x128xf32>, vector<48x128xf32> -> vector<48x128xf32>
    %c0_131 = arith.constant 0 : index
    %c0_132 = arith.constant 0 : index
    %559 = vector.load %arg18[%c0_131, %c0_132] : memref<64x128xf32, #tpu.memory_space<vmem>>, vector<64x128xf32>
    %cst_133 = arith.constant dense<0.000000e+00> : vector<48x128xf32>
    %560 = tpu.matmul %556, %559, %cst_133 {dimension_numbers = #tpu.dot_dimension_numbers<[1], [0], [0], [1], [0, 0, 1, 1], [], []>} : vector<48x64xf32>, vector<64x128xf32>, vector<48x128xf32> -> vector<48x128xf32>
    %561 = arith.addf %558, %560 : vector<48x128xf32>
    %c0_134 = arith.constant 0 : index
    %c0_135 = arith.constant 0 : index
    %562 = vector.load %arg8[%c0_134, %c0_135] : memref<1x128xf32, #tpu.memory_space<vmem>>, vector<1x128xf32>
    %563 = vector.broadcast %562 : vector<1x128xf32> to vector<48x128xf32>
    %564 = arith.addf %561, %563 : vector<48x128xf32>
    %565 = math.tanh %564 : vector<48x128xf32>
    %c0_136 = arith.constant 0 : index
    %c0_137 = arith.constant 0 : index
    %566 = vector.load %arg19[%c0_136, %c0_137] : memref<128x128xf32, #tpu.memory_space<vmem>>, vector<128x128xf32>
    %cst_138 = arith.constant dense<0.000000e+00> : vector<48x128xf32>
    %567 = tpu.matmul %565, %566, %cst_138 {dimension_numbers = #tpu.dot_dimension_numbers<[1], [0], [0], [1], [0, 0, 1, 1], [], []>} : vector<48x128xf32>, vector<128x128xf32>, vector<48x128xf32> -> vector<48x128xf32>
    %c0_139 = arith.constant 0 : index
    %c0_140 = arith.constant 0 : index
    %568 = vector.load %arg9[%c0_139, %c0_140] : memref<1x128xf32, #tpu.memory_space<vmem>>, vector<1x128xf32>
    %569 = vector.broadcast %568 : vector<1x128xf32> to vector<48x128xf32>
    %570 = arith.addf %567, %569 : vector<48x128xf32>
    %c0_141 = arith.constant 0 : index
    %c0_142 = arith.constant 0 : index
    %571 = vector.load %arg13[%c0_141, %c0_142] : memref<48x128xf32, #tpu.memory_space<vmem>>, vector<48x128xf32>
    tpu.vector_store %arg13[%c0_141, %c0_142], %570 {strides = array<i32>} : memref<48x128xf32, #tpu.memory_space<vmem>>, vector<48x128xf32>,
    return
  }
}

</mosaic_0001>

<llo_original>
// kernel: s2vt_forward.1
$region0: #{s2vt_forward.1}
  #allocation0 [shape = 'u32[]', space=smem, size = 0x4, offset = 0x4, fixed_abs, tag = 'smem constant byte address 0x4 - core index']
  #allocation1 [shape = 'u32[144,128]{1,0:T(1,128)}', space=vmem, size = 0x12000, scoped, tag = 'internal scratch']
  #allocation2 [shape = 'f32[64,256]{1,0:T(8,128)}', space=vmem, size = 0x10000, scoped, tag = 'scratch operand']
  #allocation3 [shape = 'f32[48,256]{1,0:T(8,128)}', space=vmem, size = 0xc000, scoped, tag = 'scratch operand']
  #allocation4 [shape = 'f32[48,64]{1,0:T(8,128)}', space=vmem, size = 0x6000, scoped, tag = 'scratch operand']
  #allocation5 [shape = 'f32[64,128]{1,0:T(8,128)}', space=vmem, size = 0x8000, scoped, tag = 'scratch operand']
  #allocation6 [shape = 'f32[64,128]{1,0:T(8,128)}', space=vmem, size = 0x8000, scoped, tag = 'scratch operand']
  #allocation7 [shape = 'f32[128,128]{1,0:T(8,128)}', space=vmem, size = 0x10000, scoped, tag = 'scratch operand']
  #allocation8 [shape = 's32[3]{0}', space=sflag, size = 0xc, scoped, tag = 'scratch operand']
  #allocation13 [shape = 's32[]', space=sflag, size = 0x4, offset = 0, fixed_abs, tag = 'sflag constant byte address 0x0 - dummy sync flag']
  #allocation14 [shape = 's32[]', space=sflag, size = 0x4, offset = 0, fixed_abs, tag = 'sflag constant byte address 0x0 - dummy sync flag']
  #allocation15 [shape = 'u32[]', space=smem, size = 0x4, offset = 0x44, fixed_abs, tag = 'smem constant byte address 0x44 - assertion arg 0']
  #allocation16 [shape = 'u32[]', space=smem, size = 0x4, offset = 0x48, fixed_abs, tag = 'smem constant byte address 0x48 - assertion arg 1']
  #allocation17 [shape = 's32[]', space=sflag, size = 0x4, offset = 0, fixed_abs, tag = 'sflag constant byte address 0x0 - dummy sync flag']
  #allocation18 [shape = 's32[]', space=sflag, size = 0x4, offset = 0, fixed_abs, tag = 'sflag constant byte address 0x0 - dummy sync flag']
  #allocation19 [shape = 's32[]', space=sflag, size = 0x4, offset = 0, fixed_abs, tag = 'sflag constant byte address 0x0 - dummy sync flag']
  #allocation20 [shape = 's32[]', space=sflag, size = 0x4, offset = 0, fixed_abs, tag = 'sflag constant byte address 0x0 - dummy sync flag']
  %s0 = inlined_call_operand.vmem [shape: f32[64,64], index: 0, kind: input, shape index: {}]
  %s1 = inlined_call_operand.vmem [shape: f32[48,64], index: 1, kind: input, shape index: {}]
  %s2 = inlined_call_operand.vmem [shape: f32[64,256], index: 2, kind: input, shape index: {}]
  %s3 = inlined_call_operand.vmem [shape: f32[1,256], index: 3, kind: input, shape index: {}]
  %s4 = inlined_call_operand.vmem [shape: f32[64,256], index: 4, kind: input, shape index: {}]
  %s5 = inlined_call_operand.hbm [shape: f32[64,256], index: 5, kind: input, shape index: {}]
  %s6 = inlined_call_operand.vmem [shape: f32[1,256], index: 6, kind: input, shape index: {}]
  %s7 = inlined_call_operand.hbm [shape: f32[64,256], index: 7, kind: input, shape index: {}]
  %s8 = inlined_call_operand.vmem [shape: f32[1,128], index: 8, kind: input, shape index: {}]
  %s9 = inlined_call_operand.vmem [shape: f32[1,128], index: 9, kind: input, shape index: {}]
  %s10 = inlined_call_operand.hbm [shape: f32[64,128], index: 10, kind: input, shape index: {}]
  %s11 = inlined_call_operand.hbm [shape: f32[64,128], index: 11, kind: input, shape index: {}]
  %s12 = inlined_call_operand.hbm [shape: f32[128,128], index: 12, kind: input, shape index: {}]
  %s13 = inlined_call_operand.vmem [shape: f32[48,128], index: 13, kind: output, shape index: {}]
  %s14 = sld [smem:[#allocation0]]
  $region70: #{s2vt_forward.1} parent=0
    _
  %s16 = ssub.s32 1, %s14
  %s17 = scalar_select 0, %s16, %s14
  $region1: #{s2vt_forward.1} parent=0
    #allocation9 [shape = 'u8[65536]{0}', space=vmem, size = 0x10000, scoped, tag = 'input window, operand 5, single buffered']
    #allocation10 [shape = 's32[1]{0}', space=sflag, size = 0x4, scoped, tag = 'scoped memory for s2vt_forward.1']
    #allocation11 [shape = 'u8[65536]{0}', space=vmem, size = 0x10000, scoped, tag = 'input window, operand 7, single buffered']
    #allocation12 [shape = 's32[1]{0}', space=sflag, size = 0x4, scoped, tag = 'scoped memory for s2vt_forward.1']
    %18 = vsyncpa [#allocation10], 0
    %19 = vsyncpa [#allocation12], 0
    // Predicated region
    $region2: #{s2vt_forward.1} parent=1 // pred_check
      _
    $region3: #{s2vt_forward.1} parent=1 // pred_check_branch
      %21 = sbr.rel (0) target = $region5
    $region4: #{s2vt_forward.1} parent=1 // pred_region
      _
    $region5: #{s2vt_forward.1} parent=1 // pred_fallthru
      _
    // Predicated region
    $region6: #{s2vt_forward.1} parent=1 // pred_check
      _
    $region7: #{s2vt_forward.1} parent=1 // pred_check_branch
      %23 = sbr.rel (0) target = $region9
    $region8: #{s2vt_forward.1} parent=1 // pred_region
      _
    $region9: #{s2vt_forward.1} parent=1 // pred_fallthru
      _
    // Predicated region
    $region10: #{s2vt_forward.1} parent=1 // pred_check
      _
    $region11: #{s2vt_forward.1} parent=1 // pred_check_branch
      %25 = sbr.rel (0) target = $region13
    $region12: #{s2vt_forward.1} parent=1 // pred_region
      _
    $region13: #{s2vt_forward.1} parent=1 // pred_fallthru
      _
    // Predicated region
    $region14: #{s2vt_forward.1} parent=1 // pred_check
      _
    $region15: #{s2vt_forward.1} parent=1 // pred_check_branch
      %27 = sbr.rel (0) target = $region17
    $region16: #{s2vt_forward.1} parent=1 // pred_region
      _
    $region17: #{s2vt_forward.1} parent=1 // pred_fallthru
      _
    // Predicated region
    $region18: #{s2vt_forward.1} parent=1 // pred_check
      _
    $region19: #{s2vt_forward.1} parent=1 // pred_check_branch
      %29 = sbr.rel (0) target = $region21
    $region20: #{s2vt_forward.1} parent=1 // pred_region
      _
    $region21: #{s2vt_forward.1} parent=1 // pred_fallthru
      _
    // Predicated region
    $region22: #{s2vt_forward.1} parent=1 // pred_check
      _
    $region23: #{s2vt_forward.1} parent=1 // pred_check_branch
      %31 = sbr.rel (0) target = $region25
    $region24: #{s2vt_forward.1} parent=1 // pred_region
      %s33 = ssub.s32 2048, 2048
      %34 = vsyncadd [#allocation10], %s33
      %s35 = sshll.u32 [#allocation9], 4
      %s36 = int_to_ptr.vmem [resolvable:$true] %s35
      %41 = dma.hbm_to_vmem [thread:$0]  %s5, 2048, %s36, [#allocation10], 256, 256, 16
    $region25: #{s2vt_forward.1} parent=1 // pred_fallthru
      _
    // Predicated region
    $region26: #{s2vt_forward.1} parent=1 // pred_check
      _
    $region27: #{s2vt_forward.1} parent=1 // pred_check_branch
      %43 = sbr.rel (0) target = $region29
    $region28: #{s2vt_forward.1} parent=1 // pred_region
      _
    $region29: #{s2vt_forward.1} parent=1 // pred_fallthru
      _
    // Predicated region
    $region30: #{s2vt_forward.1} parent=1 // pred_check
      _
    $region31: #{s2vt_forward.1} parent=1 // pred_check_branch
      %45 = sbr.rel (0) target = $region33
    $region32: #{s2vt_forward.1} parent=1 // pred_region
      %s47 = ssub.s32 2048, 2048
      %48 = vsyncadd [#allocation12], %s47
      %s49 = sshll.u32 [#allocation11], 4
      %s50 = int_to_ptr.vmem [resolvable:$true] %s49
      %55 = dma.hbm_to_vmem [thread:$0]  %s7, 2048, %s50, [#allocation12], 256, 256, 16
    $region33: #{s2vt_forward.1} parent=1 // pred_fallthru
      _
    // Predicated region
    $region34: #{s2vt_forward.1} parent=1 // pred_check
      _
    $region35: #{s2vt_forward.1} parent=1 // pred_check_branch
      %57 = sbr.rel (0) target = $region37
    $region36: #{s2vt_forward.1} parent=1 // pred_region
      _
    $region37: #{s2vt_forward.1} parent=1 // pred_fallthru
      _
    // Predicated region
    $region38: #{s2vt_forward.1} parent=1 // pred_check
      _
    $region39: #{s2vt_forward.1} parent=1 // pred_check_branch
      %59 = sbr.rel (0) target = $region41
    $region40: #{s2vt_forward.1} parent=1 // pred_region
      _
    $region41: #{s2vt_forward.1} parent=1 // pred_fallthru
      _
    // Predicated region
    $region42: #{s2vt_forward.1} parent=1 // pred_check
      _
    $region43: #{s2vt_forward.1} parent=1 // pred_check_branch
      %61 = sbr.rel (0) target = $region45
    $region44: #{s2vt_forward.1} parent=1 // pred_region
      %62 = dma.done [#allocation10], 2048
    $region45: #{s2vt_forward.1} parent=1 // pred_fallthru
      _
    // Predicated region
    $region46: #{s2vt_forward.1} parent=1 // pred_check
      _
    $region47: #{s2vt_forward.1} parent=1 // pred_check_branch
      %64 = sbr.rel (0) target = $region49
    $region48: #{s2vt_forward.1} parent=1 // pred_region
      %65 = dma.done [#allocation12], 2048
    $region49: #{s2vt_forward.1} parent=1 // pred_fallthru
      _
    // Predicated region
    $region50: #{s2vt_forward.1} parent=1 // pred_check
      _
    $region51: #{s2vt_forward.1} parent=1 // pred_check_branch
      %67 = sbr.rel target = $region53
    $region52: #{s2vt_forward.1} parent=1 // pred_region
      %68 = sst [smem:[#allocation15]] [#allocation14]
      %69 = sst [smem:[#allocation16]] [#allocation13]
    $region53: #{s2vt_forward.1} parent=1 // pred_fallthru
      _
    %71 = shalt.err (0)
    %s73 = sshll.u32 [#allocation5], 4
    %s74 = int_to_ptr.vmem [resolvable:$true] %s73
    %76 = dma.hbm_to_vmem [thread:$0]  %s10, 1024, %s74, [#allocation8]
    %s77 = scalar_lea.sflag [#allocation8], 1
    // Predicated region
    $region54: #{s2vt_forward.1} parent=1 // pred_check
      _
    $region55: #{s2vt_forward.1} parent=1 // pred_check_branch
      %79 = sbr.rel target = $region57
    $region56: #{s2vt_forward.1} parent=1 // pred_region
      %80 = sst [smem:[#allocation15]] [#allocation18]
      %81 = sst [smem:[#allocation16]] [#allocation17]
    $region57: #{s2vt_forward.1} parent=1 // pred_fallthru
      _
    %83 = shalt.err (0)
    %s85 = sshll.u32 [#allocation6], 4
    %s86 = int_to_ptr.vmem [resolvable:$true] %s85
    %88 = dma.hbm_to_vmem [thread:$0]  %s11, 1024, %s86, %s77
    %s89 = scalar_lea.sflag [#allocation8], 2
    // Predicated region
    $region58: #{s2vt_forward.1} parent=1 // pred_check
      _
    $region59: #{s2vt_forward.1} parent=1 // pred_check_branch
      %91 = sbr.rel target = $region61
    $region60: #{s2vt_forward.1} parent=1 // pred_region
      %92 = sst [smem:[#allocation15]] [#allocation20]
      %93 = sst [smem:[#allocation16]] [#allocation19]
    $region61: #{s2vt_forward.1} parent=1 // pred_fallthru
      _
    %95 = shalt.err (0)
    %s97 = sshll.u32 [#allocation7], 4
    %s98 = int_to_ptr.vmem [resolvable:$true] %s97
    %100 = dma.hbm_to_vmem [thread:$0]  %s12, 2048, %s98, %s89
    %v101 = vld [vmem:[%s0] sm:$0xff]
    %v102 = vld [vmem:[%s0 + $0x8] sm:$0xff]
    %v103 = vld [vmem:[%s0 + $0x10] sm:$0xff]
    %v104 = vld [vmem:[%s0 + $0x18] sm:$0xff]
    %v105 = vld [vmem:[%s0 + $0x20] sm:$0xff]
    %v106 = vld [vmem:[%s0 + $0x28] sm:$0xff]
    %v107 = vld [vmem:[%s0 + $0x30] sm:$0xff]
    %v108 = vld [vmem:[%s0 + $0x38] sm:$0xff]
    %v109 = vld [vmem:[%s2] sm:$0xff]
    %v110 = vld [vmem:[%s2 + $0x8] sm:$0xff]
    %v111 = vld [vmem:[%s2 + $0x10] sm:$0xff]
    %v112 = vld [vmem:[%s2 + $0x18] sm:$0xff]
    %v113 = vld [vmem:[%s2 + $0x20] sm:$0xff]
    %v114 = vld [vmem:[%s2 + $0x28] sm:$0xff]
    %v115 = vld [vmem:[%s2 + $0x30] sm:$0xff]
    %v116 = vld [vmem:[%s2 + $0x38] sm:$0xff]
    %v117 = vld [vmem:[%s2 + $0x40] sm:$0xff]
    %v118 = vld [vmem:[%s2 + $0x48] sm:$0xff]
    %v119 = vld [vmem:[%s2 + $0x50] sm:$0xff]
    %v120 = vld [vmem:[%s2 + $0x58] sm:$0xff]
    %v121 = vld [vmem:[%s2 + $0x60] sm:$0xff]
    %v122 = vld [vmem:[%s2 + $0x68] sm:$0xff]
    %v123 = vld [vmem:[%s2 + $0x70] sm:$0xff]
    %v124 = vld [vmem:[%s2 + $0x78] sm:$0xff]
    %v125 = vld [vmem:[%s3] sm:$0x3]
    %v127 = vlaneseq
    %v128 = vshrl.u32 %v127, 7
    %v129 = vsub.s32 0, %v128
    %v130 = vrot.slane %v125, %v129
    %v131 = vlaneseq
    %v132 = vshrl.u32 %v131, 7
    %v133 = vsub.s32 1, %v132
    %v134 = vrot.slane %v125, %v133
    %vm137 = vcmask 523264
    %v139 = vsel %vm137, %v101, 0
    %v142 = vsel %vm137, %v102, 0
    %v145 = vsel %vm137, %v103, 0
    %v148 = vsel %vm137, %v104, 0
    %v151 = vsel %vm137, %v105, 0
    %v154 = vsel %vm137, %v106, 0
    %v157 = vsel %vm137, %v107, 0
    %v160 = vsel %vm137, %v108, 0
    %162 = vmatprep.subr.mxu0 0.0
    %163 = vmatpush1.msra.mxu0 0.0
    %164 = vmatprep.subr.mxu0 0.0
    %165 = vmatpush1.msra.mxu0 0.0
    %166 = vmatprep.subr.mxu0 0.0
    %167 = vmatpush1.msra.mxu0 0.0
    %168 = vmatprep.subr.mxu0 0.0
    %169 = vmatpush1.msra.mxu0 0.0
    %170 = vmatprep.subr.mxu0 0.0
    %171 = vmatpush1.msra.mxu0 0.0
    %172 = vmatprep.subr.mxu0 0.0
    %173 = vmatpush1.msra.mxu0 0.0
    %174 = vmatprep.subr.mxu0 0.0
    %175 = vmatpush1.msra.mxu0 0.0
    %176 = vmatprep.subr.mxu0 0.0
    %177 = vmatpush1.msra.mxu0 0.0
    %178 = vmatprep.subr.mxu0 %v124
    %179 = vmatpush1.msra.mxu0 %v123
    %180 = vmatprep.subr.mxu0 %v122
    %181 = vmatpush1.msra.mxu0 %v121
    %182 = vmatprep.subr.mxu0 %v120
    %183 = vmatpush1.msra.mxu0 %v119
    %184 = vmatprep.subr.mxu0 %v118
    %185 = vmatpush1.msra.mxu0 %v117
    %186 = vmatprep.subr.mxu0 %v116
    %187 = vmatpush1.msra.mxu0 %v115
    %188 = vmatprep.subr.mxu0 %v114
    %189 = vmatpush1.msra.mxu0 %v113
    %190 = vmatprep.subr.mxu0 %v112
    %191 = vmatpush1.msra.mxu0 %v111
    %192 = vmatprep.subr.mxu0 %v110
    %193 = vmatpush1.msra.mxu0 %v109
    %194 = vmatprep.subr.mxu0 0.0
    %195 = vmatpush2.msra.mxu0 0.0
    %196 = vmatprep.subr.mxu0 0.0
    %197 = vmatpush2.msra.mxu0 0.0
    %198 = vmatprep.subr.mxu0 0.0
    %199 = vmatpush2.msra.mxu0 0.0
    %200 = vmatprep.subr.mxu0 0.0
    %201 = vmatpush2.msra.mxu0 0.0
    %202 = vmatprep.subr.mxu0 0.0
    %203 = vmatpush2.msra.mxu0 0.0
    %204 = vmatprep.subr.mxu0 0.0
    %205 = vmatpush2.msra.mxu0 0.0
    %206 = vmatprep.subr.mxu0 0.0
    %207 = vmatpush2.msra.mxu0 0.0
    %208 = vmatprep.subr.mxu0 0.0
    %209 = vmatpush2.msra.mxu0 0.0
    %210 = vmatprep.subr.mxu0 0.0
    %211 = vmatpush2.msra.mxu0 0.0
    %212 = vmatprep.subr.mxu0 0.0
    %213 = vmatpush2.msra.mxu0 0.0
    %214 = vmatprep.subr.mxu0 0.0
    %215 = vmatpush2.msra.mxu0 0.0
    %216 = vmatprep.subr.mxu0 0.0
    %217 = vmatpush2.msra.mxu0 0.0
    %218 = vmatprep.subr.mxu0 0.0
    %219 = vmatpush2.msra.mxu0 0.0
    %220 = vmatprep.subr.mxu0 0.0
    %221 = vmatpush2.msra.mxu0 0.0
    %222 = vmatprep.subr.mxu0 0.0
    %223 = vmatpush2.msra.mxu0 0.0
    %224 = vmatprep.subr.mxu0 0.0
    %225 = vmatpush2.msra.mxu0 0.0
    %226 = vmatprep.mubr.f32.mxu0 0.0
    %227 = vmatmul.mubr.f32.gmra.mxu0 %v139
    %v228 = vpop.f32.mrf.mxu0
    %v229 = vadd.f32 %v130, %v228
    %v230 = vpop.f32.mrf.mxu0
    %v231 = vadd.f32 %v134, %v230
    %232 = vmatprep.mubr.f32.mxu0 0.0
    %233 = vmatmul.mubr.f32.gmra.mxu0 %v142
    %v234 = vpop.f32.mrf.mxu0
    %v235 = vadd.f32 %v130, %v234
    %v236 = vpop.f32.mrf.mxu0
    %v237 = vadd.f32 %v134, %v236
    %238 = vmatprep.mubr.f32.mxu0 0.0
    %239 = vmatmul.mubr.f32.gmra.mxu0 %v145
    %v240 = vpop.f32.mrf.mxu0
    %v241 = vadd.f32 %v130, %v240
    %v242 = vpop.f32.mrf.mxu0
    %v243 = vadd.f32 %v134, %v242
    %244 = vmatprep.mubr.f32.mxu0 0.0
    %245 = vmatmul.mubr.f32.gmra.mxu0 %v148
    %v246 = vpop.f32.mrf.mxu0
    %v247 = vadd.f32 %v130, %v246
    %v248 = vpop.f32.mrf.mxu0
    %v249 = vadd.f32 %v134, %v248
    %250 = vmatprep.mubr.f32.mxu0 0.0
    %251 = vmatmul.mubr.f32.gmra.mxu0 %v151
    %v252 = vpop.f32.mrf.mxu0
    %v253 = vadd.f32 %v130, %v252
    %v254 = vpop.f32.mrf.mxu0
    %v255 = vadd.f32 %v134, %v254
    %256 = vmatprep.mubr.f32.mxu0 0.0
    %257 = vmatmul.mubr.f32.gmra.mxu0 %v154
    %v258 = vpop.f32.mrf.mxu0
    %v259 = vadd.f32 %v130, %v258
    %v260 = vpop.f32.mrf.mxu0
    %v261 = vadd.f32 %v134, %v260
    %262 = vmatprep.mubr.f32.mxu0 0.0
    %263 = vmatmul.mubr.f32.gmra.mxu0 %v157
    %v264 = vpop.f32.mrf.mxu0
    %v265 = vadd.f32 %v130, %v264
    %v266 = vpop.f32.mrf.mxu0
    %v267 = vadd.f32 %v134, %v266
    %268 = vmatprep.mubr.f32.mxu0 0.0
    %269 = vmatmul.mubr.f32.gmra.mxu0 %v160
    %v270 = vpop.f32.mrf.mxu0
    %v271 = vadd.f32 %v130, %v270
    %v272 = vpop.f32.mrf.mxu0
    %v273 = vadd.f32 %v134, %v272
    %274 = vdwg.mxu0
    %275 = vst [vmem:[#allocation2] sm:$0xff] %v229
    %276 = vst [vmem:[#allocation2 + $0x8] sm:$0xff] %v231
    %277 = vst [vmem:[#allocation2 + $0x10] sm:$0xff] %v235
    %278 = vst [vmem:[#allocation2 + $0x18] sm:$0xff] %v237
    %279 = vst [vmem:[#allocation2 + $0x20] sm:$0xff] %v241
    %280 = vst [vmem:[#allocation2 + $0x28] sm:$0xff] %v243
    %281 = vst [vmem:[#allocation2 + $0x30] sm:$0xff] %v247
    %282 = vst [vmem:[#allocation2 + $0x38] sm:$0xff] %v249
    %283 = vst [vmem:[#allocation2 + $0x40] sm:$0xff] %v253
    %284 = vst [vmem:[#allocation2 + $0x48] sm:$0xff] %v255
    %285 = vst [vmem:[#allocation2 + $0x50] sm:$0xff] %v259
    %286 = vst [vmem:[#allocation2 + $0x58] sm:$0xff] %v261
    %287 = vst [vmem:[#allocation2 + $0x60] sm:$0xff] %v265
    %288 = vst [vmem:[#allocation2 + $0x68] sm:$0xff] %v267
    %289 = vst [vmem:[#allocation2 + $0x70] sm:$0xff] %v271
    %290 = vst [vmem:[#allocation2 + $0x78] sm:$0xff] %v273
    %v291 = vld [vmem:[%s4] sm:$0xff]
    %v292 = vld [vmem:[%s4 + $0x8] sm:$0xff]
    %v293 = vld [vmem:[%s4 + $0x10] sm:$0xff]
    %v294 = vld [vmem:[%s4 + $0x18] sm:$0xff]
    %v295 = vld [vmem:[%s4 + $0x20] sm:$0xff]
    %v296 = vld [vmem:[%s4 + $0x28] sm:$0xff]
    %v297 = vld [vmem:[%s4 + $0x30] sm:$0xff]
    %v298 = vld [vmem:[%s4 + $0x38] sm:$0xff]
    %v299 = vld [vmem:[%s4 + $0x40] sm:$0xff]
    %v300 = vld [vmem:[%s4 + $0x48] sm:$0xff]
    %v301 = vld [vmem:[%s4 + $0x50] sm:$0xff]
    %v302 = vld [vmem:[%s4 + $0x58] sm:$0xff]
    %v303 = vld [vmem:[%s4 + $0x60] sm:$0xff]
    %v304 = vld [vmem:[%s4 + $0x68] sm:$0xff]
    %v305 = vld [vmem:[%s4 + $0x70] sm:$0xff]
    %v306 = vld [vmem:[%s4 + $0x78] sm:$0xff]
    %v307 = vld [vmem:[#allocation2] sm:$0xff]
    %v308 = vld [vmem:[#allocation2 + $0x78] sm:$0xff]
    %v309 = vxor.u32 %v307, 2147483648
    %v310 = vmul.f32 %v309, 1.442695
    %v311 = vpow.pop %v310
    %v312 = vadd.f32 %v311, 1.0
    %v313 = vrcp.pop %v312
    %v314 = vmul.f32 1.0, %v313
    %v315 = vtanh.pop %v307
    %v316 = vmul.f32 %v314, 0.0
    %318 = vrot.lane.b32.xlu0 %v315, 32
    %v319 = vpop.permute.xlu0 %318
    %v321 = vmul.f32 %v314, %v319
    %323 = vrot.lane.b32.xlu0 %v321, 32
    %v324 = vpop.permute.xlu0 %323
    %v326 = vadd.f32 %v316, %v324
    %v327 = vtanh.pop %v326
    %329 = vrot.lane.b32.xlu0 %v327, 32
    %v330 = vpop.permute.xlu0 %329
    %v332 = vmul.f32 %v314, %v330
    %v333 = vxor.u32 %v308, 2147483648
    %v334 = vmul.f32 %v333, 1.442695
    %v335 = vpow.pop %v334
    %v336 = vadd.f32 %v335, 1.0
    %v337 = vrcp.pop %v336
    %v338 = vmul.f32 1.0, %v337
    %v339 = vtanh.pop %v308
    %v340 = vmul.f32 %v338, 0.0
    %342 = vrot.lane.b32.xlu0 %v339, 32
    %v343 = vpop.permute.xlu0 %342
    %v345 = vmul.f32 %v338, %v343
    %347 = vrot.lane.b32.xlu0 %v345, 32
    %v348 = vpop.permute.xlu0 %347
    %v350 = vadd.f32 %v340, %v348
    %v351 = vtanh.pop %v350
    %353 = vrot.lane.b32.xlu0 %v351, 32
    %v354 = vpop.permute.xlu0 %353
    %v356 = vmul.f32 %v338, %v354
    %358 = vrot.lane.b32.xlu0 %v332, 64
    %v359 = vpop.permute.xlu0 %358
    %362 = vrot.lane.b32.xlu0 %v356, 96
    %v363 = vpop.permute.xlu0 %362
    %vm365 = vcmask 261120
    %v366 = vsel %vm365, %v359, %v363
    %s367 = smul.u32 1, 2
    %s368 = smul.addr %s367, 8
    %s369 = scalar_lea.vmem [#allocation2], %s368
    %v370 = vld [vmem:[%s369] sm:$0xff]
    %v371 = vld [vmem:[%s369 + $0x8] sm:$0xff]
    %s372 = smul.u32 6, 2
    %s373 = smul.addr %s372, 8
    %s374 = scalar_lea.vmem [#allocation2], %s373
    %v375 = vld [vmem:[%s374] sm:$0xff]
    %v376 = vld [vmem:[%s374 + $0x8] sm:$0xff]
    %v378 = vsel %vm137, %v366, 0
    %380 = vmatprep.subr.mxu0 0.0
    %381 = vmatpush1.msra.mxu0 0.0
    %382 = vmatprep.subr.mxu0 0.0
    %383 = vmatpush1.msra.mxu0 0.0
    %384 = vmatprep.subr.mxu0 0.0
    %385 = vmatpush1.msra.mxu0 0.0
    %386 = vmatprep.subr.mxu0 0.0
    %387 = vmatpush1.msra.mxu0 0.0
    %388 = vmatprep.subr.mxu0 0.0
    %389 = vmatpush1.msra.mxu0 0.0
    %390 = vmatprep.subr.mxu0 0.0
    %391 = vmatpush1.msra.mxu0 0.0
    %392 = vmatprep.subr.mxu0 0.0
    %393 = vmatpush1.msra.mxu0 0.0
    %394 = vmatprep.subr.mxu0 0.0
    %395 = vmatpush1.msra.mxu0 0.0
    %396 = vmatprep.subr.mxu0 %v306
    %397 = vmatpush1.msra.mxu0 %v305
    %398 = vmatprep.subr.mxu0 %v304
    %399 = vmatpush1.msra.mxu0 %v303
    %400 = vmatprep.subr.mxu0 %v302
    %401 = vmatpush1.msra.mxu0 %v301
    %402 = vmatprep.subr.mxu0 %v300
    %403 = vmatpush1.msra.mxu0 %v299
    %404 = vmatprep.subr.mxu0 %v298
    %405 = vmatpush1.msra.mxu0 %v297
    %406 = vmatprep.subr.mxu0 %v296
    %407 = vmatpush1.msra.mxu0 %v295
    %408 = vmatprep.subr.mxu0 %v294
    %409 = vmatpush1.msra.mxu0 %v293
    %410 = vmatprep.subr.mxu0 %v292
    %411 = vmatpush1.msra.mxu0 %v291
    %412 = vmatprep.subr.mxu0 0.0
    %413 = vmatpush2.msra.mxu0 0.0
    %414 = vmatprep.subr.mxu0 0.0
    %415 = vmatpush2.msra.mxu0 0.0
    %416 = vmatprep.subr.mxu0 0.0
    %417 = vmatpush2.msra.mxu0 0.0
    %418 = vmatprep.subr.mxu0 0.0
    %419 = vmatpush2.msra.mxu0 0.0
    %420 = vmatprep.subr.mxu0 0.0
    %421 = vmatpush2.msra.mxu0 0.0
    %422 = vmatprep.subr.mxu0 0.0
    %423 = vmatpush2.msra.mxu0 0.0
    %424 = vmatprep.subr.mxu0 0.0
    %425 = vmatpush2.msra.mxu0 0.0
    %426 = vmatprep.subr.mxu0 0.0
    %427 = vmatpush2.msra.mxu0 0.0
    %428 = vmatprep.subr.mxu0 0.0
    %429 = vmatpush2.msra.mxu0 0.0
    %430 = vmatprep.subr.mxu0 0.0
    %431 = vmatpush2.msra.mxu0 0.0
    %432 = vmatprep.subr.mxu0 0.0
    %433 = vmatpush2.msra.mxu0 0.0
    %434 = vmatprep.subr.mxu0 0.0
    %435 = vmatpush2.msra.mxu0 0.0
    %436 = vmatprep.subr.mxu0 0.0
    %437 = vmatpush2.msra.mxu0 0.0
    %438 = vmatprep.subr.mxu0 0.0
    %439 = vmatpush2.msra.mxu0 0.0
    %440 = vmatprep.subr.mxu0 0.0
    %441 = vmatpush2.msra.mxu0 0.0
    %442 = vmatprep.subr.mxu0 0.0
    %443 = vmatpush2.msra.mxu0 0.0
    %444 = vmatprep.mubr.f32.mxu0 0.0
    %445 = vmatmul.mubr.f32.gmra.mxu0 %v378
    %v446 = vpop.f32.mrf.mxu0
    %v447 = vadd.f32 0.0, %v446
    %v448 = vpop.f32.mrf.mxu0
    %v449 = vadd.f32 0.0, %v448
    %450 = vdwg.mxu0
    %v451 = vadd.f32 %v370, %v447
    %v452 = vadd.f32 %v376, %v449
    %v453 = vxor.u32 %v451, 2147483648
    %v454 = vmul.f32 %v453, 1.442695
    %v455 = vpow.pop %v454
    %v456 = vadd.f32 %v455, 1.0
    %v457 = vrcp.pop %v456
    %v458 = vmul.f32 1.0, %v457
    %v459 = vtanh.pop %v451
    %v460 = vmul.f32 %v458, %v326
    %462 = vrot.lane.b32.xlu0 %v459, 32
    %v463 = vpop.permute.xlu0 %462
    %v465 = vmul.f32 %v458, %v463
    %467 = vrot.lane.b32.xlu0 %v465, 32
    %v468 = vpop.permute.xlu0 %467
    %v470 = vadd.f32 %v460, %v468
    %v471 = vtanh.pop %v470
    %473 = vrot.lane.b32.xlu0 %v471, 32
    %v474 = vpop.permute.xlu0 %473
    %v476 = vmul.f32 %v458, %v474
    %v477 = vxor.u32 %v452, 2147483648
    %v478 = vmul.f32 %v477, 1.442695
    %v479 = vpow.pop %v478
    %v480 = vadd.f32 %v479, 1.0
    %v481 = vrcp.pop %v480
    %v482 = vmul.f32 1.0, %v481
    %v483 = vtanh.pop %v452
    %v484 = vmul.f32 %v482, %v350
    %486 = vrot.lane.b32.xlu0 %v483, 32
    %v487 = vpop.permute.xlu0 %486
    %v489 = vmul.f32 %v482, %v487
    %491 = vrot.lane.b32.xlu0 %v489, 32
    %v492 = vpop.permute.xlu0 %491
    %v494 = vadd.f32 %v484, %v492
    %v495 = vtanh.pop %v494
    %497 = vrot.lane.b32.xlu0 %v495, 32
    %v498 = vpop.permute.xlu0 %497
    %v500 = vmul.f32 %v482, %v498
    %502 = vrot.lane.b32.xlu0 %v476, 64
    %v503 = vpop.permute.xlu0 %502
    %506 = vrot.lane.b32.xlu0 %v500, 96
    %v507 = vpop.permute.xlu0 %506
    %v509 = vsel %vm365, %v503, %v507
    %s510 = smul.u32 2, 2
    %s511 = smul.addr %s510, 8
    %s512 = scalar_lea.vmem [#allocation2], %s511
    %v513 = vld [vmem:[%s512] sm:$0xff]
    %v514 = vld [vmem:[%s512 + $0x8] sm:$0xff]
    %s515 = smul.u32 5, 2
    %s516 = smul.addr %s515, 8
    %s517 = scalar_lea.vmem [#allocation2], %s516
    %v518 = vld [vmem:[%s517] sm:$0xff]
    %v519 = vld [vmem:[%s517 + $0x8] sm:$0xff]
    %v521 = vsel %vm137, %v509, 0
    %523 = vmatprep.subr.mxu0 0.0
    %524 = vmatpush1.msra.mxu0 0.0
    %525 = vmatprep.subr.mxu0 0.0
    %526 = vmatpush1.msra.mxu0 0.0
    %527 = vmatprep.subr.mxu0 0.0
    %528 = vmatpush1.msra.mxu0 0.0
    %529 = vmatprep.subr.mxu0 0.0
    %530 = vmatpush1.msra.mxu0 0.0
    %531 = vmatprep.subr.mxu0 0.0
    %532 = vmatpush1.msra.mxu0 0.0
    %533 = vmatprep.subr.mxu0 0.0
    %534 = vmatpush1.msra.mxu0 0.0
    %535 = vmatprep.subr.mxu0 0.0
    %536 = vmatpush1.msra.mxu0 0.0
    %537 = vmatprep.subr.mxu0 0.0
    %538 = vmatpush1.msra.mxu0 0.0
    %539 = vmatprep.subr.mxu0 %v306
    %540 = vmatpush1.msra.mxu0 %v305
    %541 = vmatprep.subr.mxu0 %v304
    %542 = vmatpush1.msra.mxu0 %v303
    %543 = vmatprep.subr.mxu0 %v302
    %544 = vmatpush1.msra.mxu0 %v301
    %545 = vmatprep.subr.mxu0 %v300
    %546 = vmatpush1.msra.mxu0 %v299
    %547 = vmatprep.subr.mxu0 %v298
    %548 = vmatpush1.msra.mxu0 %v297
    %549 = vmatprep.subr.mxu0 %v296
    %550 = vmatpush1.msra.mxu0 %v295
    %551 = vmatprep.subr.mxu0 %v294
    %552 = vmatpush1.msra.mxu0 %v293
    %553 = vmatprep.subr.mxu0 %v292
    %554 = vmatpush1.msra.mxu0 %v291
    %555 = vmatprep.subr.mxu0 0.0
    %556 = vmatpush2.msra.mxu0 0.0
    %557 = vmatprep.subr.mxu0 0.0
    %558 = vmatpush2.msra.mxu0 0.0
    %559 = vmatprep.subr.mxu0 0.0
    %560 = vmatpush2.msra.mxu0 0.0
    %561 = vmatprep.subr.mxu0 0.0
    %562 = vmatpush2.msra.mxu0 0.0
    %563 = vmatprep.subr.mxu0 0.0
    %564 = vmatpush2.msra.mxu0 0.0
    %565 = vmatprep.subr.mxu0 0.0
    %566 = vmatpush2.msra.mxu0 0.0
    %567 = vmatprep.subr.mxu0 0.0
    %568 = vmatpush2.msra.mxu0 0.0
    %569 = vmatprep.subr.mxu0 0.0
    %570 = vmatpush2.msra.mxu0 0.0
    %571 = vmatprep.subr.mxu0 0.0
    %572 = vmatpush2.msra.mxu0 0.0
    %573 = vmatprep.subr.mxu0 0.0
    %574 = vmatpush2.msra.mxu0 0.0
    %575 = vmatprep.subr.mxu0 0.0
    %576 = vmatpush2.msra.mxu0 0.0
    %577 = vmatprep.subr.mxu0 0.0
    %578 = vmatpush2.msra.mxu0 0.0
    %579 = vmatprep.subr.mxu0 0.0
    %580 = vmatpush2.msra.mxu0 0.0
    %581 = vmatprep.subr.mxu0 0.0
    %582 = vmatpush2.msra.mxu0 0.0
    %583 = vmatprep.subr.mxu0 0.0
    %584 = vmatpush2.msra.mxu0 0.0
    %585 = vmatprep.subr.mxu0 0.0
    %586 = vmatpush2.msra.mxu0 0.0
    %587 = vmatprep.mubr.f32.mxu0 0.0
    %588 = vmatmul.mubr.f32.gmra.mxu0 %v521
    %v589 = vpop.f32.mrf.mxu0
    %v590 = vadd.f32 0.0, %v589
    %v591 = vpop.f32.mrf.mxu0
    %v592 = vadd.f32 0.0, %v591
    %593 = vdwg.mxu0
    %v594 = vadd.f32 %v513, %v590
    %v595 = vadd.f32 %v519, %v592
    %v596 = vxor.u32 %v594, 2147483648
    %v597 = vmul.f32 %v596, 1.442695
    %v598 = vpow.pop %v597
    %v599 = vadd.f32 %v598, 1.0
    %v600 = vrcp.pop %v599
    %v601 = vmul.f32 1.0, %v600
    %v602 = vtanh.pop %v594
    %v603 = vmul.f32 %v601, %v470
    %605 = vrot.lane.b32.xlu0 %v602, 32
    %v606 = vpop.permute.xlu0 %605
    %v608 = vmul.f32 %v601, %v606
    %610 = vrot.lane.b32.xlu0 %v608, 32
    %v611 = vpop.permute.xlu0 %610
    %v613 = vadd.f32 %v603, %v611
    %v614 = vtanh.pop %v613
    %616 = vrot.lane.b32.xlu0 %v614, 32
    %v617 = vpop.permute.xlu0 %616
    %v619 = vmul.f32 %v601, %v617
    %v620 = vxor.u32 %v595, 2147483648
    %v621 = vmul.f32 %v620, 1.442695
    %v622 = vpow.pop %v621
    %v623 = vadd.f32 %v622, 1.0
    %v624 = vrcp.pop %v623
    %v625 = vmul.f32 1.0, %v624
    %v626 = vtanh.pop %v595
    %v627 = vmul.f32 %v625, %v494
    %629 = vrot.lane.b32.xlu0 %v626, 32
    %v630 = vpop.permute.xlu0 %629
    %v632 = vmul.f32 %v625, %v630
    %634 = vrot.lane.b32.xlu0 %v632, 32
    %v635 = vpop.permute.xlu0 %634
    %v637 = vadd.f32 %v627, %v635
    %v638 = vtanh.pop %v637
    %640 = vrot.lane.b32.xlu0 %v638, 32
    %v641 = vpop.permute.xlu0 %640
    %v643 = vmul.f32 %v625, %v641
    %645 = vrot.lane.b32.xlu0 %v619, 64
    %v646 = vpop.permute.xlu0 %645
    %649 = vrot.lane.b32.xlu0 %v643, 96
    %v650 = vpop.permute.xlu0 %649
    %v652 = vsel %vm365, %v646, %v650
    %s653 = smul.u32 3, 2
    %s654 = smul.addr %s653, 8
    %s655 = scalar_lea.vmem [#allocation2], %s654
    %v656 = vld [vmem:[%s655] sm:$0xff]
    %v657 = vld [vmem:[%s655 + $0x8] sm:$0xff]
    %s658 = smul.u32 4, 2
    %s659 = smul.addr %s658, 8
    %s660 = scalar_lea.vmem [#allocation2], %s659
    %v661 = vld [vmem:[%s660] sm:$0xff]
    %v662 = vld [vmem:[%s660 + $0x8] sm:$0xff]
    %v664 = vsel %vm137, %v652, 0
    %666 = vmatprep.subr.mxu0 0.0
    %667 = vmatpush1.msra.mxu0 0.0
    %668 = vmatprep.subr.mxu0 0.0
    %669 = vmatpush1.msra.mxu0 0.0
    %670 = vmatprep.subr.mxu0 0.0
    %671 = vmatpush1.msra.mxu0 0.0
    %672 = vmatprep.subr.mxu0 0.0
    %673 = vmatpush1.msra.mxu0 0.0
    %674 = vmatprep.subr.mxu0 0.0
    %675 = vmatpush1.msra.mxu0 0.0
    %676 = vmatprep.subr.mxu0 0.0
    %677 = vmatpush1.msra.mxu0 0.0
    %678 = vmatprep.subr.mxu0 0.0
    %679 = vmatpush1.msra.mxu0 0.0
    %680 = vmatprep.subr.mxu0 0.0
    %681 = vmatpush1.msra.mxu0 0.0
    %682 = vmatprep.subr.mxu0 %v306
    %683 = vmatpush1.msra.mxu0 %v305
    %684 = vmatprep.subr.mxu0 %v304
    %685 = vmatpush1.msra.mxu0 %v303
    %686 = vmatprep.subr.mxu0 %v302
    %687 = vmatpush1.msra.mxu0 %v301
    %688 = vmatprep.subr.mxu0 %v300
    %689 = vmatpush1.msra.mxu0 %v299
    %690 = vmatprep.subr.mxu0 %v298
    %691 = vmatpush1.msra.mxu0 %v297
    %692 = vmatprep.subr.mxu0 %v296
    %693 = vmatpush1.msra.mxu0 %v295
    %694 = vmatprep.subr.mxu0 %v294
    %695 = vmatpush1.msra.mxu0 %v293
    %696 = vmatprep.subr.mxu0 %v292
    %697 = vmatpush1.msra.mxu0 %v291
    %698 = vmatprep.subr.mxu0 0.0
    %699 = vmatpush2.msra.mxu0 0.0
    %700 = vmatprep.subr.mxu0 0.0
    %701 = vmatpush2.msra.mxu0 0.0
    %702 = vmatprep.subr.mxu0 0.0
    %703 = vmatpush2.msra.mxu0 0.0
    %704 = vmatprep.subr.mxu0 0.0
    %705 = vmatpush2.msra.mxu0 0.0
    %706 = vmatprep.subr.mxu0 0.0
    %707 = vmatpush2.msra.mxu0 0.0
    %708 = vmatprep.subr.mxu0 0.0
    %709 = vmatpush2.msra.mxu0 0.0
    %710 = vmatprep.subr.mxu0 0.0
    %711 = vmatpush2.msra.mxu0 0.0
    %712 = vmatprep.subr.mxu0 0.0
    %713 = vmatpush2.msra.mxu0 0.0
    %714 = vmatprep.subr.mxu0 0.0
    %715 = vmatpush2.msra.mxu0 0.0
    %716 = vmatprep.subr.mxu0 0.0
    %717 = vmatpush2.msra.mxu0 0.0
    %718 = vmatprep.subr.mxu0 0.0
    %719 = vmatpush2.msra.mxu0 0.0
    %720 = vmatprep.subr.mxu0 0.0
    %721 = vmatpush2.msra.mxu0 0.0
    %722 = vmatprep.subr.mxu0 0.0
    %723 = vmatpush2.msra.mxu0 0.0
    %724 = vmatprep.subr.mxu0 0.0
    %725 = vmatpush2.msra.mxu0 0.0
    %726 = vmatprep.subr.mxu0 0.0
    %727 = vmatpush2.msra.mxu0 0.0
    %728 = vmatprep.subr.mxu0 0.0
    %729 = vmatpush2.msra.mxu0 0.0
    %730 = vmatprep.mubr.f32.mxu0 0.0
    %731 = vmatmul.mubr.f32.gmra.mxu0 %v664
    %v732 = vpop.f32.mrf.mxu0
    %v733 = vadd.f32 0.0, %v732
    %v734 = vpop.f32.mrf.mxu0
    %v735 = vadd.f32 0.0, %v734
    %736 = vdwg.mxu0
    %v737 = vadd.f32 %v656, %v733
    %v738 = vadd.f32 %v662, %v735
    %v739 = vxor.u32 %v737, 2147483648
    %v740 = vmul.f32 %v739, 1.442695
    %v741 = vpow.pop %v740
    %v742 = vadd.f32 %v741, 1.0
    %v743 = vrcp.pop %v742
    %v744 = vmul.f32 1.0, %v743
    %v745 = vtanh.pop %v737
    %v746 = vmul.f32 %v744, %v613
    %748 = vrot.lane.b32.xlu0 %v745, 32
    %v749 = vpop.permute.xlu0 %748
    %v751 = vmul.f32 %v744, %v749
    %753 = vrot.lane.b32.xlu0 %v751, 32
    %v754 = vpop.permute.xlu0 %753
    %v756 = vadd.f32 %v746, %v754
    %v757 = vtanh.pop %v756
    %759 = vrot.lane.b32.xlu0 %v757, 32
    %v760 = vpop.permute.xlu0 %759
    %v762 = vmul.f32 %v744, %v760
    %v763 = vxor.u32 %v738, 2147483648
    %v764 = vmul.f32 %v763, 1.442695
    %v765 = vpow.pop %v764
    %v766 = vadd.f32 %v765, 1.0
    %v767 = vrcp.pop %v766
    %v768 = vmul.f32 1.0, %v767
    %v769 = vtanh.pop %v738
    %v770 = vmul.f32 %v768, %v637
    %772 = vrot.lane.b32.xlu0 %v769, 32
    %v773 = vpop.permute.xlu0 %772
    %v775 = vmul.f32 %v768, %v773
    %777 = vrot.lane.b32.xlu0 %v775, 32
    %v778 = vpop.permute.xlu0 %777
    %v780 = vadd.f32 %v770, %v778
    %v781 = vtanh.pop %v780
    %783 = vrot.lane.b32.xlu0 %v781, 32
    %v784 = vpop.permute.xlu0 %783
    %v786 = vmul.f32 %v768, %v784
    %788 = vrot.lane.b32.xlu0 %v762, 64
    %v789 = vpop.permute.xlu0 %788
    %792 = vrot.lane.b32.xlu0 %v786, 96
    %v793 = vpop.permute.xlu0 %792
    %v795 = vsel %vm365, %v789, %v793
    %v797 = vsel %vm137, %v795, 0
    %799 = vmatprep.subr.mxu0 0.0
    %800 = vmatpush1.msra.mxu0 0.0
    %801 = vmatprep.subr.mxu0 0.0
    %802 = vmatpush1.msra.mxu0 0.0
    %803 = vmatprep.subr.mxu0 0.0
    %804 = vmatpush1.msra.mxu0 0.0
    %805 = vmatprep.subr.mxu0 0.0
    %806 = vmatpush1.msra.mxu0 0.0
    %807 = vmatprep.subr.mxu0 0.0
    %808 = vmatpush1.msra.mxu0 0.0
    %809 = vmatprep.subr.mxu0 0.0
    %810 = vmatpush1.msra.mxu0 0.0
    %811 = vmatprep.subr.mxu0 0.0
    %812 = vmatpush1.msra.mxu0 0.0
    %813 = vmatprep.subr.mxu0 0.0
    %814 = vmatpush1.msra.mxu0 0.0
    %815 = vmatprep.subr.mxu0 %v306
    %816 = vmatpush1.msra.mxu0 %v305
    %817 = vmatprep.subr.mxu0 %v304
    %818 = vmatpush1.msra.mxu0 %v303
    %819 = vmatprep.subr.mxu0 %v302
    %820 = vmatpush1.msra.mxu0 %v301
    %821 = vmatprep.subr.mxu0 %v300
    %822 = vmatpush1.msra.mxu0 %v299
    %823 = vmatprep.subr.mxu0 %v298
    %824 = vmatpush1.msra.mxu0 %v297
    %825 = vmatprep.subr.mxu0 %v296
    %826 = vmatpush1.msra.mxu0 %v295
    %827 = vmatprep.subr.mxu0 %v294
    %828 = vmatpush1.msra.mxu0 %v293
    %829 = vmatprep.subr.mxu0 %v292
    %830 = vmatpush1.msra.mxu0 %v291
    %831 = vmatprep.subr.mxu0 0.0
    %832 = vmatpush2.msra.mxu0 0.0
    %833 = vmatprep.subr.mxu0 0.0
    %834 = vmatpush2.msra.mxu0 0.0
    %835 = vmatprep.subr.mxu0 0.0
    %836 = vmatpush2.msra.mxu0 0.0
    %837 = vmatprep.subr.mxu0 0.0
    %838 = vmatpush2.msra.mxu0 0.0
    %839 = vmatprep.subr.mxu0 0.0
    %840 = vmatpush2.msra.mxu0 0.0
    %841 = vmatprep.subr.mxu0 0.0
    %842 = vmatpush2.msra.mxu0 0.0
    %843 = vmatprep.subr.mxu0 0.0
    %844 = vmatpush2.msra.mxu0 0.0
    %845 = vmatprep.subr.mxu0 0.0
    %846 = vmatpush2.msra.mxu0 0.0
    %847 = vmatprep.subr.mxu0 0.0
    %848 = vmatpush2.msra.mxu0 0.0
    %849 = vmatprep.subr.mxu0 0.0
    %850 = vmatpush2.msra.mxu0 0.0
    %851 = vmatprep.subr.mxu0 0.0
    %852 = vmatpush2.msra.mxu0 0.0
    %853 = vmatprep.subr.mxu0 0.0
    %854 = vmatpush2.msra.mxu0 0.0
    %855 = vmatprep.subr.mxu0 0.0
    %856 = vmatpush2.msra.mxu0 0.0
    %857 = vmatprep.subr.mxu0 0.0
    %858 = vmatpush2.msra.mxu0 0.0
    %859 = vmatprep.subr.mxu0 0.0
    %860 = vmatpush2.msra.mxu0 0.0
    %861 = vmatprep.subr.mxu0 0.0
    %862 = vmatpush2.msra.mxu0 0.0
    %863 = vmatprep.mubr.f32.mxu0 0.0
    %864 = vmatmul.mubr.f32.gmra.mxu0 %v797
    %v865 = vpop.f32.mrf.mxu0
    %v866 = vadd.f32 0.0, %v865
    %v867 = vpop.f32.mrf.mxu0
    %v868 = vadd.f32 0.0, %v867
    %869 = vdwg.mxu0
    %v870 = vadd.f32 %v661, %v866
    %v871 = vadd.f32 %v657, %v868
    %v872 = vxor.u32 %v870, 2147483648
    %v873 = vmul.f32 %v872, 1.442695
    %v874 = vpow.pop %v873
    %v875 = vadd.f32 %v874, 1.0
    %v876 = vrcp.pop %v875
    %v877 = vmul.f32 1.0, %v876
    %v878 = vtanh.pop %v870
    %v879 = vmul.f32 %v877, %v756
    %881 = vrot.lane.b32.xlu0 %v878, 32
    %v882 = vpop.permute.xlu0 %881
    %v884 = vmul.f32 %v877, %v882
    %886 = vrot.lane.b32.xlu0 %v884, 32
    %v887 = vpop.permute.xlu0 %886
    %v889 = vadd.f32 %v879, %v887
    %v890 = vtanh.pop %v889
    %892 = vrot.lane.b32.xlu0 %v890, 32
    %v893 = vpop.permute.xlu0 %892
    %v895 = vmul.f32 %v877, %v893
    %v896 = vxor.u32 %v871, 2147483648
    %v897 = vmul.f32 %v896, 1.442695
    %v898 = vpow.pop %v897
    %v899 = vadd.f32 %v898, 1.0
    %v900 = vrcp.pop %v899
    %v901 = vmul.f32 1.0, %v900
    %v902 = vtanh.pop %v871
    %v903 = vmul.f32 %v901, %v780
    %905 = vrot.lane.b32.xlu0 %v902, 32
    %v906 = vpop.permute.xlu0 %905
    %v908 = vmul.f32 %v901, %v906
    %910 = vrot.lane.b32.xlu0 %v908, 32
    %v911 = vpop.permute.xlu0 %910
    %v913 = vadd.f32 %v903, %v911
    %v914 = vtanh.pop %v913
    %916 = vrot.lane.b32.xlu0 %v914, 32
    %v917 = vpop.permute.xlu0 %916
    %v919 = vmul.f32 %v901, %v917
    %921 = vrot.lane.b32.xlu0 %v895, 64
    %v922 = vpop.permute.xlu0 %921
    %925 = vrot.lane.b32.xlu0 %v919, 96
    %v926 = vpop.permute.xlu0 %925
    %v928 = vsel %vm365, %v922, %v926
    %v930 = vsel %vm137, %v928, 0
    %932 = vmatprep.subr.mxu0 0.0
    %933 = vmatpush1.msra.mxu0 0.0
    %934 = vmatprep.subr.mxu0 0.0
    %935 = vmatpush1.msra.mxu0 0.0
    %936 = vmatprep.subr.mxu0 0.0
    %937 = vmatpush1.msra.mxu0 0.0
    %938 = vmatprep.subr.mxu0 0.0
    %939 = vmatpush1.msra.mxu0 0.0
    %940 = vmatprep.subr.mxu0 0.0
    %941 = vmatpush1.msra.mxu0 0.0
    %942 = vmatprep.subr.mxu0 0.0
    %943 = vmatpush1.msra.mxu0 0.0
    %944 = vmatprep.subr.mxu0 0.0
    %945 = vmatpush1.msra.mxu0 0.0
    %946 = vmatprep.subr.mxu0 0.0
    %947 = vmatpush1.msra.mxu0 0.0
    %948 = vmatprep.subr.mxu0 %v306
    %949 = vmatpush1.msra.mxu0 %v305
    %950 = vmatprep.subr.mxu0 %v304
    %951 = vmatpush1.msra.mxu0 %v303
    %952 = vmatprep.subr.mxu0 %v302
    %953 = vmatpush1.msra.mxu0 %v301
    %954 = vmatprep.subr.mxu0 %v300
    %955 = vmatpush1.msra.mxu0 %v299
    %956 = vmatprep.subr.mxu0 %v298
    %957 = vmatpush1.msra.mxu0 %v297
    %958 = vmatprep.subr.mxu0 %v296
    %959 = vmatpush1.msra.mxu0 %v295
    %960 = vmatprep.subr.mxu0 %v294
    %961 = vmatpush1.msra.mxu0 %v293
    %962 = vmatprep.subr.mxu0 %v292
    %963 = vmatpush1.msra.mxu0 %v291
    %964 = vmatprep.subr.mxu0 0.0
    %965 = vmatpush2.msra.mxu0 0.0
    %966 = vmatprep.subr.mxu0 0.0
    %967 = vmatpush2.msra.mxu0 0.0
    %968 = vmatprep.subr.mxu0 0.0
    %969 = vmatpush2.msra.mxu0 0.0
    %970 = vmatprep.subr.mxu0 0.0
    %971 = vmatpush2.msra.mxu0 0.0
    %972 = vmatprep.subr.mxu0 0.0
    %973 = vmatpush2.msra.mxu0 0.0
    %974 = vmatprep.subr.mxu0 0.0
    %975 = vmatpush2.msra.mxu0 0.0
    %976 = vmatprep.subr.mxu0 0.0
    %977 = vmatpush2.msra.mxu0 0.0
    %978 = vmatprep.subr.mxu0 0.0
    %979 = vmatpush2.msra.mxu0 0.0
    %980 = vmatprep.subr.mxu0 0.0
    %981 = vmatpush2.msra.mxu0 0.0
    %982 = vmatprep.subr.mxu0 0.0
    %983 = vmatpush2.msra.mxu0 0.0
    %984 = vmatprep.subr.mxu0 0.0
    %985 = vmatpush2.msra.mxu0 0.0
    %986 = vmatprep.subr.mxu0 0.0
    %987 = vmatpush2.msra.mxu0 0.0
    %988 = vmatprep.subr.mxu0 0.0
    %989 = vmatpush2.msra.mxu0 0.0
    %990 = vmatprep.subr.mxu0 0.0
    %991 = vmatpush2.msra.mxu0 0.0
    %992 = vmatprep.subr.mxu0 0.0
    %993 = vmatpush2.msra.mxu0 0.0
    %994 = vmatprep.subr.mxu0 0.0
    %995 = vmatpush2.msra.mxu0 0.0
    %996 = vmatprep.mubr.f32.mxu0 0.0
    %997 = vmatmul.mubr.f32.gmra.mxu0 %v930
    %v998 = vpop.f32.mrf.mxu0
    %v999 = vadd.f32 0.0, %v998
    %v1000 = vpop.f32.mrf.mxu0
    %v1001 = vadd.f32 0.0, %v1000
    %1002 = vdwg.mxu0
    %v1003 = vadd.f32 %v518, %v999
    %v1004 = vadd.f32 %v514, %v1001
    %v1005 = vxor.u32 %v1003, 2147483648
    %v1006 = vmul.f32 %v1005, 1.442695
    %v1007 = vpow.pop %v1006
    %v1008 = vadd.f32 %v1007, 1.0
    %v1009 = vrcp.pop %v1008
    %v1010 = vmul.f32 1.0, %v1009
    %v1011 = vtanh.pop %v1003
    %v1012 = vmul.f32 %v1010, %v889
    %1014 = vrot.lane.b32.xlu0 %v1011, 32
    %v1015 = vpop.permute.xlu0 %1014
    %v1017 = vmul.f32 %v1010, %v1015
    %1019 = vrot.lane.b32.xlu0 %v1017, 32
    %v1020 = vpop.permute.xlu0 %1019
    %v1022 = vadd.f32 %v1012, %v1020
    %v1023 = vtanh.pop %v1022
    %1025 = vrot.lane.b32.xlu0 %v1023, 32
    %v1026 = vpop.permute.xlu0 %1025
    %v1028 = vmul.f32 %v1010, %v1026
    %v1029 = vxor.u32 %v1004, 2147483648
    %v1030 = vmul.f32 %v1029, 1.442695
    %v1031 = vpow.pop %v1030
    %v1032 = vadd.f32 %v1031, 1.0
    %v1033 = vrcp.pop %v1032
    %v1034 = vmul.f32 1.0, %v1033
    %v1035 = vtanh.pop %v1004
    %v1036 = vmul.f32 %v1034, %v913
    %1038 = vrot.lane.b32.xlu0 %v1035, 32
    %v1039 = vpop.permute.xlu0 %1038
    %v1041 = vmul.f32 %v1034, %v1039
    %1043 = vrot.lane.b32.xlu0 %v1041, 32
    %v1044 = vpop.permute.xlu0 %1043
    %v1046 = vadd.f32 %v1036, %v1044
    %v1047 = vtanh.pop %v1046
    %1049 = vrot.lane.b32.xlu0 %v1047, 32
    %v1050 = vpop.permute.xlu0 %1049
    %v1052 = vmul.f32 %v1034, %v1050
    %1054 = vrot.lane.b32.xlu0 %v1028, 64
    %v1055 = vpop.permute.xlu0 %1054
    %1058 = vrot.lane.b32.xlu0 %v1052, 96
    %v1059 = vpop.permute.xlu0 %1058
    %v1061 = vsel %vm365, %v1055, %v1059
    %v1063 = vsel %vm137, %v1061, 0
    %1065 = vmatprep.subr.mxu0 0.0
    %1066 = vmatpush1.msra.mxu0 0.0
    %1067 = vmatprep.subr.mxu0 0.0
    %1068 = vmatpush1.msra.mxu0 0.0
    %1069 = vmatprep.subr.mxu0 0.0
    %1070 = vmatpush1.msra.mxu0 0.0
    %1071 = vmatprep.subr.mxu0 0.0
    %1072 = vmatpush1.msra.mxu0 0.0
    %1073 = vmatprep.subr.mxu0 0.0
    %1074 = vmatpush1.msra.mxu0 0.0
    %1075 = vmatprep.subr.mxu0 0.0
    %1076 = vmatpush1.msra.mxu0 0.0
    %1077 = vmatprep.subr.mxu0 0.0
    %1078 = vmatpush1.msra.mxu0 0.0
    %1079 = vmatprep.subr.mxu0 0.0
    %1080 = vmatpush1.msra.mxu0 0.0
    %1081 = vmatprep.subr.mxu0 %v306
    %1082 = vmatpush1.msra.mxu0 %v305
    %1083 = vmatprep.subr.mxu0 %v304
    %1084 = vmatpush1.msra.mxu0 %v303
    %1085 = vmatprep.subr.mxu0 %v302
    %1086 = vmatpush1.msra.mxu0 %v301
    %1087 = vmatprep.subr.mxu0 %v300
    %1088 = vmatpush1.msra.mxu0 %v299
    %1089 = vmatprep.subr.mxu0 %v298
    %1090 = vmatpush1.msra.mxu0 %v297
    %1091 = vmatprep.subr.mxu0 %v296
    %1092 = vmatpush1.msra.mxu0 %v295
    %1093 = vmatprep.subr.mxu0 %v294
    %1094 = vmatpush1.msra.mxu0 %v293
    %1095 = vmatprep.subr.mxu0 %v292
    %1096 = vmatpush1.msra.mxu0 %v291
    %1097 = vmatprep.subr.mxu0 0.0
    %1098 = vmatpush2.msra.mxu0 0.0
    %1099 = vmatprep.subr.mxu0 0.0
    %1100 = vmatpush2.msra.mxu0 0.0
    %1101 = vmatprep.subr.mxu0 0.0
    %1102 = vmatpush2.msra.mxu0 0.0
    %1103 = vmatprep.subr.mxu0 0.0
    %1104 = vmatpush2.msra.mxu0 0.0
    %1105 = vmatprep.subr.mxu0 0.0
    %1106 = vmatpush2.msra.mxu0 0.0
    %1107 = vmatprep.subr.mxu0 0.0
    %1108 = vmatpush2.msra.mxu0 0.0
    %1109 = vmatprep.subr.mxu0 0.0
    %1110 = vmatpush2.msra.mxu0 0.0
    %1111 = vmatprep.subr.mxu0 0.0
    %1112 = vmatpush2.msra.mxu0 0.0
    %1113 = vmatprep.subr.mxu0 0.0
    %1114 = vmatpush2.msra.mxu0 0.0
    %1115 = vmatprep.subr.mxu0 0.0
    %1116 = vmatpush2.msra.mxu0 0.0
    %1117 = vmatprep.subr.mxu0 0.0
    %1118 = vmatpush2.msra.mxu0 0.0
    %1119 = vmatprep.subr.mxu0 0.0
    %1120 = vmatpush2.msra.mxu0 0.0
    %1121 = vmatprep.subr.mxu0 0.0
    %1122 = vmatpush2.msra.mxu0 0.0
    %1123 = vmatprep.subr.mxu0 0.0
    %1124 = vmatpush2.msra.mxu0 0.0
    %1125 = vmatprep.subr.mxu0 0.0
    %1126 = vmatpush2.msra.mxu0 0.0
    %1127 = vmatprep.subr.mxu0 0.0
    %1128 = vmatpush2.msra.mxu0 0.0
    %1129 = vmatprep.mubr.f32.mxu0 0.0
    %1130 = vmatmul.mubr.f32.gmra.mxu0 %v1063
    %v1131 = vpop.f32.mrf.mxu0
    %v1132 = vadd.f32 0.0, %v1131
    %v1133 = vpop.f32.mrf.mxu0
    %v1134 = vadd.f32 0.0, %v1133
    %1135 = vdwg.mxu0
    %v1136 = vadd.f32 %v375, %v1132
    %v1137 = vadd.f32 %v371, %v1134
    %v1138 = vxor.u32 %v1136, 2147483648
    %v1139 = vmul.f32 %v1138, 1.442695
    %v1140 = vpow.pop %v1139
    %v1141 = vadd.f32 %v1140, 1.0
    %v1142 = vrcp.pop %v1141
    %v1143 = vmul.f32 1.0, %v1142
    %v1144 = vtanh.pop %v1136
    %v1145 = vmul.f32 %v1143, %v1022
    %1147 = vrot.lane.b32.xlu0 %v1144, 32
    %v1148 = vpop.permute.xlu0 %1147
    %v1150 = vmul.f32 %v1143, %v1148
    %1152 = vrot.lane.b32.xlu0 %v1150, 32
    %v1153 = vpop.permute.xlu0 %1152
    %v1155 = vadd.f32 %v1145, %v1153
    %v1156 = vtanh.pop %v1155
    %1158 = vrot.lane.b32.xlu0 %v1156, 32
    %v1159 = vpop.permute.xlu0 %1158
    %v1161 = vmul.f32 %v1143, %v1159
    %v1162 = vxor.u32 %v1137, 2147483648
    %v1163 = vmul.f32 %v1162, 1.442695
    %v1164 = vpow.pop %v1163
    %v1165 = vadd.f32 %v1164, 1.0
    %v1166 = vrcp.pop %v1165
    %v1167 = vmul.f32 1.0, %v1166
    %v1168 = vtanh.pop %v1137
    %v1169 = vmul.f32 %v1167, %v1046
    %1171 = vrot.lane.b32.xlu0 %v1168, 32
    %v1172 = vpop.permute.xlu0 %1171
    %v1174 = vmul.f32 %v1167, %v1172
    %1176 = vrot.lane.b32.xlu0 %v1174, 32
    %v1177 = vpop.permute.xlu0 %1176
    %v1179 = vadd.f32 %v1169, %v1177
    %v1180 = vtanh.pop %v1179
    %1182 = vrot.lane.b32.xlu0 %v1180, 32
    %v1183 = vpop.permute.xlu0 %1182
    %v1185 = vmul.f32 %v1167, %v1183
    %1187 = vrot.lane.b32.xlu0 %v1161, 64
    %v1188 = vpop.permute.xlu0 %1187
    %1191 = vrot.lane.b32.xlu0 %v1185, 96
    %v1192 = vpop.permute.xlu0 %1191
    %v1194 = vsel %vm365, %v1188, %v1192
    %s1195 = smul.u32 7, 2
    %s1196 = smul.addr %s1195, 8
    %s1197 = scalar_lea.vmem [#allocation2], %s1196
    %v1198 = vld [vmem:[%s1197] sm:$0xff]
    %s1199 = smul.u32 0, 2
    %s1200 = smul.addr %s1199, 8
    %s1201 = scalar_lea.vmem [#allocation2], %s1200
    %v1202 = vld [vmem:[%s1201 + $0x8] sm:$0xff]
    %v1204 = vsel %vm137, %v1194, 0
    %1206 = vmatprep.subr.mxu0 0.0
    %1207 = vmatpush1.msra.mxu0 0.0
    %1208 = vmatprep.subr.mxu0 0.0
    %1209 = vmatpush1.msra.mxu0 0.0
    %1210 = vmatprep.subr.mxu0 0.0
    %1211 = vmatpush1.msra.mxu0 0.0
    %1212 = vmatprep.subr.mxu0 0.0
    %1213 = vmatpush1.msra.mxu0 0.0
    %1214 = vmatprep.subr.mxu0 0.0
    %1215 = vmatpush1.msra.mxu0 0.0
    %1216 = vmatprep.subr.mxu0 0.0
    %1217 = vmatpush1.msra.mxu0 0.0
    %1218 = vmatprep.subr.mxu0 0.0
    %1219 = vmatpush1.msra.mxu0 0.0
    %1220 = vmatprep.subr.mxu0 0.0
    %1221 = vmatpush1.msra.mxu0 0.0
    %1222 = vmatprep.subr.mxu0 %v306
    %1223 = vmatpush1.msra.mxu0 %v305
    %1224 = vmatprep.subr.mxu0 %v304
    %1225 = vmatpush1.msra.mxu0 %v303
    %1226 = vmatprep.subr.mxu0 %v302
    %1227 = vmatpush1.msra.mxu0 %v301
    %1228 = vmatprep.subr.mxu0 %v300
    %1229 = vmatpush1.msra.mxu0 %v299
    %1230 = vmatprep.subr.mxu0 %v298
    %1231 = vmatpush1.msra.mxu0 %v297
    %1232 = vmatprep.subr.mxu0 %v296
    %1233 = vmatpush1.msra.mxu0 %v295
    %1234 = vmatprep.subr.mxu0 %v294
    %1235 = vmatpush1.msra.mxu0 %v293
    %1236 = vmatprep.subr.mxu0 %v292
    %1237 = vmatpush1.msra.mxu0 %v291
    %1238 = vmatprep.subr.mxu0 0.0
    %1239 = vmatpush2.msra.mxu0 0.0
    %1240 = vmatprep.subr.mxu0 0.0
    %1241 = vmatpush2.msra.mxu0 0.0
    %1242 = vmatprep.subr.mxu0 0.0
    %1243 = vmatpush2.msra.mxu0 0.0
    %1244 = vmatprep.subr.mxu0 0.0
    %1245 = vmatpush2.msra.mxu0 0.0
    %1246 = vmatprep.subr.mxu0 0.0
    %1247 = vmatpush2.msra.mxu0 0.0
    %1248 = vmatprep.subr.mxu0 0.0
    %1249 = vmatpush2.msra.mxu0 0.0
    %1250 = vmatprep.subr.mxu0 0.0
    %1251 = vmatpush2.msra.mxu0 0.0
    %1252 = vmatprep.subr.mxu0 0.0
    %1253 = vmatpush2.msra.mxu0 0.0
    %1254 = vmatprep.subr.mxu0 0.0
    %1255 = vmatpush2.msra.mxu0 0.0
    %1256 = vmatprep.subr.mxu0 0.0
    %1257 = vmatpush2.msra.mxu0 0.0
    %1258 = vmatprep.subr.mxu0 0.0
    %1259 = vmatpush2.msra.mxu0 0.0
    %1260 = vmatprep.subr.mxu0 0.0
    %1261 = vmatpush2.msra.mxu0 0.0
    %1262 = vmatprep.subr.mxu0 0.0
    %1263 = vmatpush2.msra.mxu0 0.0
    %1264 = vmatprep.subr.mxu0 0.0
    %1265 = vmatpush2.msra.mxu0 0.0
    %1266 = vmatprep.subr.mxu0 0.0
    %1267 = vmatpush2.msra.mxu0 0.0
    %1268 = vmatprep.subr.mxu0 0.0
    %1269 = vmatpush2.msra.mxu0 0.0
    %1270 = vmatprep.mubr.f32.mxu0 0.0
    %1271 = vmatmul.mubr.f32.gmra.mxu0 %v1204
    %v1272 = vpop.f32.mrf.mxu0
    %v1273 = vadd.f32 0.0, %v1272
    %v1274 = vpop.f32.mrf.mxu0
    %v1275 = vadd.f32 0.0, %v1274
    %1276 = vdwg.mxu0
    %v1277 = vadd.f32 %v1198, %v1273
    %v1278 = vadd.f32 %v1202, %v1275
    %v1279 = vxor.u32 %v1277, 2147483648
    %v1280 = vmul.f32 %v1279, 1.442695
    %v1281 = vpow.pop %v1280
    %v1282 = vadd.f32 %v1281, 1.0
    %v1283 = vrcp.pop %v1282
    %v1284 = vmul.f32 1.0, %v1283
    %v1285 = vtanh.pop %v1277
    %v1286 = vmul.f32 %v1284, %v1155
    %1288 = vrot.lane.b32.xlu0 %v1285, 32
    %v1289 = vpop.permute.xlu0 %1288
    %v1291 = vmul.f32 %v1284, %v1289
    %1293 = vrot.lane.b32.xlu0 %v1291, 32
    %v1294 = vpop.permute.xlu0 %1293
    %v1296 = vadd.f32 %v1286, %v1294
    %v1297 = vtanh.pop %v1296
    %1299 = vrot.lane.b32.xlu0 %v1297, 32
    %v1300 = vpop.permute.xlu0 %1299
    %v1302 = vmul.f32 %v1284, %v1300
    %v1303 = vxor.u32 %v1278, 2147483648
    %v1304 = vmul.f32 %v1303, 1.442695
    %v1305 = vpow.pop %v1304
    %v1306 = vadd.f32 %v1305, 1.0
    %v1307 = vrcp.pop %v1306
    %v1308 = vmul.f32 1.0, %v1307
    %v1309 = vtanh.pop %v1278
    %v1310 = vmul.f32 %v1308, %v1179
    %1312 = vrot.lane.b32.xlu0 %v1309, 32
    %v1313 = vpop.permute.xlu0 %1312
    %v1315 = vmul.f32 %v1308, %v1313
    %1317 = vrot.lane.b32.xlu0 %v1315, 32
    %v1318 = vpop.permute.xlu0 %1317
    %v1320 = vadd.f32 %v1310, %v1318
    %v1321 = vtanh.pop %v1320
    %1323 = vrot.lane.b32.xlu0 %v1321, 32
    %v1324 = vpop.permute.xlu0 %1323
    %v1326 = vmul.f32 %v1308, %v1324
    %1328 = vrot.lane.b32.xlu0 %v1302, 64
    %v1329 = vpop.permute.xlu0 %1328
    %1332 = vrot.lane.b32.xlu0 %v1326, 96
    %v1333 = vpop.permute.xlu0 %1332
    %v1335 = vsel %vm365, %v1329, %v1333
    %v1336 = vld [vmem:[%s1] sm:$0xff]
    %v1337 = vld [vmem:[%s1 + $0x8] sm:$0xff]
    %v1338 = vld [vmem:[%s1 + $0x10] sm:$0xff]
    %v1339 = vld [vmem:[%s1 + $0x18] sm:$0xff]
    %v1340 = vld [vmem:[%s1 + $0x20] sm:$0xff]
    %v1341 = vld [vmem:[%s1 + $0x28] sm:$0xff]
    %v1342 = vld [vmem:[#allocation9] sm:$0xff]
    %v1343 = vld [vmem:[#allocation9 + $0x8] sm:$0xff]
    %v1344 = vld [vmem:[#allocation9 + $0x10] sm:$0xff]
    %v1345 = vld [vmem:[#allocation9 + $0x18] sm:$0xff]
    %v1346 = vld [vmem:[#allocation9 + $0x20] sm:$0xff]
    %v1347 = vld [vmem:[#allocation9 + $0x28] sm:$0xff]
    %v1348 = vld [vmem:[#allocation9 + $0x30] sm:$0xff]
    %v1349 = vld [vmem:[#allocation9 + $0x38] sm:$0xff]
    %v1350 = vld [vmem:[#allocation9 + $0x40] sm:$0xff]
    %v1351 = vld [vmem:[#allocation9 + $0x48] sm:$0xff]
    %v1352 = vld [vmem:[#allocation9 + $0x50] sm:$0xff]
    %v1353 = vld [vmem:[#allocation9 + $0x58] sm:$0xff]
    %v1354 = vld [vmem:[#allocation9 + $0x60] sm:$0xff]
    %v1355 = vld [vmem:[#allocation9 + $0x68] sm:$0xff]
    %v1356 = vld [vmem:[#allocation9 + $0x70] sm:$0xff]
    %v1357 = vld [vmem:[#allocation9 + $0x78] sm:$0xff]
    %v1358 = vld [vmem:[%s6] sm:$0x3]
    %v1360 = vlaneseq
    %v1361 = vshrl.u32 %v1360, 7
    %v1362 = vsub.s32 0, %v1361
    %v1363 = vrot.slane %v1358, %v1362
    %v1364 = vlaneseq
    %v1365 = vshrl.u32 %v1364, 7
    %v1366 = vsub.s32 1, %v1365
    %v1367 = vrot.slane %v1358, %v1366
    %v1371 = vsel %vm137, %v1336, 0
    %v1374 = vsel %vm137, %v1337, 0
    %v1377 = vsel %vm137, %v1338, 0
    %v1380 = vsel %vm137, %v1339, 0
    %v1383 = vsel %vm137, %v1340, 0
    %v1386 = vsel %vm137, %v1341, 0
    %1388 = vmatprep.subr.mxu0 0.0
    %1389 = vmatpush1.msra.mxu0 0.0
    %1390 = vmatprep.subr.mxu0 0.0
    %1391 = vmatpush1.msra.mxu0 0.0
    %1392 = vmatprep.subr.mxu0 0.0
    %1393 = vmatpush1.msra.mxu0 0.0
    %1394 = vmatprep.subr.mxu0 0.0
    %1395 = vmatpush1.msra.mxu0 0.0
    %1396 = vmatprep.subr.mxu0 0.0
    %1397 = vmatpush1.msra.mxu0 0.0
    %1398 = vmatprep.subr.mxu0 0.0
    %1399 = vmatpush1.msra.mxu0 0.0
    %1400 = vmatprep.subr.mxu0 0.0
    %1401 = vmatpush1.msra.mxu0 0.0
    %1402 = vmatprep.subr.mxu0 0.0
    %1403 = vmatpush1.msra.mxu0 0.0
    %1404 = vmatprep.subr.mxu0 %v1357
    %1405 = vmatpush1.msra.mxu0 %v1356
    %1406 = vmatprep.subr.mxu0 %v1355
    %1407 = vmatpush1.msra.mxu0 %v1354
    %1408 = vmatprep.subr.mxu0 %v1353
    %1409 = vmatpush1.msra.mxu0 %v1352
    %1410 = vmatprep.subr.mxu0 %v1351
    %1411 = vmatpush1.msra.mxu0 %v1350
    %1412 = vmatprep.subr.mxu0 %v1349
    %1413 = vmatpush1.msra.mxu0 %v1348
    %1414 = vmatprep.subr.mxu0 %v1347
    %1415 = vmatpush1.msra.mxu0 %v1346
    %1416 = vmatprep.subr.mxu0 %v1345
    %1417 = vmatpush1.msra.mxu0 %v1344
    %1418 = vmatprep.subr.mxu0 %v1343
    %1419 = vmatpush1.msra.mxu0 %v1342
    %1420 = vmatprep.subr.mxu0 0.0
    %1421 = vmatpush2.msra.mxu0 0.0
    %1422 = vmatprep.subr.mxu0 0.0
    %1423 = vmatpush2.msra.mxu0 0.0
    %1424 = vmatprep.subr.mxu0 0.0
    %1425 = vmatpush2.msra.mxu0 0.0
    %1426 = vmatprep.subr.mxu0 0.0
    %1427 = vmatpush2.msra.mxu0 0.0
    %1428 = vmatprep.subr.mxu0 0.0
    %1429 = vmatpush2.msra.mxu0 0.0
    %1430 = vmatprep.subr.mxu0 0.0
    %1431 = vmatpush2.msra.mxu0 0.0
    %1432 = vmatprep.subr.mxu0 0.0
    %1433 = vmatpush2.msra.mxu0 0.0
    %1434 = vmatprep.subr.mxu0 0.0
    %1435 = vmatpush2.msra.mxu0 0.0
    %1436 = vmatprep.subr.mxu0 0.0
    %1437 = vmatpush2.msra.mxu0 0.0
    %1438 = vmatprep.subr.mxu0 0.0
    %1439 = vmatpush2.msra.mxu0 0.0
    %1440 = vmatprep.subr.mxu0 0.0
    %1441 = vmatpush2.msra.mxu0 0.0
    %1442 = vmatprep.subr.mxu0 0.0
    %1443 = vmatpush2.msra.mxu0 0.0
    %1444 = vmatprep.subr.mxu0 0.0
    %1445 = vmatpush2.msra.mxu0 0.0
    %1446 = vmatprep.subr.mxu0 0.0
    %1447 = vmatpush2.msra.mxu0 0.0
    %1448 = vmatprep.subr.mxu0 0.0
    %1449 = vmatpush2.msra.mxu0 0.0
    %1450 = vmatprep.subr.mxu0 0.0
    %1451 = vmatpush2.msra.mxu0 0.0
    %1452 = vmatprep.mubr.f32.mxu0 0.0
    %1453 = vmatmul.mubr.f32.gmra.mxu0 %v1371
    %v1454 = vpop.f32.mrf.mxu0
    %v1455 = vadd.f32 %v1363, %v1454
    %v1456 = vpop.f32.mrf.mxu0
    %v1457 = vadd.f32 %v1367, %v1456
    %1458 = vmatprep.mubr.f32.mxu0 0.0
    %1459 = vmatmul.mubr.f32.gmra.mxu0 %v1374
    %v1460 = vpop.f32.mrf.mxu0
    %v1461 = vadd.f32 %v1363, %v1460
    %v1462 = vpop.f32.mrf.mxu0
    %v1463 = vadd.f32 %v1367, %v1462
    %1464 = vmatprep.mubr.f32.mxu0 0.0
    %1465 = vmatmul.mubr.f32.gmra.mxu0 %v1377
    %v1466 = vpop.f32.mrf.mxu0
    %v1467 = vadd.f32 %v1363, %v1466
    %v1468 = vpop.f32.mrf.mxu0
    %v1469 = vadd.f32 %v1367, %v1468
    %1470 = vmatprep.mubr.f32.mxu0 0.0
    %1471 = vmatmul.mubr.f32.gmra.mxu0 %v1380
    %v1472 = vpop.f32.mrf.mxu0
    %v1473 = vadd.f32 %v1363, %v1472
    %v1474 = vpop.f32.mrf.mxu0
    %v1475 = vadd.f32 %v1367, %v1474
    %1476 = vmatprep.mubr.f32.mxu0 0.0
    %1477 = vmatmul.mubr.f32.gmra.mxu0 %v1383
    %v1478 = vpop.f32.mrf.mxu0
    %v1479 = vadd.f32 %v1363, %v1478
    %v1480 = vpop.f32.mrf.mxu0
    %v1481 = vadd.f32 %v1367, %v1480
    %1482 = vmatprep.mubr.f32.mxu0 0.0
    %1483 = vmatmul.mubr.f32.gmra.mxu0 %v1386
    %v1484 = vpop.f32.mrf.mxu0
    %v1485 = vadd.f32 %v1363, %v1484
    %v1486 = vpop.f32.mrf.mxu0
    %v1487 = vadd.f32 %v1367, %v1486
    %1488 = vdwg.mxu0
    %1489 = vst [vmem:[#allocation3] sm:$0xff] %v1455
    %1490 = vst [vmem:[#allocation3 + $0x8] sm:$0xff] %v1457
    %1491 = vst [vmem:[#allocation3 + $0x10] sm:$0xff] %v1461
    %1492 = vst [vmem:[#allocation3 + $0x18] sm:$0xff] %v1463
    %1493 = vst [vmem:[#allocation3 + $0x20] sm:$0xff] %v1467
    %1494 = vst [vmem:[#allocation3 + $0x28] sm:$0xff] %v1469
    %1495 = vst [vmem:[#allocation3 + $0x30] sm:$0xff] %v1473
    %1496 = vst [vmem:[#allocation3 + $0x38] sm:$0xff] %v1475
    %1497 = vst [vmem:[#allocation3 + $0x40] sm:$0xff] %v1479
    %1498 = vst [vmem:[#allocation3 + $0x48] sm:$0xff] %v1481
    %1499 = vst [vmem:[#allocation3 + $0x50] sm:$0xff] %v1485
    %1500 = vst [vmem:[#allocation3 + $0x58] sm:$0xff] %v1487
    %v1501 = vld [vmem:[#allocation11] sm:$0xff]
    %v1502 = vld [vmem:[#allocation11 + $0x8] sm:$0xff]
    %v1503 = vld [vmem:[#allocation11 + $0x10] sm:$0xff]
    %v1504 = vld [vmem:[#allocation11 + $0x18] sm:$0xff]
    %v1505 = vld [vmem:[#allocation11 + $0x20] sm:$0xff]
    %v1506 = vld [vmem:[#allocation11 + $0x28] sm:$0xff]
    %v1507 = vld [vmem:[#allocation11 + $0x30] sm:$0xff]
    %v1508 = vld [vmem:[#allocation11 + $0x38] sm:$0xff]
    %v1509 = vld [vmem:[#allocation11 + $0x40] sm:$0xff]
    %v1510 = vld [vmem:[#allocation11 + $0x48] sm:$0xff]
    %v1511 = vld [vmem:[#allocation11 + $0x50] sm:$0xff]
    %v1512 = vld [vmem:[#allocation11 + $0x58] sm:$0xff]
    %v1513 = vld [vmem:[#allocation11 + $0x60] sm:$0xff]
    %v1514 = vld [vmem:[#allocation11 + $0x68] sm:$0xff]
    %v1515 = vld [vmem:[#allocation11 + $0x70] sm:$0xff]
    %v1516 = vld [vmem:[#allocation11 + $0x78] sm:$0xff]
    %v1517 = vsel %vm365, %v1335, %v363
    %v1519 = vsel %vm137, %v1517, 0
    %1521 = vmatprep.subr.mxu0 0.0
    %1522 = vmatpush1.msra.mxu0 0.0
    %1523 = vmatprep.subr.mxu0 0.0
    %1524 = vmatpush1.msra.mxu0 0.0
    %1525 = vmatprep.subr.mxu0 0.0
    %1526 = vmatpush1.msra.mxu0 0.0
    %1527 = vmatprep.subr.mxu0 0.0
    %1528 = vmatpush1.msra.mxu0 0.0
    %1529 = vmatprep.subr.mxu0 0.0
    %1530 = vmatpush1.msra.mxu0 0.0
    %1531 = vmatprep.subr.mxu0 0.0
    %1532 = vmatpush1.msra.mxu0 0.0
    %1533 = vmatprep.subr.mxu0 0.0
    %1534 = vmatpush1.msra.mxu0 0.0
    %1535 = vmatprep.subr.mxu0 0.0
    %1536 = vmatpush1.msra.mxu0 0.0
    %1537 = vmatprep.subr.mxu0 %v1516
    %1538 = vmatpush1.msra.mxu0 %v1515
    %1539 = vmatprep.subr.mxu0 %v1514
    %1540 = vmatpush1.msra.mxu0 %v1513
    %1541 = vmatprep.subr.mxu0 %v1512
    %1542 = vmatpush1.msra.mxu0 %v1511
    %1543 = vmatprep.subr.mxu0 %v1510
    %1544 = vmatpush1.msra.mxu0 %v1509
    %1545 = vmatprep.subr.mxu0 %v1508
    %1546 = vmatpush1.msra.mxu0 %v1507
    %1547 = vmatprep.subr.mxu0 %v1506
    %1548 = vmatpush1.msra.mxu0 %v1505
    %1549 = vmatprep.subr.mxu0 %v1504
    %1550 = vmatpush1.msra.mxu0 %v1503
    %1551 = vmatprep.subr.mxu0 %v1502
    %1552 = vmatpush1.msra.mxu0 %v1501
    %1553 = vmatprep.subr.mxu0 0.0
    %1554 = vmatpush2.msra.mxu0 0.0
    %1555 = vmatprep.subr.mxu0 0.0
    %1556 = vmatpush2.msra.mxu0 0.0
    %1557 = vmatprep.subr.mxu0 0.0
    %1558 = vmatpush2.msra.mxu0 0.0
    %1559 = vmatprep.subr.mxu0 0.0
    %1560 = vmatpush2.msra.mxu0 0.0
    %1561 = vmatprep.subr.mxu0 0.0
    %1562 = vmatpush2.msra.mxu0 0.0
    %1563 = vmatprep.subr.mxu0 0.0
    %1564 = vmatpush2.msra.mxu0 0.0
    %1565 = vmatprep.subr.mxu0 0.0
    %1566 = vmatpush2.msra.mxu0 0.0
    %1567 = vmatprep.subr.mxu0 0.0
    %1568 = vmatpush2.msra.mxu0 0.0
    %1569 = vmatprep.subr.mxu0 0.0
    %1570 = vmatpush2.msra.mxu0 0.0
    %1571 = vmatprep.subr.mxu0 0.0
    %1572 = vmatpush2.msra.mxu0 0.0
    %1573 = vmatprep.subr.mxu0 0.0
    %1574 = vmatpush2.msra.mxu0 0.0
    %1575 = vmatprep.subr.mxu0 0.0
    %1576 = vmatpush2.msra.mxu0 0.0
    %1577 = vmatprep.subr.mxu0 0.0
    %1578 = vmatpush2.msra.mxu0 0.0
    %1579 = vmatprep.subr.mxu0 0.0
    %1580 = vmatpush2.msra.mxu0 0.0
    %1581 = vmatprep.subr.mxu0 0.0
    %1582 = vmatpush2.msra.mxu0 0.0
    %1583 = vmatprep.subr.mxu0 0.0
    %1584 = vmatpush2.msra.mxu0 0.0
    %1585 = vmatprep.mubr.f32.mxu0 0.0
    %1586 = vmatmul.mubr.f32.gmra.mxu0 %v1519
    %v1587 = vpop.f32.mrf.mxu0
    %v1588 = vadd.f32 0.0, %v1587
    %v1589 = vpop.f32.mrf.mxu0
    %v1590 = vadd.f32 0.0, %v1589
    %1591 = vdwg.mxu0
    %s1592 = smul.addr %s1199, 8
    %s1593 = scalar_lea.vmem [#allocation3], %s1592
    %v1594 = vld [vmem:[%s1593] sm:$0xff]
    %v1595 = vld [vmem:[%s1593 + $0x8] sm:$0xff]
    %v1596 = vadd.f32 %v1594, %v1588
    %v1597 = vadd.f32 %v1595, %v1590
    %v1598 = vxor.u32 %v1596, 2147483648
    %v1599 = vxor.u32 %v1597, 2147483648
    %v1600 = vmul.f32 %v1598, 1.442695
    %v1601 = vpow.pop %v1600
    %v1602 = vmul.f32 %v1599, 1.442695
    %v1603 = vpow.pop %v1602
    %v1604 = vadd.f32 %v1601, 1.0
    %v1605 = vadd.f32 %v1603, 1.0
    %v1606 = vrcp.pop %v1604
    %v1607 = vmul.f32 1.0, %v1606
    %v1608 = vrcp.pop %v1605
    %v1609 = vmul.f32 1.0, %v1608
    %v1610 = vtanh.pop %v1597
    %v1611 = vmul.f32 %v1607, 0.0
    %1613 = vrot.lane.b32.xlu0 %v1610, 64
    %v1614 = vpop.permute.xlu0 %1613
    %v1616 = vmul.f32 %v1607, %v1614
    %1618 = vrot.lane.b32.xlu0 %v1616, 64
    %v1619 = vpop.permute.xlu0 %1618
    %v1621 = vadd.f32 %v1611, %v1619
    %v1622 = vtanh.pop %v1621
    %1624 = vrot.lane.b32.xlu0 %v1622, 64
    %v1625 = vpop.permute.xlu0 %1624
    %v1627 = vmul.f32 %v1609, %v1625
    %1628 = vst.msk [vmem:[#allocation4] sm:$0xff] %vm137, %v1627
    %v1630 = vsel %vm137, %v1627, 0
    %1632 = vmatprep.subr.mxu0 0.0
    %1633 = vmatpush1.msra.mxu0 0.0
    %1634 = vmatprep.subr.mxu0 0.0
    %1635 = vmatpush1.msra.mxu0 0.0
    %1636 = vmatprep.subr.mxu0 0.0
    %1637 = vmatpush1.msra.mxu0 0.0
    %1638 = vmatprep.subr.mxu0 0.0
    %1639 = vmatpush1.msra.mxu0 0.0
    %1640 = vmatprep.subr.mxu0 0.0
    %1641 = vmatpush1.msra.mxu0 0.0
    %1642 = vmatprep.subr.mxu0 0.0
    %1643 = vmatpush1.msra.mxu0 0.0
    %1644 = vmatprep.subr.mxu0 0.0
    %1645 = vmatpush1.msra.mxu0 0.0
    %1646 = vmatprep.subr.mxu0 0.0
    %1647 = vmatpush1.msra.mxu0 0.0
    %1648 = vmatprep.subr.mxu0 %v1516
    %1649 = vmatpush1.msra.mxu0 %v1515
    %1650 = vmatprep.subr.mxu0 %v1514
    %1651 = vmatpush1.msra.mxu0 %v1513
    %1652 = vmatprep.subr.mxu0 %v1512
    %1653 = vmatpush1.msra.mxu0 %v1511
    %1654 = vmatprep.subr.mxu0 %v1510
    %1655 = vmatpush1.msra.mxu0 %v1509
    %1656 = vmatprep.subr.mxu0 %v1508
    %1657 = vmatpush1.msra.mxu0 %v1507
    %1658 = vmatprep.subr.mxu0 %v1506
    %1659 = vmatpush1.msra.mxu0 %v1505
    %1660 = vmatprep.subr.mxu0 %v1504
    %1661 = vmatpush1.msra.mxu0 %v1503
    %1662 = vmatprep.subr.mxu0 %v1502
    %1663 = vmatpush1.msra.mxu0 %v1501
    %1664 = vmatprep.subr.mxu0 0.0
    %1665 = vmatpush2.msra.mxu0 0.0
    %1666 = vmatprep.subr.mxu0 0.0
    %1667 = vmatpush2.msra.mxu0 0.0
    %1668 = vmatprep.subr.mxu0 0.0
    %1669 = vmatpush2.msra.mxu0 0.0
    %1670 = vmatprep.subr.mxu0 0.0
    %1671 = vmatpush2.msra.mxu0 0.0
    %1672 = vmatprep.subr.mxu0 0.0
    %1673 = vmatpush2.msra.mxu0 0.0
    %1674 = vmatprep.subr.mxu0 0.0
    %1675 = vmatpush2.msra.mxu0 0.0
    %1676 = vmatprep.subr.mxu0 0.0
    %1677 = vmatpush2.msra.mxu0 0.0
    %1678 = vmatprep.subr.mxu0 0.0
    %1679 = vmatpush2.msra.mxu0 0.0
    %1680 = vmatprep.subr.mxu0 0.0
    %1681 = vmatpush2.msra.mxu0 0.0
    %1682 = vmatprep.subr.mxu0 0.0
    %1683 = vmatpush2.msra.mxu0 0.0
    %1684 = vmatprep.subr.mxu0 0.0
    %1685 = vmatpush2.msra.mxu0 0.0
    %1686 = vmatprep.subr.mxu0 0.0
    %1687 = vmatpush2.msra.mxu0 0.0
    %1688 = vmatprep.subr.mxu0 0.0
    %1689 = vmatpush2.msra.mxu0 0.0
    %1690 = vmatprep.subr.mxu0 0.0
    %1691 = vmatpush2.msra.mxu0 0.0
    %1692 = vmatprep.subr.mxu0 0.0
    %1693 = vmatpush2.msra.mxu0 0.0
    %1694 = vmatprep.subr.mxu0 0.0
    %1695 = vmatpush2.msra.mxu0 0.0
    %1696 = vmatprep.mubr.f32.mxu0 0.0
    %1697 = vmatmul.mubr.f32.gmra.mxu0 %v1630
    %v1698 = vpop.f32.mrf.mxu0
    %v1699 = vadd.f32 0.0, %v1698
    %v1700 = vpop.f32.mrf.mxu0
    %v1701 = vadd.f32 0.0, %v1700
    %1702 = vdwg.mxu0
    %s1703 = smul.addr %s367, 8
    %s1704 = scalar_lea.vmem [#allocation3], %s1703
    %v1705 = vld [vmem:[%s1704] sm:$0xff]
    %v1706 = vld [vmem:[%s1704 + $0x8] sm:$0xff]
    %v1707 = vadd.f32 %v1705, %v1699
    %v1708 = vadd.f32 %v1706, %v1701
    %v1709 = vxor.u32 %v1707, 2147483648
    %v1710 = vxor.u32 %v1708, 2147483648
    %v1711 = vmul.f32 %v1709, 1.442695
    %v1712 = vpow.pop %v1711
    %v1713 = vmul.f32 %v1710, 1.442695
    %v1714 = vpow.pop %v1713
    %v1715 = vadd.f32 %v1712, 1.0
    %v1716 = vadd.f32 %v1714, 1.0
    %v1717 = vrcp.pop %v1715
    %v1718 = vmul.f32 1.0, %v1717
    %v1719 = vrcp.pop %v1716
    %v1720 = vmul.f32 1.0, %v1719
    %v1721 = vtanh.pop %v1708
    %v1722 = vmul.f32 %v1718, %v1621
    %1724 = vrot.lane.b32.xlu0 %v1721, 64
    %v1725 = vpop.permute.xlu0 %1724
    %v1727 = vmul.f32 %v1718, %v1725
    %1729 = vrot.lane.b32.xlu0 %v1727, 64
    %v1730 = vpop.permute.xlu0 %1729
    %v1732 = vadd.f32 %v1722, %v1730
    %v1733 = vtanh.pop %v1732
    %1735 = vrot.lane.b32.xlu0 %v1733, 64
    %v1736 = vpop.permute.xlu0 %1735
    %v1738 = vmul.f32 %v1720, %v1736
    %s1739 = scalar_lea.vmem [#allocation4], 8
    %1740 = vst.msk [vmem:[%s1739] sm:$0xff] %vm137, %v1738
    %v1742 = vsel %vm137, %v1738, 0
    %1744 = vmatprep.subr.mxu0 0.0
    %1745 = vmatpush1.msra.mxu0 0.0
    %1746 = vmatprep.subr.mxu0 0.0
    %1747 = vmatpush1.msra.mxu0 0.0
    %1748 = vmatprep.subr.mxu0 0.0
    %1749 = vmatpush1.msra.mxu0 0.0
    %1750 = vmatprep.subr.mxu0 0.0
    %1751 = vmatpush1.msra.mxu0 0.0
    %1752 = vmatprep.subr.mxu0 0.0
    %1753 = vmatpush1.msra.mxu0 0.0
    %1754 = vmatprep.subr.mxu0 0.0
    %1755 = vmatpush1.msra.mxu0 0.0
    %1756 = vmatprep.subr.mxu0 0.0
    %1757 = vmatpush1.msra.mxu0 0.0
    %1758 = vmatprep.subr.mxu0 0.0
    %1759 = vmatpush1.msra.mxu0 0.0
    %1760 = vmatprep.subr.mxu0 %v1516
    %1761 = vmatpush1.msra.mxu0 %v1515
    %1762 = vmatprep.subr.mxu0 %v1514
    %1763 = vmatpush1.msra.mxu0 %v1513
    %1764 = vmatprep.subr.mxu0 %v1512
    %1765 = vmatpush1.msra.mxu0 %v1511
    %1766 = vmatprep.subr.mxu0 %v1510
    %1767 = vmatpush1.msra.mxu0 %v1509
    %1768 = vmatprep.subr.mxu0 %v1508
    %1769 = vmatpush1.msra.mxu0 %v1507
    %1770 = vmatprep.subr.mxu0 %v1506
    %1771 = vmatpush1.msra.mxu0 %v1505
    %1772 = vmatprep.subr.mxu0 %v1504
    %1773 = vmatpush1.msra.mxu0 %v1503
    %1774 = vmatprep.subr.mxu0 %v1502
    %1775 = vmatpush1.msra.mxu0 %v1501
    %1776 = vmatprep.subr.mxu0 0.0
    %1777 = vmatpush2.msra.mxu0 0.0
    %1778 = vmatprep.subr.mxu0 0.0
    %1779 = vmatpush2.msra.mxu0 0.0
    %1780 = vmatprep.subr.mxu0 0.0
    %1781 = vmatpush2.msra.mxu0 0.0
    %1782 = vmatprep.subr.mxu0 0.0
    %1783 = vmatpush2.msra.mxu0 0.0
    %1784 = vmatprep.subr.mxu0 0.0
    %1785 = vmatpush2.msra.mxu0 0.0
    %1786 = vmatprep.subr.mxu0 0.0
    %1787 = vmatpush2.msra.mxu0 0.0
    %1788 = vmatprep.subr.mxu0 0.0
    %1789 = vmatpush2.msra.mxu0 0.0
    %1790 = vmatprep.subr.mxu0 0.0
    %1791 = vmatpush2.msra.mxu0 0.0
    %1792 = vmatprep.subr.mxu0 0.0
    %1793 = vmatpush2.msra.mxu0 0.0
    %1794 = vmatprep.subr.mxu0 0.0
    %1795 = vmatpush2.msra.mxu0 0.0
    %1796 = vmatprep.subr.mxu0 0.0
    %1797 = vmatpush2.msra.mxu0 0.0
    %1798 = vmatprep.subr.mxu0 0.0
    %1799 = vmatpush2.msra.mxu0 0.0
    %1800 = vmatprep.subr.mxu0 0.0
    %1801 = vmatpush2.msra.mxu0 0.0
    %1802 = vmatprep.subr.mxu0 0.0
    %1803 = vmatpush2.msra.mxu0 0.0
    %1804 = vmatprep.subr.mxu0 0.0
    %1805 = vmatpush2.msra.mxu0 0.0
    %1806 = vmatprep.subr.mxu0 0.0
    %1807 = vmatpush2.msra.mxu0 0.0
    %1808 = vmatprep.mubr.f32.mxu0 0.0
    %1809 = vmatmul.mubr.f32.gmra.mxu0 %v1742
    %v1810 = vpop.f32.mrf.mxu0
    %v1811 = vadd.f32 0.0, %v1810
    %v1812 = vpop.f32.mrf.mxu0
    %v1813 = vadd.f32 0.0, %v1812
    %1814 = vdwg.mxu0
    %s1815 = smul.addr %s510, 8
    %s1816 = scalar_lea.vmem [#allocation3], %s1815
    %v1817 = vld [vmem:[%s1816] sm:$0xff]
    %v1818 = vld [vmem:[%s1816 + $0x8] sm:$0xff]
    %v1819 = vadd.f32 %v1817, %v1811
    %v1820 = vadd.f32 %v1818, %v1813
    %v1821 = vxor.u32 %v1819, 2147483648
    %v1822 = vxor.u32 %v1820, 2147483648
    %v1823 = vmul.f32 %v1821, 1.442695
    %v1824 = vpow.pop %v1823
    %v1825 = vmul.f32 %v1822, 1.442695
    %v1826 = vpow.pop %v1825
    %v1827 = vadd.f32 %v1824, 1.0
    %v1828 = vadd.f32 %v1826, 1.0
    %v1829 = vrcp.pop %v1827
    %v1830 = vmul.f32 1.0, %v1829
    %v1831 = vrcp.pop %v1828
    %v1832 = vmul.f32 1.0, %v1831
    %v1833 = vtanh.pop %v1820
    %v1834 = vmul.f32 %v1830, %v1732
    %1836 = vrot.lane.b32.xlu0 %v1833, 64
    %v1837 = vpop.permute.xlu0 %1836
    %v1839 = vmul.f32 %v1830, %v1837
    %1841 = vrot.lane.b32.xlu0 %v1839, 64
    %v1842 = vpop.permute.xlu0 %1841
    %v1844 = vadd.f32 %v1834, %v1842
    %v1845 = vtanh.pop %v1844
    %1847 = vrot.lane.b32.xlu0 %v1845, 64
    %v1848 = vpop.permute.xlu0 %1847
    %v1850 = vmul.f32 %v1832, %v1848
    %s1851 = scalar_lea.vmem [#allocation4], 16
    %1852 = vst.msk [vmem:[%s1851] sm:$0xff] %vm137, %v1850
    %v1854 = vsel %vm137, %v1850, 0
    %1856 = vmatprep.subr.mxu0 0.0
    %1857 = vmatpush1.msra.mxu0 0.0
    %1858 = vmatprep.subr.mxu0 0.0
    %1859 = vmatpush1.msra.mxu0 0.0
    %1860 = vmatprep.subr.mxu0 0.0
    %1861 = vmatpush1.msra.mxu0 0.0
    %1862 = vmatprep.subr.mxu0 0.0
    %1863 = vmatpush1.msra.mxu0 0.0
    %1864 = vmatprep.subr.mxu0 0.0
    %1865 = vmatpush1.msra.mxu0 0.0
    %1866 = vmatprep.subr.mxu0 0.0
    %1867 = vmatpush1.msra.mxu0 0.0
    %1868 = vmatprep.subr.mxu0 0.0
    %1869 = vmatpush1.msra.mxu0 0.0
    %1870 = vmatprep.subr.mxu0 0.0
    %1871 = vmatpush1.msra.mxu0 0.0
    %1872 = vmatprep.subr.mxu0 %v1516
    %1873 = vmatpush1.msra.mxu0 %v1515
    %1874 = vmatprep.subr.mxu0 %v1514
    %1875 = vmatpush1.msra.mxu0 %v1513
    %1876 = vmatprep.subr.mxu0 %v1512
    %1877 = vmatpush1.msra.mxu0 %v1511
    %1878 = vmatprep.subr.mxu0 %v1510
    %1879 = vmatpush1.msra.mxu0 %v1509
    %1880 = vmatprep.subr.mxu0 %v1508
    %1881 = vmatpush1.msra.mxu0 %v1507
    %1882 = vmatprep.subr.mxu0 %v1506
    %1883 = vmatpush1.msra.mxu0 %v1505
    %1884 = vmatprep.subr.mxu0 %v1504
    %1885 = vmatpush1.msra.mxu0 %v1503
    %1886 = vmatprep.subr.mxu0 %v1502
    %1887 = vmatpush1.msra.mxu0 %v1501
    %1888 = vmatprep.subr.mxu0 0.0
    %1889 = vmatpush2.msra.mxu0 0.0
    %1890 = vmatprep.subr.mxu0 0.0
    %1891 = vmatpush2.msra.mxu0 0.0
    %1892 = vmatprep.subr.mxu0 0.0
    %1893 = vmatpush2.msra.mxu0 0.0
    %1894 = vmatprep.subr.mxu0 0.0
    %1895 = vmatpush2.msra.mxu0 0.0
    %1896 = vmatprep.subr.mxu0 0.0
    %1897 = vmatpush2.msra.mxu0 0.0
    %1898 = vmatprep.subr.mxu0 0.0
    %1899 = vmatpush2.msra.mxu0 0.0
    %1900 = vmatprep.subr.mxu0 0.0
    %1901 = vmatpush2.msra.mxu0 0.0
    %1902 = vmatprep.subr.mxu0 0.0
    %1903 = vmatpush2.msra.mxu0 0.0
    %1904 = vmatprep.subr.mxu0 0.0
    %1905 = vmatpush2.msra.mxu0 0.0
    %1906 = vmatprep.subr.mxu0 0.0
    %1907 = vmatpush2.msra.mxu0 0.0
    %1908 = vmatprep.subr.mxu0 0.0
    %1909 = vmatpush2.msra.mxu0 0.0
    %1910 = vmatprep.subr.mxu0 0.0
    %1911 = vmatpush2.msra.mxu0 0.0
    %1912 = vmatprep.subr.mxu0 0.0
    %1913 = vmatpush2.msra.mxu0 0.0
    %1914 = vmatprep.subr.mxu0 0.0
    %1915 = vmatpush2.msra.mxu0 0.0
    %1916 = vmatprep.subr.mxu0 0.0
    %1917 = vmatpush2.msra.mxu0 0.0
    %1918 = vmatprep.subr.mxu0 0.0
    %1919 = vmatpush2.msra.mxu0 0.0
    %1920 = vmatprep.mubr.f32.mxu0 0.0
    %1921 = vmatmul.mubr.f32.gmra.mxu0 %v1854
    %v1922 = vpop.f32.mrf.mxu0
    %v1923 = vadd.f32 0.0, %v1922
    %v1924 = vpop.f32.mrf.mxu0
    %v1925 = vadd.f32 0.0, %v1924
    %1926 = vdwg.mxu0
    %s1927 = smul.addr %s653, 8
    %s1928 = scalar_lea.vmem [#allocation3], %s1927
    %v1929 = vld [vmem:[%s1928] sm:$0xff]
    %v1930 = vld [vmem:[%s1928 + $0x8] sm:$0xff]
    %v1931 = vadd.f32 %v1929, %v1923
    %v1932 = vadd.f32 %v1930, %v1925
    %v1933 = vxor.u32 %v1931, 2147483648
    %v1934 = vxor.u32 %v1932, 2147483648
    %v1935 = vmul.f32 %v1933, 1.442695
    %v1936 = vpow.pop %v1935
    %v1937 = vmul.f32 %v1934, 1.442695
    %v1938 = vpow.pop %v1937
    %v1939 = vadd.f32 %v1936, 1.0
    %v1940 = vadd.f32 %v1938, 1.0
    %v1941 = vrcp.pop %v1939
    %v1942 = vmul.f32 1.0, %v1941
    %v1943 = vrcp.pop %v1940
    %v1944 = vmul.f32 1.0, %v1943
    %v1945 = vtanh.pop %v1932
    %v1946 = vmul.f32 %v1942, %v1844
    %1948 = vrot.lane.b32.xlu0 %v1945, 64
    %v1949 = vpop.permute.xlu0 %1948
    %v1951 = vmul.f32 %v1942, %v1949
    %1953 = vrot.lane.b32.xlu0 %v1951, 64
    %v1954 = vpop.permute.xlu0 %1953
    %v1956 = vadd.f32 %v1946, %v1954
    %v1957 = vtanh.pop %v1956
    %1959 = vrot.lane.b32.xlu0 %v1957, 64
    %v1960 = vpop.permute.xlu0 %1959
    %v1962 = vmul.f32 %v1944, %v1960
    %s1963 = scalar_lea.vmem [#allocation4], 24
    %1964 = vst.msk [vmem:[%s1963] sm:$0xff] %vm137, %v1962
    %v1966 = vsel %vm137, %v1962, 0
    %1968 = vmatprep.subr.mxu0 0.0
    %1969 = vmatpush1.msra.mxu0 0.0
    %1970 = vmatprep.subr.mxu0 0.0
    %1971 = vmatpush1.msra.mxu0 0.0
    %1972 = vmatprep.subr.mxu0 0.0
    %1973 = vmatpush1.msra.mxu0 0.0
    %1974 = vmatprep.subr.mxu0 0.0
    %1975 = vmatpush1.msra.mxu0 0.0
    %1976 = vmatprep.subr.mxu0 0.0
    %1977 = vmatpush1.msra.mxu0 0.0
    %1978 = vmatprep.subr.mxu0 0.0
    %1979 = vmatpush1.msra.mxu0 0.0
    %1980 = vmatprep.subr.mxu0 0.0
    %1981 = vmatpush1.msra.mxu0 0.0
    %1982 = vmatprep.subr.mxu0 0.0
    %1983 = vmatpush1.msra.mxu0 0.0
    %1984 = vmatprep.subr.mxu0 %v1516
    %1985 = vmatpush1.msra.mxu0 %v1515
    %1986 = vmatprep.subr.mxu0 %v1514
    %1987 = vmatpush1.msra.mxu0 %v1513
    %1988 = vmatprep.subr.mxu0 %v1512
    %1989 = vmatpush1.msra.mxu0 %v1511
    %1990 = vmatprep.subr.mxu0 %v1510
    %1991 = vmatpush1.msra.mxu0 %v1509
    %1992 = vmatprep.subr.mxu0 %v1508
    %1993 = vmatpush1.msra.mxu0 %v1507
    %1994 = vmatprep.subr.mxu0 %v1506
    %1995 = vmatpush1.msra.mxu0 %v1505
    %1996 = vmatprep.subr.mxu0 %v1504
    %1997 = vmatpush1.msra.mxu0 %v1503
    %1998 = vmatprep.subr.mxu0 %v1502
    %1999 = vmatpush1.msra.mxu0 %v1501
    %2000 = vmatprep.subr.mxu0 0.0
    %2001 = vmatpush2.msra.mxu0 0.0
    %2002 = vmatprep.subr.mxu0 0.0
    %2003 = vmatpush2.msra.mxu0 0.0
    %2004 = vmatprep.subr.mxu0 0.0
    %2005 = vmatpush2.msra.mxu0 0.0
    %2006 = vmatprep.subr.mxu0 0.0
    %2007 = vmatpush2.msra.mxu0 0.0
    %2008 = vmatprep.subr.mxu0 0.0
    %2009 = vmatpush2.msra.mxu0 0.0
    %2010 = vmatprep.subr.mxu0 0.0
    %2011 = vmatpush2.msra.mxu0 0.0
    %2012 = vmatprep.subr.mxu0 0.0
    %2013 = vmatpush2.msra.mxu0 0.0
    %2014 = vmatprep.subr.mxu0 0.0
    %2015 = vmatpush2.msra.mxu0 0.0
    %2016 = vmatprep.subr.mxu0 0.0
    %2017 = vmatpush2.msra.mxu0 0.0
    %2018 = vmatprep.subr.mxu0 0.0
    %2019 = vmatpush2.msra.mxu0 0.0
    %2020 = vmatprep.subr.mxu0 0.0
    %2021 = vmatpush2.msra.mxu0 0.0
    %2022 = vmatprep.subr.mxu0 0.0
    %2023 = vmatpush2.msra.mxu0 0.0
    %2024 = vmatprep.subr.mxu0 0.0
    %2025 = vmatpush2.msra.mxu0 0.0
    %2026 = vmatprep.subr.mxu0 0.0
    %2027 = vmatpush2.msra.mxu0 0.0
    %2028 = vmatprep.subr.mxu0 0.0
    %2029 = vmatpush2.msra.mxu0 0.0
    %2030 = vmatprep.subr.mxu0 0.0
    %2031 = vmatpush2.msra.mxu0 0.0
    %2032 = vmatprep.mubr.f32.mxu0 0.0
    %2033 = vmatmul.mubr.f32.gmra.mxu0 %v1966
    %v2034 = vpop.f32.mrf.mxu0
    %v2035 = vadd.f32 0.0, %v2034
    %v2036 = vpop.f32.mrf.mxu0
    %v2037 = vadd.f32 0.0, %v2036
    %2038 = vdwg.mxu0
    %s2039 = smul.addr %s658, 8
    %s2040 = scalar_lea.vmem [#allocation3], %s2039
    %v2041 = vld [vmem:[%s2040] sm:$0xff]
    %v2042 = vld [vmem:[%s2040 + $0x8] sm:$0xff]
    %v2043 = vadd.f32 %v2041, %v2035
    %v2044 = vadd.f32 %v2042, %v2037
    %v2045 = vxor.u32 %v2043, 2147483648
    %v2046 = vxor.u32 %v2044, 2147483648
    %v2047 = vmul.f32 %v2045, 1.442695
    %v2048 = vpow.pop %v2047
    %v2049 = vmul.f32 %v2046, 1.442695
    %v2050 = vpow.pop %v2049
    %v2051 = vadd.f32 %v2048, 1.0
    %v2052 = vadd.f32 %v2050, 1.0
    %v2053 = vrcp.pop %v2051
    %v2054 = vmul.f32 1.0, %v2053
    %v2055 = vrcp.pop %v2052
    %v2056 = vmul.f32 1.0, %v2055
    %v2057 = vtanh.pop %v2044
    %v2058 = vmul.f32 %v2054, %v1956
    %2060 = vrot.lane.b32.xlu0 %v2057, 64
    %v2061 = vpop.permute.xlu0 %2060
    %v2063 = vmul.f32 %v2054, %v2061
    %2065 = vrot.lane.b32.xlu0 %v2063, 64
    %v2066 = vpop.permute.xlu0 %2065
    %v2068 = vadd.f32 %v2058, %v2066
    %v2069 = vtanh.pop %v2068
    %2071 = vrot.lane.b32.xlu0 %v2069, 64
    %v2072 = vpop.permute.xlu0 %2071
    %v2074 = vmul.f32 %v2056, %v2072
    %s2075 = scalar_lea.vmem [#allocation4], 32
    %2076 = vst.msk [vmem:[%s2075] sm:$0xff] %vm137, %v2074
    %v2078 = vsel %vm137, %v2074, 0
    %2080 = vmatprep.subr.mxu0 0.0
    %2081 = vmatpush1.msra.mxu0 0.0
    %2082 = vmatprep.subr.mxu0 0.0
    %2083 = vmatpush1.msra.mxu0 0.0
    %2084 = vmatprep.subr.mxu0 0.0
    %2085 = vmatpush1.msra.mxu0 0.0
    %2086 = vmatprep.subr.mxu0 0.0
    %2087 = vmatpush1.msra.mxu0 0.0
    %2088 = vmatprep.subr.mxu0 0.0
    %2089 = vmatpush1.msra.mxu0 0.0
    %2090 = vmatprep.subr.mxu0 0.0
    %2091 = vmatpush1.msra.mxu0 0.0
    %2092 = vmatprep.subr.mxu0 0.0
    %2093 = vmatpush1.msra.mxu0 0.0
    %2094 = vmatprep.subr.mxu0 0.0
    %2095 = vmatpush1.msra.mxu0 0.0
    %2096 = vmatprep.subr.mxu0 %v1516
    %2097 = vmatpush1.msra.mxu0 %v1515
    %2098 = vmatprep.subr.mxu0 %v1514
    %2099 = vmatpush1.msra.mxu0 %v1513
    %2100 = vmatprep.subr.mxu0 %v1512
    %2101 = vmatpush1.msra.mxu0 %v1511
    %2102 = vmatprep.subr.mxu0 %v1510
    %2103 = vmatpush1.msra.mxu0 %v1509
    %2104 = vmatprep.subr.mxu0 %v1508
    %2105 = vmatpush1.msra.mxu0 %v1507
    %2106 = vmatprep.subr.mxu0 %v1506
    %2107 = vmatpush1.msra.mxu0 %v1505
    %2108 = vmatprep.subr.mxu0 %v1504
    %2109 = vmatpush1.msra.mxu0 %v1503
    %2110 = vmatprep.subr.mxu0 %v1502
    %2111 = vmatpush1.msra.mxu0 %v1501
    %2112 = vmatprep.subr.mxu0 0.0
    %2113 = vmatpush2.msra.mxu0 0.0
    %2114 = vmatprep.subr.mxu0 0.0
    %2115 = vmatpush2.msra.mxu0 0.0
    %2116 = vmatprep.subr.mxu0 0.0
    %2117 = vmatpush2.msra.mxu0 0.0
    %2118 = vmatprep.subr.mxu0 0.0
    %2119 = vmatpush2.msra.mxu0 0.0
    %2120 = vmatprep.subr.mxu0 0.0
    %2121 = vmatpush2.msra.mxu0 0.0
    %2122 = vmatprep.subr.mxu0 0.0
    %2123 = vmatpush2.msra.mxu0 0.0
    %2124 = vmatprep.subr.mxu0 0.0
    %2125 = vmatpush2.msra.mxu0 0.0
    %2126 = vmatprep.subr.mxu0 0.0
    %2127 = vmatpush2.msra.mxu0 0.0
    %2128 = vmatprep.subr.mxu0 0.0
    %2129 = vmatpush2.msra.mxu0 0.0
    %2130 = vmatprep.subr.mxu0 0.0
    %2131 = vmatpush2.msra.mxu0 0.0
    %2132 = vmatprep.subr.mxu0 0.0
    %2133 = vmatpush2.msra.mxu0 0.0
    %2134 = vmatprep.subr.mxu0 0.0
    %2135 = vmatpush2.msra.mxu0 0.0
    %2136 = vmatprep.subr.mxu0 0.0
    %2137 = vmatpush2.msra.mxu0 0.0
    %2138 = vmatprep.subr.mxu0 0.0
    %2139 = vmatpush2.msra.mxu0 0.0
    %2140 = vmatprep.subr.mxu0 0.0
    %2141 = vmatpush2.msra.mxu0 0.0
    %2142 = vmatprep.subr.mxu0 0.0
    %2143 = vmatpush2.msra.mxu0 0.0
    %2144 = vmatprep.mubr.f32.mxu0 0.0
    %2145 = vmatmul.mubr.f32.gmra.mxu0 %v2078
    %v2146 = vpop.f32.mrf.mxu0
    %v2147 = vadd.f32 0.0, %v2146
    %v2148 = vpop.f32.mrf.mxu0
    %v2149 = vadd.f32 0.0, %v2148
    %2150 = vdwg.mxu0
    %v2151 = vld [vmem:[#allocation3 + $0x50] sm:$0xff]
    %v2152 = vld [vmem:[#allocation3 + $0x58] sm:$0xff]
    %v2153 = vadd.f32 %v2151, %v2147
    %v2154 = vadd.f32 %v2152, %v2149
    %v2155 = vxor.u32 %v2153, 2147483648
    %v2156 = vxor.u32 %v2154, 2147483648
    %v2157 = vmul.f32 %v2155, 1.442695
    %v2158 = vpow.pop %v2157
    %v2159 = vmul.f32 %v2156, 1.442695
    %v2160 = vpow.pop %v2159
    %v2161 = vadd.f32 %v2158, 1.0
    %v2162 = vadd.f32 %v2160, 1.0
    %v2163 = vrcp.pop %v2161
    %v2164 = vmul.f32 1.0, %v2163
    %v2165 = vrcp.pop %v2162
    %v2166 = vmul.f32 1.0, %v2165
    %v2167 = vtanh.pop %v2154
    %v2168 = vmul.f32 %v2164, %v2068
    %2170 = vrot.lane.b32.xlu0 %v2167, 64
    %v2171 = vpop.permute.xlu0 %2170
    %v2173 = vmul.f32 %v2164, %v2171
    %2175 = vrot.lane.b32.xlu0 %v2173, 64
    %v2176 = vpop.permute.xlu0 %2175
    %v2178 = vadd.f32 %v2168, %v2176
    %v2179 = vtanh.pop %v2178
    %2181 = vrot.lane.b32.xlu0 %v2179, 64
    %v2182 = vpop.permute.xlu0 %2181
    %v2184 = vmul.f32 %v2166, %v2182
    %2185 = vst.msk [vmem:[#allocation4 + $0x28] sm:$0xff] %vm137, %v2184
    %s2186 = smul.u32 64, 1
    %s2187 = sshll.u32 %s2186, 4
    %2188 = dma.done [#allocation8], %s2187
    %s2189 = sshll.u32 %s2186, 4
    %2190 = dma.done %s77, %s2189
    %s2191 = smul.u32 128, 1
    %s2192 = sshll.u32 %s2191, 4
    %2193 = dma.done %s89, %s2192
    %v2194 = vld [vmem:[#allocation4] sm:$0xff]
    %v2195 = vld [vmem:[#allocation4 + $0x8] sm:$0xff]
    %v2196 = vld [vmem:[#allocation4 + $0x10] sm:$0xff]
    %v2197 = vld [vmem:[#allocation4 + $0x18] sm:$0xff]
    %v2198 = vld [vmem:[#allocation4 + $0x20] sm:$0xff]
    %v2199 = vld [vmem:[#allocation4 + $0x28] sm:$0xff]
    %v2200 = vld [vmem:[%s1] sm:$0xff]
    %v2201 = vld [vmem:[%s1 + $0x8] sm:$0xff]
    %v2202 = vld [vmem:[%s1 + $0x10] sm:$0xff]
    %v2203 = vld [vmem:[%s1 + $0x18] sm:$0xff]
    %v2204 = vld [vmem:[%s1 + $0x20] sm:$0xff]
    %v2205 = vld [vmem:[%s1 + $0x28] sm:$0xff]
    %v2206 = vld [vmem:[#allocation5] sm:$0xff]
    %v2207 = vld [vmem:[#allocation5 + $0x8] sm:$0xff]
    %v2208 = vld [vmem:[#allocation5 + $0x10] sm:$0xff]
    %v2209 = vld [vmem:[#allocation5 + $0x18] sm:$0xff]
    %v2210 = vld [vmem:[#allocation5 + $0x20] sm:$0xff]
    %v2211 = vld [vmem:[#allocation5 + $0x28] sm:$0xff]
    %v2212 = vld [vmem:[#allocation5 + $0x30] sm:$0xff]
    %v2213 = vld [vmem:[#allocation5 + $0x38] sm:$0xff]
    %v2214 = vld [vmem:[#allocation6] sm:$0xff]
    %v2215 = vld [vmem:[#allocation6 + $0x8] sm:$0xff]
    %v2216 = vld [vmem:[#allocation6 + $0x10] sm:$0xff]
    %v2217 = vld [vmem:[#allocation6 + $0x18] sm:$0xff]
    %v2218 = vld [vmem:[#allocation6 + $0x20] sm:$0xff]
    %v2219 = vld [vmem:[#allocation6 + $0x28] sm:$0xff]
    %v2220 = vld [vmem:[#allocation6 + $0x30] sm:$0xff]
    %v2221 = vld [vmem:[#allocation6 + $0x38] sm:$0xff]
    %v2223 = vsel %vm137, %v2200, 0
    %v2226 = vsel %vm137, %v2201, 0
    %v2229 = vsel %vm137, %v2202, 0
    %v2232 = vsel %vm137, %v2203, 0
    %v2235 = vsel %vm137, %v2204, 0
    %v2238 = vsel %vm137, %v2205, 0
    %2240 = vmatprep.subr.mxu0 0.0
    %2241 = vmatpush1.msra.mxu0 0.0
    %2242 = vmatprep.subr.mxu0 0.0
    %2243 = vmatpush1.msra.mxu0 0.0
    %2244 = vmatprep.subr.mxu0 0.0
    %2245 = vmatpush1.msra.mxu0 0.0
    %2246 = vmatprep.subr.mxu0 0.0
    %2247 = vmatpush1.msra.mxu0 0.0
    %2248 = vmatprep.subr.mxu0 0.0
    %2249 = vmatpush1.msra.mxu0 0.0
    %2250 = vmatprep.subr.mxu0 0.0
    %2251 = vmatpush1.msra.mxu0 0.0
    %2252 = vmatprep.subr.mxu0 0.0
    %2253 = vmatpush1.msra.mxu0 0.0
    %2254 = vmatprep.subr.mxu0 0.0
    %2255 = vmatpush1.msra.mxu0 0.0
    %2256 = vmatprep.subr.mxu0 0.0
    %2257 = vmatpush1.msra.mxu0 %v2221
    %2258 = vmatprep.subr.mxu0 0.0
    %2259 = vmatpush1.msra.mxu0 %v2220
    %2260 = vmatprep.subr.mxu0 0.0
    %2261 = vmatpush1.msra.mxu0 %v2219
    %2262 = vmatprep.subr.mxu0 0.0
    %2263 = vmatpush1.msra.mxu0 %v2218
    %2264 = vmatprep.subr.mxu0 0.0
    %2265 = vmatpush1.msra.mxu0 %v2217
    %2266 = vmatprep.subr.mxu0 0.0
    %2267 = vmatpush1.msra.mxu0 %v2216
    %2268 = vmatprep.subr.mxu0 0.0
    %2269 = vmatpush1.msra.mxu0 %v2215
    %2270 = vmatprep.subr.mxu0 0.0
    %2271 = vmatpush1.msra.mxu0 %v2214
    %2272 = vmatprep.subr.mxu0 0.0
    %2273 = vmatpush2.msra.mxu0 0.0
    %2274 = vmatprep.subr.mxu0 0.0
    %2275 = vmatpush2.msra.mxu0 0.0
    %2276 = vmatprep.subr.mxu0 0.0
    %2277 = vmatpush2.msra.mxu0 0.0
    %2278 = vmatprep.subr.mxu0 0.0
    %2279 = vmatpush2.msra.mxu0 0.0
    %2280 = vmatprep.subr.mxu0 0.0
    %2281 = vmatpush2.msra.mxu0 0.0
    %2282 = vmatprep.subr.mxu0 0.0
    %2283 = vmatpush2.msra.mxu0 0.0
    %2284 = vmatprep.subr.mxu0 0.0
    %2285 = vmatpush2.msra.mxu0 0.0
    %2286 = vmatprep.subr.mxu0 0.0
    %2287 = vmatpush2.msra.mxu0 0.0
    %2288 = vmatprep.subr.mxu0 0.0
    %2289 = vmatpush2.msra.mxu0 0.0
    %2290 = vmatprep.subr.mxu0 0.0
    %2291 = vmatpush2.msra.mxu0 0.0
    %2292 = vmatprep.subr.mxu0 0.0
    %2293 = vmatpush2.msra.mxu0 0.0
    %2294 = vmatprep.subr.mxu0 0.0
    %2295 = vmatpush2.msra.mxu0 0.0
    %2296 = vmatprep.subr.mxu0 0.0
    %2297 = vmatpush2.msra.mxu0 0.0
    %2298 = vmatprep.subr.mxu0 0.0
    %2299 = vmatpush2.msra.mxu0 0.0
    %2300 = vmatprep.subr.mxu0 0.0
    %2301 = vmatpush2.msra.mxu0 0.0
    %2302 = vmatprep.subr.mxu0 0.0
    %2303 = vmatpush2.msra.mxu0 0.0
    %2304 = vmatprep.mubr.f32.mxu0 0.0
    %2305 = vmatmul.mubr.f32.gmra.mxu0 %v2223
    %v2306 = vpop.f32.mrf.mxu0
    %v2307 = vadd.f32 0.0, %v2306
    %v2308 = vpop.f32.mrf.mxu0
    %2309 = vmatprep.mubr.f32.mxu0 0.0
    %2310 = vmatmul.mubr.f32.gmra.mxu0 %v2226
    %v2311 = vpop.f32.mrf.mxu0
    %v2312 = vadd.f32 0.0, %v2311
    %v2313 = vpop.f32.mrf.mxu0
    %2314 = vmatprep.mubr.f32.mxu0 0.0
    %2315 = vmatmul.mubr.f32.gmra.mxu0 %v2229
    %v2316 = vpop.f32.mrf.mxu0
    %v2317 = vadd.f32 0.0, %v2316
    %v2318 = vpop.f32.mrf.mxu0
    %2319 = vmatprep.mubr.f32.mxu0 0.0
    %2320 = vmatmul.mubr.f32.gmra.mxu0 %v2232
    %v2321 = vpop.f32.mrf.mxu0
    %v2322 = vadd.f32 0.0, %v2321
    %v2323 = vpop.f32.mrf.mxu0
    %2324 = vmatprep.mubr.f32.mxu0 0.0
    %2325 = vmatmul.mubr.f32.gmra.mxu0 %v2235
    %v2326 = vpop.f32.mrf.mxu0
    %v2327 = vadd.f32 0.0, %v2326
    %v2328 = vpop.f32.mrf.mxu0
    %2329 = vmatprep.mubr.f32.mxu0 0.0
    %2330 = vmatmul.mubr.f32.gmra.mxu0 %v2238
    %v2331 = vpop.f32.mrf.mxu0
    %v2332 = vadd.f32 0.0, %v2331
    %v2333 = vpop.f32.mrf.mxu0
    %2334 = vdwg.mxu0
    %v2336 = vsel %vm137, %v2194, 0
    %v2339 = vsel %vm137, %v2195, 0
    %v2342 = vsel %vm137, %v2196, 0
    %v2345 = vsel %vm137, %v2197, 0
    %v2348 = vsel %vm137, %v2198, 0
    %v2351 = vsel %vm137, %v2199, 0
    %2353 = vmatprep.subr.mxu0 0.0
    %2354 = vmatpush1.msra.mxu0 0.0
    %2355 = vmatprep.subr.mxu0 0.0
    %2356 = vmatpush1.msra.mxu0 0.0
    %2357 = vmatprep.subr.mxu0 0.0
    %2358 = vmatpush1.msra.mxu0 0.0
    %2359 = vmatprep.subr.mxu0 0.0
    %2360 = vmatpush1.msra.mxu0 0.0
    %2361 = vmatprep.subr.mxu0 0.0
    %2362 = vmatpush1.msra.mxu0 0.0
    %2363 = vmatprep.subr.mxu0 0.0
    %2364 = vmatpush1.msra.mxu0 0.0
    %2365 = vmatprep.subr.mxu0 0.0
    %2366 = vmatpush1.msra.mxu0 0.0
    %2367 = vmatprep.subr.mxu0 0.0
    %2368 = vmatpush1.msra.mxu0 0.0
    %2369 = vmatprep.subr.mxu0 0.0
    %2370 = vmatpush1.msra.mxu0 %v2213
    %2371 = vmatprep.subr.mxu0 0.0
    %2372 = vmatpush1.msra.mxu0 %v2212
    %2373 = vmatprep.subr.mxu0 0.0
    %2374 = vmatpush1.msra.mxu0 %v2211
    %2375 = vmatprep.subr.mxu0 0.0
    %2376 = vmatpush1.msra.mxu0 %v2210
    %2377 = vmatprep.subr.mxu0 0.0
    %2378 = vmatpush1.msra.mxu0 %v2209
    %2379 = vmatprep.subr.mxu0 0.0
    %2380 = vmatpush1.msra.mxu0 %v2208
    %2381 = vmatprep.subr.mxu0 0.0
    %2382 = vmatpush1.msra.mxu0 %v2207
    %2383 = vmatprep.subr.mxu0 0.0
    %2384 = vmatpush1.msra.mxu0 %v2206
    %2385 = vmatprep.subr.mxu0 0.0
    %2386 = vmatpush2.msra.mxu0 0.0
    %2387 = vmatprep.subr.mxu0 0.0
    %2388 = vmatpush2.msra.mxu0 0.0
    %2389 = vmatprep.subr.mxu0 0.0
    %2390 = vmatpush2.msra.mxu0 0.0
    %2391 = vmatprep.subr.mxu0 0.0
    %2392 = vmatpush2.msra.mxu0 0.0
    %2393 = vmatprep.subr.mxu0 0.0
    %2394 = vmatpush2.msra.mxu0 0.0
    %2395 = vmatprep.subr.mxu0 0.0
    %2396 = vmatpush2.msra.mxu0 0.0
    %2397 = vmatprep.subr.mxu0 0.0
    %2398 = vmatpush2.msra.mxu0 0.0
    %2399 = vmatprep.subr.mxu0 0.0
    %2400 = vmatpush2.msra.mxu0 0.0
    %2401 = vmatprep.subr.mxu0 0.0
    %2402 = vmatpush2.msra.mxu0 0.0
    %2403 = vmatprep.subr.mxu0 0.0
    %2404 = vmatpush2.msra.mxu0 0.0
    %2405 = vmatprep.subr.mxu0 0.0
    %2406 = vmatpush2.msra.mxu0 0.0
    %2407 = vmatprep.subr.mxu0 0.0
    %2408 = vmatpush2.msra.mxu0 0.0
    %2409 = vmatprep.subr.mxu0 0.0
    %2410 = vmatpush2.msra.mxu0 0.0
    %2411 = vmatprep.subr.mxu0 0.0
    %2412 = vmatpush2.msra.mxu0 0.0
    %2413 = vmatprep.subr.mxu0 0.0
    %2414 = vmatpush2.msra.mxu0 0.0
    %2415 = vmatprep.subr.mxu0 0.0
    %2416 = vmatpush2.msra.mxu0 0.0
    %2417 = vmatprep.mubr.f32.mxu0 0.0
    %2418 = vmatmul.mubr.f32.gmra.mxu0 %v2336
    %v2419 = vpop.f32.mrf.mxu0
    %v2420 = vadd.f32 %v2307, %v2419
    %v2421 = vpop.f32.mrf.mxu0
    %2422 = vmatprep.mubr.f32.mxu0 0.0
    %2423 = vmatmul.mubr.f32.gmra.mxu0 %v2339
    %v2424 = vpop.f32.mrf.mxu0
    %v2425 = vadd.f32 %v2312, %v2424
    %v2426 = vpop.f32.mrf.mxu0
    %2427 = vmatprep.mubr.f32.mxu0 0.0
    %2428 = vmatmul.mubr.f32.gmra.mxu0 %v2342
    %v2429 = vpop.f32.mrf.mxu0
    %v2430 = vadd.f32 %v2317, %v2429
    %v2431 = vpop.f32.mrf.mxu0
    %2432 = vmatprep.mubr.f32.mxu0 0.0
    %2433 = vmatmul.mubr.f32.gmra.mxu0 %v2345
    %v2434 = vpop.f32.mrf.mxu0
    %v2435 = vadd.f32 %v2322, %v2434
    %v2436 = vpop.f32.mrf.mxu0
    %2437 = vmatprep.mubr.f32.mxu0 0.0
    %2438 = vmatmul.mubr.f32.gmra.mxu0 %v2348
    %v2439 = vpop.f32.mrf.mxu0
    %v2440 = vadd.f32 %v2327, %v2439
    %v2441 = vpop.f32.mrf.mxu0
    %2442 = vmatprep.mubr.f32.mxu0 0.0
    %2443 = vmatmul.mubr.f32.gmra.mxu0 %v2351
    %v2444 = vpop.f32.mrf.mxu0
    %v2445 = vadd.f32 %v2332, %v2444
    %v2446 = vpop.f32.mrf.mxu0
    %2447 = vdwg.mxu0
    %v2448 = vld [vmem:[%s8] sm:$0x1]
    %v2450 = vlaneseq
    %v2451 = vshrl.u32 %v2450, 7
    %v2452 = vsub.s32 0, %v2451
    %v2453 = vrot.slane %v2448, %v2452
    %v2455 = vadd.f32 %v2420, %v2453
    %v2456 = vadd.f32 %v2425, %v2453
    %v2457 = vadd.f32 %v2430, %v2453
    %v2458 = vadd.f32 %v2435, %v2453
    %v2459 = vadd.f32 %v2440, %v2453
    %v2460 = vadd.f32 %v2445, %v2453
    %v2461 = vtanh.pop %v2455
    %v2462 = vtanh.pop %v2456
    %v2463 = vtanh.pop %v2457
    %v2464 = vtanh.pop %v2458
    %v2465 = vtanh.pop %v2459
    %v2466 = vtanh.pop %v2460
    %v2467 = vld [vmem:[#allocation7] sm:$0xff]
    %v2468 = vld [vmem:[#allocation7 + $0x8] sm:$0xff]
    %v2469 = vld [vmem:[#allocation7 + $0x10] sm:$0xff]
    %v2470 = vld [vmem:[#allocation7 + $0x18] sm:$0xff]
    %v2471 = vld [vmem:[#allocation7 + $0x20] sm:$0xff]
    %v2472 = vld [vmem:[#allocation7 + $0x28] sm:$0xff]
    %v2473 = vld [vmem:[#allocation7 + $0x30] sm:$0xff]
    %v2474 = vld [vmem:[#allocation7 + $0x38] sm:$0xff]
    %v2475 = vld [vmem:[#allocation7 + $0x40] sm:$0xff]
    %v2476 = vld [vmem:[#allocation7 + $0x48] sm:$0xff]
    %v2477 = vld [vmem:[#allocation7 + $0x50] sm:$0xff]
    %v2478 = vld [vmem:[#allocation7 + $0x58] sm:$0xff]
    %v2479 = vld [vmem:[#allocation7 + $0x60] sm:$0xff]
    %v2480 = vld [vmem:[#allocation7 + $0x68] sm:$0xff]
    %v2481 = vld [vmem:[#allocation7 + $0x70] sm:$0xff]
    %v2482 = vld [vmem:[#allocation7 + $0x78] sm:$0xff]
    %v2483 = vld [vmem:[%s9] sm:$0x1]
    %v2485 = vlaneseq
    %v2486 = vshrl.u32 %v2485, 7
    %v2487 = vsub.s32 0, %v2486
    %v2488 = vrot.slane %v2483, %v2487
    %2490 = vmatprep.subr.mxu0 0.0
    %2491 = vmatpush1.msra.mxu0 %v2482
    %2492 = vmatprep.subr.mxu0 0.0
    %2493 = vmatpush1.msra.mxu0 %v2481
    %2494 = vmatprep.subr.mxu0 0.0
    %2495 = vmatpush1.msra.mxu0 %v2480
    %2496 = vmatprep.subr.mxu0 0.0
    %2497 = vmatpush1.msra.mxu0 %v2479
    %2498 = vmatprep.subr.mxu0 0.0
    %2499 = vmatpush1.msra.mxu0 %v2478
    %2500 = vmatprep.subr.mxu0 0.0
    %2501 = vmatpush1.msra.mxu0 %v2477
    %2502 = vmatprep.subr.mxu0 0.0
    %2503 = vmatpush1.msra.mxu0 %v2476
    %2504 = vmatprep.subr.mxu0 0.0
    %2505 = vmatpush1.msra.mxu0 %v2475
    %2506 = vmatprep.subr.mxu0 0.0
    %2507 = vmatpush1.msra.mxu0 %v2474
    %2508 = vmatprep.subr.mxu0 0.0
    %2509 = vmatpush1.msra.mxu0 %v2473
    %2510 = vmatprep.subr.mxu0 0.0
    %2511 = vmatpush1.msra.mxu0 %v2472
    %2512 = vmatprep.subr.mxu0 0.0
    %2513 = vmatpush1.msra.mxu0 %v2471
    %2514 = vmatprep.subr.mxu0 0.0
    %2515 = vmatpush1.msra.mxu0 %v2470
    %2516 = vmatprep.subr.mxu0 0.0
    %2517 = vmatpush1.msra.mxu0 %v2469
    %2518 = vmatprep.subr.mxu0 0.0
    %2519 = vmatpush1.msra.mxu0 %v2468
    %2520 = vmatprep.subr.mxu0 0.0
    %2521 = vmatpush1.msra.mxu0 %v2467
    %2522 = vmatprep.subr.mxu0 0.0
    %2523 = vmatpush2.msra.mxu0 0.0
    %2524 = vmatprep.subr.mxu0 0.0
    %2525 = vmatpush2.msra.mxu0 0.0
    %2526 = vmatprep.subr.mxu0 0.0
    %2527 = vmatpush2.msra.mxu0 0.0
    %2528 = vmatprep.subr.mxu0 0.0
    %2529 = vmatpush2.msra.mxu0 0.0
    %2530 = vmatprep.subr.mxu0 0.0
    %2531 = vmatpush2.msra.mxu0 0.0
    %2532 = vmatprep.subr.mxu0 0.0
    %2533 = vmatpush2.msra.mxu0 0.0
    %2534 = vmatprep.subr.mxu0 0.0
    %2535 = vmatpush2.msra.mxu0 0.0
    %2536 = vmatprep.subr.mxu0 0.0
    %2537 = vmatpush2.msra.mxu0 0.0
    %2538 = vmatprep.subr.mxu0 0.0
    %2539 = vmatpush2.msra.mxu0 0.0
    %2540 = vmatprep.subr.mxu0 0.0
    %2541 = vmatpush2.msra.mxu0 0.0
    %2542 = vmatprep.subr.mxu0 0.0
    %2543 = vmatpush2.msra.mxu0 0.0
    %2544 = vmatprep.subr.mxu0 0.0
    %2545 = vmatpush2.msra.mxu0 0.0
    %2546 = vmatprep.subr.mxu0 0.0
    %2547 = vmatpush2.msra.mxu0 0.0
    %2548 = vmatprep.subr.mxu0 0.0
    %2549 = vmatpush2.msra.mxu0 0.0
    %2550 = vmatprep.subr.mxu0 0.0
    %2551 = vmatpush2.msra.mxu0 0.0
    %2552 = vmatprep.subr.mxu0 0.0
    %2553 = vmatpush2.msra.mxu0 0.0
    %2554 = vmatprep.mubr.f32.mxu0 0.0
    %2555 = vmatmul.mubr.f32.gmra.mxu0 %v2461
    %v2556 = vpop.f32.mrf.mxu0
    %v2557 = vadd.f32 %v2488, %v2556
    %v2558 = vpop.f32.mrf.mxu0
    %2559 = vmatprep.mubr.f32.mxu0 0.0
    %2560 = vmatmul.mubr.f32.gmra.mxu0 %v2462
    %v2561 = vpop.f32.mrf.mxu0
    %v2562 = vadd.f32 %v2488, %v2561
    %v2563 = vpop.f32.mrf.mxu0
    %2564 = vmatprep.mubr.f32.mxu0 0.0
    %2565 = vmatmul.mubr.f32.gmra.mxu0 %v2463
    %v2566 = vpop.f32.mrf.mxu0
    %v2567 = vadd.f32 %v2488, %v2566
    %v2568 = vpop.f32.mrf.mxu0
    %2569 = vmatprep.mubr.f32.mxu0 0.0
    %2570 = vmatmul.mubr.f32.gmra.mxu0 %v2464
    %v2571 = vpop.f32.mrf.mxu0
    %v2572 = vadd.f32 %v2488, %v2571
    %v2573 = vpop.f32.mrf.mxu0
    %2574 = vmatprep.mubr.f32.mxu0 0.0
    %2575 = vmatmul.mubr.f32.gmra.mxu0 %v2465
    %v2576 = vpop.f32.mrf.mxu0
    %v2577 = vadd.f32 %v2488, %v2576
    %v2578 = vpop.f32.mrf.mxu0
    %2579 = vmatprep.mubr.f32.mxu0 0.0
    %2580 = vmatmul.mubr.f32.gmra.mxu0 %v2466
    %v2581 = vpop.f32.mrf.mxu0
    %v2582 = vadd.f32 %v2488, %v2581
    %v2583 = vpop.f32.mrf.mxu0
    %2584 = vdwg.mxu0
    %2585 = vst [vmem:[%s13] sm:$0xff] %v2557
    %2586 = vst [vmem:[%s13 + $0x8] sm:$0xff] %v2562
    %2587 = vst [vmem:[%s13 + $0x10] sm:$0xff] %v2567
    %2588 = vst [vmem:[%s13 + $0x18] sm:$0xff] %v2572
    %2589 = vst [vmem:[%s13 + $0x20] sm:$0xff] %v2577
    %2590 = vst [vmem:[%s13 + $0x28] sm:$0xff] %v2582
    // Predicated region
    $region62: #{s2vt_forward.1} parent=1 // pred_check
      _
    $region63: #{s2vt_forward.1} parent=1 // pred_check_branch
      %2592 = sbr.rel (0) target = $region65
    $region64: #{s2vt_forward.1} parent=1 // pred_region
      _
    $region65: #{s2vt_forward.1} parent=1 // pred_fallthru
      _
    // Predicated region
    $region66: #{s2vt_forward.1} parent=1 // pred_check
      _
    $region67: #{s2vt_forward.1} parent=1 // pred_check_branch
      %2594 = sbr.rel (0) target = $region69
    $region68: #{s2vt_forward.1} parent=1 // pred_region
      _
    $region69: #{s2vt_forward.1} parent=1 // pred_fallthru
      _
    %2595 = vsyncpa [#allocation10], 1
    %2596 = vsyncpa [#allocation12], 1
  %2597 = vsyncmov [#allocation8]
  %s2598 = vpop.sfrf %2597
  %p2599 = scmp.eq.s32.totalorder %s2598, 0
  %p2600 = pneg %p2599
  %2602 = shalt.err (%p2600)
  %s2603 = scalar_lea.sflag [#allocation8], 1
  %2604 = vsyncmov %s2603
  %s2605 = vpop.sfrf %2604
  %p2606 = scmp.eq.s32.totalorder %s2605, 0
  %p2607 = pneg %p2606
  %2609 = shalt.err (%p2607)
  %s2610 = scalar_lea.sflag [#allocation8], 2
  %2611 = vsyncmov %s2610
  %s2612 = vpop.sfrf %2611
  %p2613 = scmp.eq.s32.totalorder %s2612, 0
  %p2614 = pneg %p2613
  %2616 = shalt.err (%p2614)

</llo_original>
